<compile_context>
chip_gen: v5e
topology: v5e:2x2
jax: 0.10.0
libtpu: 0.0.40
codegen_flags: <defaults>
</compile_context>

<pallas_src>
import functools
import math

import jax
import jax.numpy as jnp
from jax import lax
from jax.experimental import pallas as pl
from jax.experimental.pallas import tpu as pltpu


def _layernorm(x, w, eps=1e-5):
    # F.layer_norm semantics: biased variance over last dim, eps inside rsqrt,
    # weight-only (bias=False in the module).
    mu = jnp.mean(x, axis=-1, keepdims=True)
    xc = x - mu
    var = jnp.mean(xc * xc, axis=-1, keepdims=True)
    return xc * lax.rsqrt(var + eps) * w


def _gelu_exact(x):
    # nn.GELU() default = exact erf formulation.
    return 0.5 * x * (1.0 + lax.erf(x * (1.0 / math.sqrt(2.0))))


def _softmax_lastdim(s):
    m = jnp.max(s, axis=-1, keepdims=True)
    e = jnp.exp(s - m)
    denom = jnp.sum(e, axis=-1, keepdims=True)
    return e * pl.reciprocal(denom, approx=True)


def _grouped_mha(q, k, v, wo_ref, mask, n_head, group, cdt, acc):
    """Head-grouped attention + output projection, accumulated into `acc`.

    q:(Lq,D) k,v:(Lk,D) f32 (1/sqrt(Dh) already folded into the Q weights).
    Heads are processed in groups of `group` so every MXU matmul and every
    intermediate written back to VMEM is >=128 lanes wide.  Returns
    acc + concat_heads(attn(q,k,v)) @ Wo^T   as a (Lq, D) f32 value.
    """
    Lq, D = q.shape
    Lk = k.shape[0]
    Dh = D // n_head
    gw = group * Dh                        # lane-dense group width (>=128)
    for g0 in range(0, n_head, group):
        c0 = g0 * Dh
        # (L, gw) -> (group, L, Dh): head-batched layout for batched matmuls.
        qg = jnp.swapaxes(q[:, c0:c0 + gw].reshape(Lq, group, Dh), 0, 1).astype(cdt)
        kg = jnp.swapaxes(k[:, c0:c0 + gw].reshape(Lk, group, Dh), 0, 1).astype(cdt)
        vg = jnp.swapaxes(v[:, c0:c0 + gw].reshape(Lk, group, Dh), 0, 1).astype(cdt)
        # scores: (g, Lq, Lk) with f32 accumulation.
        s = lax.dot_general(qg, kg, (((2,), (2,)), ((0,), (0,))),
                            preferred_element_type=jnp.float32)
        if mask is not None:
            s = jnp.where(mask[None, :, :], s, -1e30)
        p = _softmax_lastdim(s)                                        # f32
        og = lax.dot_general(p.astype(cdt), vg, (((2,), (1,)), ((0,), (0,))),
                             preferred_element_type=jnp.float32)       # (g, Lq, Dh)
        # merge heads back to a lane-dense (Lq, gw) tile and project with the
        # matching Wo rows; accumulate into the residual (no slab scratch).
        og2 = jnp.swapaxes(og, 0, 1).reshape(Lq, gw)
        wo_rows = wo_ref[pl.ds(c0, gw), :]                             # (gw, D)
        acc = acc + jnp.dot(og2.astype(cdt), wo_rows,
                            preferred_element_type=jnp.float32)
    return acc


def decoder_layer_kernel(x_ref, mem_ref, ln1_ref, ln2_ref, ln3_ref,
                         wqkv_s_ref, wo_s_ref, wq_c_ref, wkv_c_ref, wo_c_ref,
                         wfc_ref, wproj_ref, o_ref, *,
                         n_head, head_group, ffn_chunk):
    x = x_ref[0].astype(jnp.float32)        # (T, D)
    mem = mem_ref[0]                        # (S, D)
    T, D = x.shape
    cdt = wqkv_s_ref.dtype                  # MXU compute dtype (bf16)
    Dffn = wfc_ref.shape[1]

    # Causal keep-mask (True where key_pos <= query_pos).
    q_pos = lax.broadcasted_iota(jnp.int32, (T, T), 0)
    k_pos = lax.broadcasted_iota(jnp.int32, (T, T), 1)
    causal = k_pos <= q_pos

    # ---- causal self-attention: x + Wo(MHA(LN1(x))) -------------------------
    h1 = _layernorm(x, ln1_ref[...])
    qkv = jnp.dot(h1.astype(cdt), wqkv_s_ref[...],
                  preferred_element_type=jnp.float32)                  # (T, 3D)
    q, k, v = qkv[:, 0:D], qkv[:, D:2 * D], qkv[:, 2 * D:3 * D]
    x = _grouped_mha(q, k, v, wo_s_ref, causal, n_head, head_group, cdt, x)

    # ---- cross-attention over memory: x + Wo(MHA(LN2(x), mem, mem)) ---------
    h2 = _layernorm(x, ln2_ref[...])
    qc = jnp.dot(h2.astype(cdt), wq_c_ref[...],
                 preferred_element_type=jnp.float32)                   # (T, D)
    kv = jnp.dot(mem.astype(cdt), wkv_c_ref[...],
                 preferred_element_type=jnp.float32)                   # (S, 2D)
    kc, vc = kv[:, 0:D], kv[:, D:2 * D]
    x = _grouped_mha(qc, kc, vc, wo_c_ref, None, n_head, head_group, cdt, x)

    # ---- MLP: x + Wproj(gelu(Wfc(LN3(x)))), hidden dim chunked --------------
    h3 = _layernorm(x, ln3_ref[...]).astype(cdt)
    n_chunks = Dffn // ffn_chunk

    def ffn_body(ci, acc):
        c0 = pl.multiple_of(ci * ffn_chunk, ffn_chunk)
        wfc_c = wfc_ref[:, pl.ds(c0, ffn_chunk)]                       # (D, CH)
        wpj_c = wproj_ref[pl.ds(c0, ffn_chunk), :]                     # (CH, D)
        ff = jnp.dot(h3, wfc_c, preferred_element_type=jnp.float32)    # (T, CH)
        ff = _gelu_exact(ff)
        return acc + jnp.dot(ff.astype(cdt), wpj_c,
                             preferred_element_type=jnp.float32)       # (T, D)

    x = lax.fori_loop(0, n_chunks, ffn_body, x)

    o_ref[0] = x.astype(o_ref.dtype)


def preprocess_decoder_params(params, n_head, compute_dtype=jnp.bfloat16):
    """One-time parameter preprocessing (call at parameter-load time, NOT per
    forward): PyTorch stores W[out, in]; the kernel wants [in, out].  The
    1/sqrt(Dh) query scale is folded into Wq before the bf16 cast."""
    (ln1_w, ln2_w, ln3_w, wqkv_s, wo_s, wqkv_c, wo_c, wfc, wproj) = params
    D = ln1_w.shape[0]
    scale = 1.0 / math.sqrt(D // n_head)
    cast = lambda w: w.astype(compute_dtype)

    wq_s, wk_s, wv_s = jnp.split(wqkv_s, 3, axis=0)                    # (D, D) each
    wqkv_s_t = cast(jnp.concatenate([wq_s * scale, wk_s, wv_s], axis=0).T)  # (D, 3D)
    wo_s_t = cast(wo_s.T)                                              # (D, D)

    wq_c, wk_c, wv_c = jnp.split(wqkv_c, 3, axis=0)
    wq_c_t = cast((wq_c * scale).T)                                    # (D, D)
    wkv_c_t = cast(jnp.concatenate([wk_c, wv_c], axis=0).T)            # (D, 2D)
    wo_c_t = cast(wo_c.T)                                              # (D, D)

    wfc_t = cast(wfc.T)                                                # (D, 4D)
    wproj_t = cast(wproj.T)                                            # (4D, D)

    ln1 = ln1_w.reshape(1, D).astype(jnp.float32)
    ln2 = ln2_w.reshape(1, D).astype(jnp.float32)
    ln3 = ln3_w.reshape(1, D).astype(jnp.float32)
    return (ln1, ln2, ln3, wqkv_s_t, wo_s_t, wq_c_t, wkv_c_t, wo_c_t,
            wfc_t, wproj_t)


def _pick_vmem_limit():
    """~48 MiB on v7x (64 MiB physical/TC), ~112 MiB on v5e/v6e (128 MiB)."""
    try:
        cap = int(pltpu.get_tpu_info().vmem_capacity_bytes)
    except Exception:
        cap = 64 * 1024 * 1024
    return max(32 * 1024 * 1024, min(cap - 16 * 1024 * 1024, 112 * 1024 * 1024))


def transformer_decoder_layer(x, mem, prep_params, n_head):
    B, T, D = x.shape
    S = mem.shape[1]
    assert D % n_head == 0
    Dh = D // n_head
    (ln1, ln2, ln3, wqkv_s_t, wo_s_t, wq_c_t, wkv_c_t, wo_c_t,
     wfc_t, wproj_t) = prep_params
    Dffn = wfc_t.shape[1]

    # Head group size: enough heads per group that g*Dh >= 128 (lane-dense).
    head_group = max(1, min(n_head, 128 // max(Dh, 1)))
    if n_head % head_group != 0:
        head_group = 1

    # FFN hidden-dim chunk (multiple of 128, <= 1024) so the (T, 4D) f32
    # intermediate is never fully live.
    ffn_chunk = Dffn
    for cand in (1024, 512, 256, 128):
        if Dffn % cand == 0:
            ffn_chunk = cand
            break

    kernel = functools.partial(decoder_layer_kernel, n_head=n_head,
                               head_group=head_group, ffn_chunk=ffn_chunk)

    # Grid-constant operands: constant index_map + single-buffered (Buffered(1))
    # -> fetched once, half the default VMEM residency.
    def const_spec(shape):
        nd = len(shape)
        return pl.BlockSpec(shape, lambda b, _nd=nd: (0,) * _nd,
                            pipeline_mode=pl.Buffered(1))

    # Advisory cost estimate so XLA can schedule around this long custom call.
    flops = 2 * B * (T * D * 3 * D          # self in-proj
                     + 2 * T * T * D        # self attn (QK^T + PV)
                     + T * D * D            # self out-proj
                     + T * D * D            # cross q proj
                     + S * D * 2 * D        # cross kv proj
                     + 2 * T * S * D        # cross attn
                     + T * D * D            # cross out-proj
                     + T * D * 4 * D        # mlp fc
                     + T * 4 * D * D)       # mlp proj
    transcendentals = B * (n_head * T * T + n_head * T * S + T * 4 * D)
    weight_bytes = sum(int(w.size) * w.dtype.itemsize for w in
                       (wqkv_s_t, wo_s_t, wq_c_t, wkv_c_t, wo_c_t, wfc_t,
                        wproj_t, ln1, ln2, ln3))
    bytes_accessed = int(x.size * 4 + mem.size * 4 + x.size * 4 + weight_bytes)

    return pl.pallas_call(
        kernel,
        out_shape=jax.ShapeDtypeStruct((B, T, D), x.dtype),
        grid_spec=pltpu.PrefetchScalarGridSpec(
            num_scalar_prefetch=0,
            grid=(B,),
            in_specs=[
                pl.BlockSpec((1, T, D), lambda b: (b, 0, 0)),   # x (pipelined)
                pl.BlockSpec((1, S, D), lambda b: (b, 0, 0)),   # mem (pipelined)
                const_spec((1, D)),                             # ln_1 weight
                const_spec((1, D)),                             # ln_2 weight
                const_spec((1, D)),                             # ln_3 weight
                const_spec((D, 3 * D)),                         # self in_proj^T (Wq pre-scaled)
                const_spec((D, D)),                             # self out_proj^T
                const_spec((D, D)),                             # cross Wq^T (pre-scaled)
                const_spec((D, 2 * D)),                         # cross [Wk;Wv]^T
                const_spec((D, D)),                             # cross out_proj^T
                const_spec((D, 4 * D)),                         # mlp.c_fc^T
                const_spec((4 * D, D)),                         # mlp.c_proj^T
            ],
            out_specs=pl.BlockSpec((1, T, D), lambda b: (b, 0, 0)),
        ),
        compiler_params=pltpu.CompilerParams(
            dimension_semantics=("parallel",),      # v7x: shard batch over 2 TCs
            vmem_limit_bytes=_pick_vmem_limit(),
        ),
        cost_estimate=pl.CostEstimate(flops=int(flops),
                                      transcendentals=int(transcendentals),
                                      bytes_accessed=bytes_accessed),
    )(x, mem, ln1, ln2, ln3, wqkv_s_t, wo_s_t, wq_c_t, wkv_c_t, wo_c_t,
      wfc_t, wproj_t)


# ---------------- pure-JAX f32 reference (for correctness check) -------------
def reference_forward(x, mem, params, n_head):
    (ln1_w, ln2_w, ln3_w, wqkv_s, wo_s, wqkv_c, wo_c, wfc, wproj) = params
    B, T, D = x.shape
    Dh = D // n_head

    def ln(v, w):
        mu = jnp.mean(v, axis=-1, keepdims=True)
        vc = v - mu
        var = jnp.mean(vc * vc, axis=-1, keepdims=True)
        return vc / jnp.sqrt(var + 1e-5) * w

    def mha(q_in, kv_in, wqkv, wo, causal):
        wq, wk, wv = jnp.split(wqkv, 3, axis=0)
        q, k, v = q_in @ wq.T, kv_in @ wk.T, kv_in @ wv.T
        Lq, Lk = q.shape[1], k.shape[1]
        q = q.reshape(B, Lq, n_head, Dh).transpose(0, 2, 1, 3)
        k = k.reshape(B, Lk, n_head, Dh).transpose(0, 2, 1, 3)
        v = v.reshape(B, Lk, n_head, Dh).transpose(0, 2, 1, 3)
        s = jnp.einsum('bhqd,bhkd->bhqk', q, k) / math.sqrt(Dh)
        if causal:
            keep = jnp.tril(jnp.ones((Lq, Lk), dtype=bool))
            s = jnp.where(keep, s, -jnp.inf)
        p = jax.nn.softmax(s, axis=-1)
        o = jnp.einsum('bhqk,bhkd->bhqd', p, v)
        o = o.transpose(0, 2, 1, 3).reshape(B, Lq, D)
        return o @ wo.T

    h1 = ln(x, ln1_w)
    x = x + mha(h1, h1, wqkv_s, wo_s, causal=True)
    x = x + mha(ln(x, ln2_w), mem, wqkv_c, wo_c, causal=False)
    h3 = ln(x, ln3_w)
    ff = jax.nn.gelu(h3 @ wfc.T, approximate=False)
    x = x + ff @ wproj.T
    return x


if __name__ == "__main__":
    B, T, S, D, H = 2, 8, 16, 128, 4          # lane-dense: D % 128 == 0, T/S % 8 == 0
    key = jax.random.PRNGKey(0)
    ks = jax.random.split(key, 11)

    x = jax.random.normal(ks[0], (B, T, D), dtype=jnp.float32)
    mem = jax.random.normal(ks[1], (B, S, D), dtype=jnp.float32)

    w_scale = 0.05
    ln1_w = 1.0 + 0.1 * jax.random.normal(ks[2], (D,), dtype=jnp.float32)
    ln2_w = 1.0 + 0.1 * jax.random.normal(ks[3], (D,), dtype=jnp.float32)
    ln3_w = 1.0 + 0.1 * jax.random.normal(ks[4], (D,), dtype=jnp.float32)
    wqkv_s = w_scale * jax.random.normal(ks[5], (3 * D, D), dtype=jnp.float32)   # self in_proj_weight
    wo_s = w_scale * jax.random.normal(ks[6], (D, D), dtype=jnp.float32)         # self out_proj.weight
    wqkv_c = w_scale * jax.random.normal(ks[7], (3 * D, D), dtype=jnp.float32)   # cross in_proj_weight
    wo_c = w_scale * jax.random.normal(ks[8], (D, D), dtype=jnp.float32)         # cross out_proj.weight
    wfc = w_scale * jax.random.normal(ks[9], (4 * D, D), dtype=jnp.float32)      # mlp.c_fc.weight
    wproj = w_scale * jax.random.normal(ks[10], (D, 4 * D), dtype=jnp.float32)   # mlp.c_proj.weight
    params = (ln1_w, ln2_w, ln3_w, wqkv_s, wo_s, wqkv_c, wo_c, wfc, wproj)

    # One-time (parameter-load-time) weight preprocessing, hoisted out of the
    # forward call so it never re-runs per step.
    prep = jax.block_until_ready(preprocess_decoder_params(params, H))

    out = transformer_decoder_layer(x, mem, prep, H)
    out = jax.block_until_ready(out)

    ref = reference_forward(x, mem, params, H)
    assert out.shape == (B, T, D)
    max_err = float(jnp.max(jnp.abs(out - ref)))
    # bf16 MXU path + approx reciprocal vs f32 reference -> loose tolerance.
    assert jnp.allclose(out, ref, atol=3e-2, rtol=3e-2), \
        f"mismatch vs reference (max abs err {max_err})"

    print("KERNEL_OK")
</pallas_src>

<mosaic_0001>
module attributes {stable_mosaic.version = 11 : i64} {
  func.func @decoder_layer_kernel(%arg0: i32, %arg1: memref<1x8x128xf32, #tpu.memory_space<vmem>>, %arg2: memref<1x16x128xf32, #tpu.memory_space<vmem>>, %arg3: memref<1x128xf32, #tpu.memory_space<vmem>>, %arg4: memref<1x128xf32, #tpu.memory_space<vmem>>, %arg5: memref<1x128xf32, #tpu.memory_space<vmem>>, %arg6: memref<128x384xbf16, #tpu.memory_space<vmem>>, %arg7: memref<128x128xbf16, #tpu.memory_space<vmem>>, %arg8: memref<128x128xbf16, #tpu.memory_space<vmem>>, %arg9: memref<128x256xbf16, #tpu.memory_space<vmem>>, %arg10: memref<128x128xbf16, #tpu.memory_space<vmem>>, %arg11: memref<128x512xbf16, #tpu.memory_space<vmem>>, %arg12: memref<512x128xbf16, #tpu.memory_space<vmem>>, %arg13: memref<1x8x128xf32, #tpu.memory_space<vmem>>) attributes {dimension_semantics = [#tpu.dimension_semantics<parallel>], iteration_bounds = array<i64: 2>, scalar_prefetch = 0 : i64, scratch_operands = 0 : i64, tpu.core_type = #tpu.core_type<tc>, window_params = [{transform_indices = @transform_0, window_bounds = array<i64: 1, 8, 128>}, {transform_indices = @transform_1, window_bounds = array<i64: 1, 16, 128>}, {pipeline_mode = #tpu.pipeline_mode<synchronous>, transform_indices = @transform_2, window_bounds = array<i64: 1, 128>}, {pipeline_mode = #tpu.pipeline_mode<synchronous>, transform_indices = @transform_3, window_bounds = array<i64: 1, 128>}, {pipeline_mode = #tpu.pipeline_mode<synchronous>, transform_indices = @transform_4, window_bounds = array<i64: 1, 128>}, {pipeline_mode = #tpu.pipeline_mode<synchronous>, transform_indices = @transform_5, window_bounds = array<i64: 128, 384>}, {pipeline_mode = #tpu.pipeline_mode<synchronous>, transform_indices = @transform_6, window_bounds = array<i64: 128, 128>}, {pipeline_mode = #tpu.pipeline_mode<synchronous>, transform_indices = @transform_7, window_bounds = array<i64: 128, 128>}, {pipeline_mode = #tpu.pipeline_mode<synchronous>, transform_indices = @transform_8, window_bounds = array<i64: 128, 256>}, {pipeline_mode = #tpu.pipeline_mode<synchronous>, transform_indices = @transform_9, window_bounds = array<i64: 128, 128>}, {pipeline_mode = #tpu.pipeline_mode<synchronous>, transform_indices = @transform_10, window_bounds = array<i64: 128, 512>}, {pipeline_mode = #tpu.pipeline_mode<synchronous>, transform_indices = @transform_11, window_bounds = array<i64: 512, 128>}, {transform_indices = @transform_12, window_bounds = array<i64: 1, 8, 128>}]} {
    %c0 = arith.constant 0 : index
    %c0_0 = arith.constant 0 : index
    %c0_1 = arith.constant 0 : index
    %0 = vector.load %arg1[%c0, %c0_0, %c0_1] : memref<1x8x128xf32, #tpu.memory_space<vmem>>, vector<1x8x128xf32>
    %1 = vector.shape_cast %0 : vector<1x8x128xf32> to vector<8x128xf32>
    %c0_2 = arith.constant 0 : index
    %c0_3 = arith.constant 0 : index
    %c0_4 = arith.constant 0 : index
    %2 = vector.load %arg2[%c0_2, %c0_3, %c0_4] : memref<1x16x128xf32, #tpu.memory_space<vmem>>, vector<1x16x128xf32>
    %3 = vector.shape_cast %2 : vector<1x16x128xf32> to vector<16x128xf32>
    %4 = tpu.iota {dimensions = array<i32: 0>} : vector<8x8xi32>
    %5 = tpu.iota {dimensions = array<i32: 1>} : vector<8x8xi32>
    %6 = arith.cmpi sle, %5, %4 : vector<8x8xi32>
    %c0_5 = arith.constant 0 : index
    %c0_6 = arith.constant 0 : index
    %7 = vector.load %arg3[%c0_5, %c0_6] : memref<1x128xf32, #tpu.memory_space<vmem>>, vector<1x128xf32>
    %cst = arith.constant dense<0.000000e+00> : vector<8xf32>
    %8 = vector.multi_reduction <add>, %1, %cst [1] : vector<8x128xf32> to vector<8xf32>
    %9 = vector.shape_cast %8 : vector<8xf32> to vector<8x1xf32>
    %cst_7 = arith.constant 1.280000e+02 : f32
    %10 = vector.broadcast %cst_7 : f32 to vector<8x1xf32>
    %11 = arith.divf %9, %10 : vector<8x1xf32>
    %12 = vector.broadcast %11 : vector<8x1xf32> to vector<8x128xf32>
    %13 = arith.subf %1, %12 : vector<8x128xf32>
    %14 = arith.mulf %13, %13 : vector<8x128xf32>
    %cst_8 = arith.constant dense<0.000000e+00> : vector<8xf32>
    %15 = vector.multi_reduction <add>, %14, %cst_8 [1] : vector<8x128xf32> to vector<8xf32>
    %16 = vector.shape_cast %15 : vector<8xf32> to vector<8x1xf32>
    %cst_9 = arith.constant 1.280000e+02 : f32
    %17 = vector.broadcast %cst_9 : f32 to vector<8x1xf32>
    %18 = arith.divf %16, %17 : vector<8x1xf32>
    %cst_10 = arith.constant 9.99999974E-6 : f32
    %19 = vector.broadcast %cst_10 : f32 to vector<8x1xf32>
    %20 = arith.addf %18, %19 : vector<8x1xf32>
    %21 = math.rsqrt %20 : vector<8x1xf32>
    %22 = vector.broadcast %21 : vector<8x1xf32> to vector<8x128xf32>
    %23 = arith.mulf %13, %22 : vector<8x128xf32>
    %24 = vector.broadcast %7 : vector<1x128xf32> to vector<8x128xf32>
    %25 = arith.mulf %23, %24 : vector<8x128xf32>
    %26 = arith.truncf %25 : vector<8x128xf32> to vector<8x128xbf16>
    %c0_11 = arith.constant 0 : index
    %c0_12 = arith.constant 0 : index
    %27 = vector.load %arg6[%c0_11, %c0_12] : memref<128x384xbf16, #tpu.memory_space<vmem>>, vector<128x384xbf16>
    %cst_13 = arith.constant dense<0.000000e+00> : vector<8x384xf32>
    %28 = tpu.matmul %26, %27, %cst_13 {dimension_numbers = #tpu.dot_dimension_numbers<[1], [0], [0], [1], [0, 0, 1, 1], [], []>} : vector<8x128xbf16>, vector<128x384xbf16>, vector<8x384xf32> -> vector<8x384xf32>
    %29 = vector.extract_strided_slice %28 {offsets = [0, 0], sizes = [8, 128], strides = [1, 1]} : vector<8x384xf32> to vector<8x128xf32>
    %30 = vector.extract_strided_slice %28 {offsets = [0, 128], sizes = [8, 128], strides = [1, 1]} : vector<8x384xf32> to vector<8x128xf32>
    %31 = vector.extract_strided_slice %28 {offsets = [0, 256], sizes = [8, 128], strides = [1, 1]} : vector<8x384xf32> to vector<8x128xf32>
    %32 = vector.shape_cast %29 : vector<8x128xf32> to vector<8x4x32xf32>
    %33 = tpu.transpose %32, [1, 0, 2] : vector<8x4x32xf32> -> vector<4x8x32xf32>
    %34 = arith.truncf %33 : vector<4x8x32xf32> to vector<4x8x32xbf16>
    %35 = vector.shape_cast %30 : vector<8x128xf32> to vector<8x4x32xf32>
    %36 = tpu.transpose %35, [1, 0, 2] : vector<8x4x32xf32> -> vector<4x8x32xf32>
    %37 = arith.truncf %36 : vector<4x8x32xf32> to vector<4x8x32xbf16>
    %38 = vector.shape_cast %31 : vector<8x128xf32> to vector<8x4x32xf32>
    %39 = tpu.transpose %38, [1, 0, 2] : vector<8x4x32xf32> -> vector<4x8x32xf32>
    %40 = arith.truncf %39 : vector<4x8x32xf32> to vector<4x8x32xbf16>
    %cst_14 = arith.constant dense<0.000000e+00> : vector<4x8x8xf32>
    %41 = tpu.matmul %34, %37, %cst_14 {dimension_numbers = #tpu.dot_dimension_numbers<[2], [2], [1], [1], [0, 0, 0, 1, 1, 1], [0], [0]>} : vector<4x8x32xbf16>, vector<4x8x32xbf16>, vector<4x8x8xf32> -> vector<4x8x8xf32>
    %42 = vector.shape_cast %6 : vector<8x8xi1> to vector<1x8x8xi1>
    %cst_15 = arith.constant -1.000000e+30 : f32
    %43 = vector.shape_cast %42 : vector<1x8x8xi1> to vector<1x8x8xi1>
    %44 = vector.broadcast %43 : vector<1x8x8xi1> to vector<4x8x8xi1>
    %45 = vector.broadcast %cst_15 : f32 to vector<4x8x8xf32>
    %46 = arith.select %44, %41, %45 : vector<4x8x8xi1>, vector<4x8x8xf32>
    %cst_16 = arith.constant dense<0xFF800000> : vector<4x8xf32>
    %47 = vector.multi_reduction <maximumf>, %46, %cst_16 [2] : vector<4x8x8xf32> to vector<4x8xf32>
    %48 = vector.shape_cast %47 : vector<4x8xf32> to vector<4x8x1xf32>
    %49 = vector.broadcast %48 : vector<4x8x1xf32> to vector<4x8x8xf32>
    %50 = arith.subf %46, %49 : vector<4x8x8xf32>
    %51 = math.exp %50 : vector<4x8x8xf32>
    %cst_17 = arith.constant dense<0.000000e+00> : vector<4x8xf32>
    %52 = vector.multi_reduction <add>, %51, %cst_17 [2] : vector<4x8x8xf32> to vector<4x8xf32>
    %53 = vector.shape_cast %52 : vector<4x8xf32> to vector<4x8x1xf32>
    %54 = tpu.reciprocal %53 {approx = true} : vector<4x8x1xf32> -> vector<4x8x1xf32>
    %55 = vector.broadcast %54 : vector<4x8x1xf32> to vector<4x8x8xf32>
    %56 = arith.mulf %51, %55 : vector<4x8x8xf32>
    %57 = arith.truncf %56 : vector<4x8x8xf32> to vector<4x8x8xbf16>
    %cst_18 = arith.constant dense<0.000000e+00> : vector<4x8x32xf32>
    %58 = tpu.matmul %57, %40, %cst_18 {dimension_numbers = #tpu.dot_dimension_numbers<[2], [1], [1], [2], [0, 0, 0, 1, 1, 2], [0], [0]>} : vector<4x8x8xbf16>, vector<4x8x32xbf16>, vector<4x8x32xf32> -> vector<4x8x32xf32>
    %59 = tpu.transpose %58, [1, 0, 2] : vector<4x8x32xf32> -> vector<8x4x32xf32>
    %60 = vector.shape_cast %59 : vector<8x4x32xf32> to vector<8x128xf32>
    %c0_19 = arith.constant 0 : index
    %c0_20 = arith.constant 0 : index
    %61 = vector.load %arg7[%c0_19, %c0_20] : memref<128x128xbf16, #tpu.memory_space<vmem>>, vector<128x128xbf16>
    %62 = arith.truncf %60 : vector<8x128xf32> to vector<8x128xbf16>
    %cst_21 = arith.constant dense<0.000000e+00> : vector<8x128xf32>
    %63 = tpu.matmul %62, %61, %cst_21 {dimension_numbers = #tpu.dot_dimension_numbers<[1], [0], [0], [1], [0, 0, 1, 1], [], []>} : vector<8x128xbf16>, vector<128x128xbf16>, vector<8x128xf32> -> vector<8x128xf32>
    %64 = arith.addf %1, %63 : vector<8x128xf32>
    %c0_22 = arith.constant 0 : index
    %c0_23 = arith.constant 0 : index
    %65 = vector.load %arg4[%c0_22, %c0_23] : memref<1x128xf32, #tpu.memory_space<vmem>>, vector<1x128xf32>
    %cst_24 = arith.constant dense<0.000000e+00> : vector<8xf32>
    %66 = vector.multi_reduction <add>, %64, %cst_24 [1] : vector<8x128xf32> to vector<8xf32>
    %67 = vector.shape_cast %66 : vector<8xf32> to vector<8x1xf32>
    %cst_25 = arith.constant 1.280000e+02 : f32
    %68 = vector.broadcast %cst_25 : f32 to vector<8x1xf32>
    %69 = arith.divf %67, %68 : vector<8x1xf32>
    %70 = vector.broadcast %69 : vector<8x1xf32> to vector<8x128xf32>
    %71 = arith.subf %64, %70 : vector<8x128xf32>
    %72 = arith.mulf %71, %71 : vector<8x128xf32>
    %cst_26 = arith.constant dense<0.000000e+00> : vector<8xf32>
    %73 = vector.multi_reduction <add>, %72, %cst_26 [1] : vector<8x128xf32> to vector<8xf32>
    %74 = vector.shape_cast %73 : vector<8xf32> to vector<8x1xf32>
    %cst_27 = arith.constant 1.280000e+02 : f32
    %75 = vector.broadcast %cst_27 : f32 to vector<8x1xf32>
    %76 = arith.divf %74, %75 : vector<8x1xf32>
    %cst_28 = arith.constant 9.99999974E-6 : f32
    %77 = vector.broadcast %cst_28 : f32 to vector<8x1xf32>
    %78 = arith.addf %76, %77 : vector<8x1xf32>
    %79 = math.rsqrt %78 : vector<8x1xf32>
    %80 = vector.broadcast %79 : vector<8x1xf32> to vector<8x128xf32>
    %81 = arith.mulf %71, %80 : vector<8x128xf32>
    %82 = vector.broadcast %65 : vector<1x128xf32> to vector<8x128xf32>
    %83 = arith.mulf %81, %82 : vector<8x128xf32>
    %84 = arith.truncf %83 : vector<8x128xf32> to vector<8x128xbf16>
    %c0_29 = arith.constant 0 : index
    %c0_30 = arith.constant 0 : index
    %85 = vector.load %arg8[%c0_29, %c0_30] : memref<128x128xbf16, #tpu.memory_space<vmem>>, vector<128x128xbf16>
    %cst_31 = arith.constant dense<0.000000e+00> : vector<8x128xf32>
    %86 = tpu.matmul %84, %85, %cst_31 {dimension_numbers = #tpu.dot_dimension_numbers<[1], [0], [0], [1], [0, 0, 1, 1], [], []>} : vector<8x128xbf16>, vector<128x128xbf16>, vector<8x128xf32> -> vector<8x128xf32>
    %87 = arith.truncf %3 : vector<16x128xf32> to vector<16x128xbf16>
    %c0_32 = arith.constant 0 : index
    %c0_33 = arith.constant 0 : index
    %88 = vector.load %arg9[%c0_32, %c0_33] : memref<128x256xbf16, #tpu.memory_space<vmem>>, vector<128x256xbf16>
    %cst_34 = arith.constant dense<0.000000e+00> : vector<16x256xf32>
    %89 = tpu.matmul %87, %88, %cst_34 {dimension_numbers = #tpu.dot_dimension_numbers<[1], [0], [0], [1], [0, 0, 1, 1], [], []>} : vector<16x128xbf16>, vector<128x256xbf16>, vector<16x256xf32> -> vector<16x256xf32>
    %90 = vector.extract_strided_slice %89 {offsets = [0, 0], sizes = [16, 128], strides = [1, 1]} : vector<16x256xf32> to vector<16x128xf32>
    %91 = vector.extract_strided_slice %89 {offsets = [0, 128], sizes = [16, 128], strides = [1, 1]} : vector<16x256xf32> to vector<16x128xf32>
    %92 = vector.shape_cast %86 : vector<8x128xf32> to vector<8x4x32xf32>
    %93 = tpu.transpose %92, [1, 0, 2] : vector<8x4x32xf32> -> vector<4x8x32xf32>
    %94 = arith.truncf %93 : vector<4x8x32xf32> to vector<4x8x32xbf16>
    %95 = vector.shape_cast %90 : vector<16x128xf32> to vector<16x4x32xf32>
    %96 = tpu.transpose %95, [1, 0, 2] : vector<16x4x32xf32> -> vector<4x16x32xf32>
    %97 = arith.truncf %96 : vector<4x16x32xf32> to vector<4x16x32xbf16>
    %98 = vector.shape_cast %91 : vector<16x128xf32> to vector<16x4x32xf32>
    %99 = tpu.transpose %98, [1, 0, 2] : vector<16x4x32xf32> -> vector<4x16x32xf32>
    %100 = arith.truncf %99 : vector<4x16x32xf32> to vector<4x16x32xbf16>
    %cst_35 = arith.constant dense<0.000000e+00> : vector<4x8x16xf32>
    %101 = tpu.matmul %94, %97, %cst_35 {dimension_numbers = #tpu.dot_dimension_numbers<[2], [2], [1], [1], [0, 0, 0, 1, 1, 1], [0], [0]>} : vector<4x8x32xbf16>, vector<4x16x32xbf16>, vector<4x8x16xf32> -> vector<4x8x16xf32>
    %cst_36 = arith.constant dense<0xFF800000> : vector<4x8xf32>
    %102 = vector.multi_reduction <maximumf>, %101, %cst_36 [2] : vector<4x8x16xf32> to vector<4x8xf32>
    %103 = vector.shape_cast %102 : vector<4x8xf32> to vector<4x8x1xf32>
    %104 = vector.broadcast %103 : vector<4x8x1xf32> to vector<4x8x16xf32>
    %105 = arith.subf %101, %104 : vector<4x8x16xf32>
    %106 = math.exp %105 : vector<4x8x16xf32>
    %cst_37 = arith.constant dense<0.000000e+00> : vector<4x8xf32>
    %107 = vector.multi_reduction <add>, %106, %cst_37 [2] : vector<4x8x16xf32> to vector<4x8xf32>
    %108 = vector.shape_cast %107 : vector<4x8xf32> to vector<4x8x1xf32>
    %109 = tpu.reciprocal %108 {approx = true} : vector<4x8x1xf32> -> vector<4x8x1xf32>
    %110 = vector.broadcast %109 : vector<4x8x1xf32> to vector<4x8x16xf32>
    %111 = arith.mulf %106, %110 : vector<4x8x16xf32>
    %112 = arith.truncf %111 : vector<4x8x16xf32> to vector<4x8x16xbf16>
    %cst_38 = arith.constant dense<0.000000e+00> : vector<4x8x32xf32>
    %113 = tpu.matmul %112, %100, %cst_38 {dimension_numbers = #tpu.dot_dimension_numbers<[2], [1], [1], [2], [0, 0, 0, 1, 1, 2], [0], [0]>} : vector<4x8x16xbf16>, vector<4x16x32xbf16>, vector<4x8x32xf32> -> vector<4x8x32xf32>
    %114 = tpu.transpose %113, [1, 0, 2] : vector<4x8x32xf32> -> vector<8x4x32xf32>
    %115 = vector.shape_cast %114 : vector<8x4x32xf32> to vector<8x128xf32>
    %c0_39 = arith.constant 0 : index
    %c0_40 = arith.constant 0 : index
    %116 = vector.load %arg10[%c0_39, %c0_40] : memref<128x128xbf16, #tpu.memory_space<vmem>>, vector<128x128xbf16>
    %117 = arith.truncf %115 : vector<8x128xf32> to vector<8x128xbf16>
    %cst_41 = arith.constant dense<0.000000e+00> : vector<8x128xf32>
    %118 = tpu.matmul %117, %116, %cst_41 {dimension_numbers = #tpu.dot_dimension_numbers<[1], [0], [0], [1], [0, 0, 1, 1], [], []>} : vector<8x128xbf16>, vector<128x128xbf16>, vector<8x128xf32> -> vector<8x128xf32>
    %119 = arith.addf %64, %118 : vector<8x128xf32>
    %c0_42 = arith.constant 0 : index
    %c0_43 = arith.constant 0 : index
    %120 = vector.load %arg5[%c0_42, %c0_43] : memref<1x128xf32, #tpu.memory_space<vmem>>, vector<1x128xf32>
    %cst_44 = arith.constant dense<0.000000e+00> : vector<8xf32>
    %121 = vector.multi_reduction <add>, %119, %cst_44 [1] : vector<8x128xf32> to vector<8xf32>
    %122 = vector.shape_cast %121 : vector<8xf32> to vector<8x1xf32>
    %cst_45 = arith.constant 1.280000e+02 : f32
    %123 = vector.broadcast %cst_45 : f32 to vector<8x1xf32>
    %124 = arith.divf %122, %123 : vector<8x1xf32>
    %125 = vector.broadcast %124 : vector<8x1xf32> to vector<8x128xf32>
    %126 = arith.subf %119, %125 : vector<8x128xf32>
    %127 = arith.mulf %126, %126 : vector<8x128xf32>
    %cst_46 = arith.constant dense<0.000000e+00> : vector<8xf32>
    %128 = vector.multi_reduction <add>, %127, %cst_46 [1] : vector<8x128xf32> to vector<8xf32>
    %129 = vector.shape_cast %128 : vector<8xf32> to vector<8x1xf32>
    %cst_47 = arith.constant 1.280000e+02 : f32
    %130 = vector.broadcast %cst_47 : f32 to vector<8x1xf32>
    %131 = arith.divf %129, %130 : vector<8x1xf32>
    %cst_48 = arith.constant 9.99999974E-6 : f32
    %132 = vector.broadcast %cst_48 : f32 to vector<8x1xf32>
    %133 = arith.addf %131, %132 : vector<8x1xf32>
    %134 = math.rsqrt %133 : vector<8x1xf32>
    %135 = vector.broadcast %134 : vector<8x1xf32> to vector<8x128xf32>
    %136 = arith.mulf %126, %135 : vector<8x128xf32>
    %137 = vector.broadcast %120 : vector<1x128xf32> to vector<8x128xf32>
    %138 = arith.mulf %136, %137 : vector<8x128xf32>
    %139 = arith.truncf %138 : vector<8x128xf32> to vector<8x128xbf16>
    %c0_i32 = arith.constant 0 : i32
    %c512_i32 = arith.constant 512 : i32
    %140 = arith.muli %c0_i32, %c512_i32 : i32
    %141 = tpu.assume_multiple %140, 512 : i32
    %c0_49 = arith.constant 0 : index
    %142 = arith.index_cast %141 : i32 to index
    %143 = vector.load %arg11[%c0_49, %142] : memref<128x512xbf16, #tpu.memory_space<vmem>>, vector<128x512xbf16>
    %144 = arith.index_cast %141 : i32 to index
    %c0_50 = arith.constant 0 : index
    %145 = vector.load %arg12[%144, %c0_50] : memref<512x128xbf16, #tpu.memory_space<vmem>>, vector<512x128xbf16>
    %cst_51 = arith.constant dense<0.000000e+00> : vector<8x512xf32>
    %146 = tpu.matmul %139, %143, %cst_51 {dimension_numbers = #tpu.dot_dimension_numbers<[1], [0], [0], [1], [0, 0, 1, 1], [], []>} : vector<8x128xbf16>, vector<128x512xbf16>, vector<8x512xf32> -> vector<8x512xf32>
    %cst_52 = arith.constant 5.000000e-01 : f32
    %147 = vector.broadcast %cst_52 : f32 to vector<8x512xf32>
    %148 = arith.mulf %147, %146 : vector<8x512xf32>
    %cst_53 = arith.constant 0.707106769 : f32
    %149 = vector.broadcast %cst_53 : f32 to vector<8x512xf32>
    %150 = arith.mulf %146, %149 : vector<8x512xf32>
    %151 = math.erf %150 : vector<8x512xf32>
    %cst_54 = arith.constant 1.000000e+00 : f32
    %152 = vector.broadcast %cst_54 : f32 to vector<8x512xf32>
    %153 = arith.addf %152, %151 : vector<8x512xf32>
    %154 = arith.mulf %148, %153 : vector<8x512xf32>
    %155 = arith.truncf %154 : vector<8x512xf32> to vector<8x512xbf16>
    %cst_55 = arith.constant dense<0.000000e+00> : vector<8x128xf32>
    %156 = tpu.matmul %155, %145, %cst_55 {dimension_numbers = #tpu.dot_dimension_numbers<[1], [0], [0], [1], [0, 0, 1, 1], [], []>} : vector<8x512xbf16>, vector<512x128xbf16>, vector<8x128xf32> -> vector<8x128xf32>
    %157 = arith.addf %119, %156 : vector<8x128xf32>
    %c1_i32 = arith.constant 1 : i32
    %c0_56 = arith.constant 0 : index
    %c0_57 = arith.constant 0 : index
    %c0_58 = arith.constant 0 : index
    %158 = vector.load %arg13[%c0_56, %c0_57, %c0_58] : memref<1x8x128xf32, #tpu.memory_space<vmem>>, vector<1x8x128xf32>
    %159 = vector.shape_cast %158 : vector<1x8x128xf32> to vector<8x128xf32>
    %160 = vector.shape_cast %157 : vector<8x128xf32> to vector<1x8x128xf32>
    tpu.vector_store %arg13[%c0_56, %c0_57, %c0_58], %160 {strides = array<i32>} : memref<1x8x128xf32, #tpu.memory_space<vmem>>, vector<1x8x128xf32>,
    return
  }
  func.func @transform_0(%arg0: i32) -> (i32, i32, i32) {
    %c0_i32 = arith.constant 0 : i32
    %c0_i32_0 = arith.constant 0 : i32
    %c0_i32_1 = arith.constant 0 : i32
    return %arg0, %c0_i32, %c0_i32_0 : i32, i32, i32
  }
  func.func @transform_1(%arg0: i32) -> (i32, i32, i32) {
    %c0_i32 = arith.constant 0 : i32
    %c0_i32_0 = arith.constant 0 : i32
    %c0_i32_1 = arith.constant 0 : i32
    return %arg0, %c0_i32, %c0_i32_0 : i32, i32, i32
  }
  func.func @transform_2(%arg0: i32) -> (i32, i32) {
    %c0_i32 = arith.constant 0 : i32
    %c0_i32_0 = arith.constant 0 : i32
    %c0_i32_1 = arith.constant 0 : i32
    return %c0_i32, %c0_i32_0 : i32, i32
  }
  func.func @transform_3(%arg0: i32) -> (i32, i32) {
    %c0_i32 = arith.constant 0 : i32
    %c0_i32_0 = arith.constant 0 : i32
    %c0_i32_1 = arith.constant 0 : i32
    return %c0_i32, %c0_i32_0 : i32, i32
  }
  func.func @transform_4(%arg0: i32) -> (i32, i32) {
    %c0_i32 = arith.constant 0 : i32
    %c0_i32_0 = arith.constant 0 : i32
    %c0_i32_1 = arith.constant 0 : i32
    return %c0_i32, %c0_i32_0 : i32, i32
  }
  func.func @transform_5(%arg0: i32) -> (i32, i32) {
    %c0_i32 = arith.constant 0 : i32
    %c0_i32_0 = arith.constant 0 : i32
    %c0_i32_1 = arith.constant 0 : i32
    return %c0_i32, %c0_i32_0 : i32, i32
  }
  func.func @transform_6(%arg0: i32) -> (i32, i32) {
    %c0_i32 = arith.constant 0 : i32
    %c0_i32_0 = arith.constant 0 : i32
    %c0_i32_1 = arith.constant 0 : i32
    return %c0_i32, %c0_i32_0 : i32, i32
  }
  func.func @transform_7(%arg0: i32) -> (i32, i32) {
    %c0_i32 = arith.constant 0 : i32
    %c0_i32_0 = arith.constant 0 : i32
    %c0_i32_1 = arith.constant 0 : i32
    return %c0_i32, %c0_i32_0 : i32, i32
  }
  func.func @transform_8(%arg0: i32) -> (i32, i32) {
    %c0_i32 = arith.constant 0 : i32
    %c0_i32_0 = arith.constant 0 : i32
    %c0_i32_1 = arith.constant 0 : i32
    return %c0_i32, %c0_i32_0 : i32, i32
  }
  func.func @transform_9(%arg0: i32) -> (i32, i32) {
    %c0_i32 = arith.constant 0 : i32
    %c0_i32_0 = arith.constant 0 : i32
    %c0_i32_1 = arith.constant 0 : i32
    return %c0_i32, %c0_i32_0 : i32, i32
  }
  func.func @transform_10(%arg0: i32) -> (i32, i32) {
    %c0_i32 = arith.constant 0 : i32
    %c0_i32_0 = arith.constant 0 : i32
    %c0_i32_1 = arith.constant 0 : i32
    return %c0_i32, %c0_i32_0 : i32, i32
  }
  func.func @transform_11(%arg0: i32) -> (i32, i32) {
    %c0_i32 = arith.constant 0 : i32
    %c0_i32_0 = arith.constant 0 : i32
    %c0_i32_1 = arith.constant 0 : i32
    return %c0_i32, %c0_i32_0 : i32, i32
  }
  func.func @transform_12(%arg0: i32) -> (i32, i32, i32) {
    %c0_i32 = arith.constant 0 : i32
    %c0_i32_0 = arith.constant 0 : i32
    %c0_i32_1 = arith.constant 0 : i32
    return %arg0, %c0_i32, %c0_i32_0 : i32, i32, i32
  }
}

</mosaic_0001>

<llo_original>
// kernel: tpu_custom_call.1
$region0: #{tpu_custom_call.1}
  #allocation0 [shape = 'u32[]', space=smem, size = 0x4, offset = 0x4, fixed_abs, tag = 'smem constant byte address 0x4 - core index']
  #allocation1 [shape = 'u32[72,128]{1,0:T(1,128)}', space=vmem, size = 0x9000, scoped, tag = 'internal scratch']
  %s0 = inlined_call_operand.hbm [shape: f32[2,8,128], index: 0, kind: input, shape index: {}]
  %s1 = inlined_call_operand.hbm [shape: f32[2,16,128], index: 1, kind: input, shape index: {}]
  %s2 = inlined_call_operand.vmem [shape: f32[1,128], index: 2, kind: input, shape index: {}]
  %s3 = inlined_call_operand.vmem [shape: f32[1,128], index: 3, kind: input, shape index: {}]
  %s4 = inlined_call_operand.vmem [shape: f32[1,128], index: 4, kind: input, shape index: {}]
  %s5 = inlined_call_operand.hbm [shape: bf16[128,384], index: 5, kind: input, shape index: {}]
  %s6 = inlined_call_operand.hbm [shape: bf16[128,128], index: 6, kind: input, shape index: {}]
  %s7 = inlined_call_operand.hbm [shape: bf16[128,128], index: 7, kind: input, shape index: {}]
  %s8 = inlined_call_operand.hbm [shape: bf16[128,256], index: 8, kind: input, shape index: {}]
  %s9 = inlined_call_operand.hbm [shape: bf16[128,128], index: 9, kind: input, shape index: {}]
  %s10 = inlined_call_operand.hbm [shape: bf16[128,512], index: 10, kind: input, shape index: {}]
  %s11 = inlined_call_operand.hbm [shape: bf16[512,128], index: 11, kind: input, shape index: {}]
  %s12 = inlined_call_operand.hbm [shape: f32[2,8,128], index: 12, kind: output, shape index: {}]
  %s13 = sld [smem:[#allocation0]]
  $region117: #{tpu_custom_call.1} parent=0
    _
  %s15 = ssub.s32 1, %s13
  %s16 = scalar_select 0, %s15, %s13
  $region1: #{tpu_custom_call.1} parent=0
    #allocation2 [shape = 'u8[8192]{0}', space=vmem, size = 0x2000, scoped, tag = 'input window, operand 0']
    #allocation3 [shape = 's32[2]{0}', space=sflag, size = 0x8, scoped, tag = 'scoped memory for tpu_custom_call.1']
    #allocation4 [shape = 's32[2]{0}', space=sflag, size = 0x8, scoped, tag = 'scoped memory for tpu_custom_call.1']
    #allocation5 [shape = 'u8[16384]{0}', space=vmem, size = 0x4000, scoped, tag = 'input window, operand 1']
    #allocation6 [shape = 's32[2]{0}', space=sflag, size = 0x8, scoped, tag = 'scoped memory for tpu_custom_call.1']
    #allocation7 [shape = 'u8[98304]{0}', space=vmem, size = 0x18000, scoped, tag = 'input window, operand 5, single buffered']
    #allocation8 [shape = 'u8[32768]{0}', space=vmem, size = 0x8000, scoped, tag = 'input window, operand 6, single buffered']
    #allocation9 [shape = 's32[1]{0}', space=sflag, size = 0x4, scoped, tag = 'scoped memory for tpu_custom_call.1']
    #allocation10 [shape = 'u8[32768]{0}', space=vmem, size = 0x8000, scoped, tag = 'input window, operand 7, single buffered']
    #allocation11 [shape = 'u8[65536]{0}', space=vmem, size = 0x10000, scoped, tag = 'input window, operand 8, single buffered']
    #allocation12 [shape = 's32[1]{0}', space=sflag, size = 0x4, scoped, tag = 'scoped memory for tpu_custom_call.1']
    #allocation13 [shape = 'u8[32768]{0}', space=vmem, size = 0x8000, scoped, tag = 'input window, operand 9, single buffered']
    #allocation14 [shape = 'u8[131072]{0}', space=vmem, size = 0x20000, scoped, tag = 'input window, operand 10, single buffered']
    #allocation15 [shape = 's32[1]{0}', space=sflag, size = 0x4, scoped, tag = 'scoped memory for tpu_custom_call.1']
    #allocation16 [shape = 'u8[131072]{0}', space=vmem, size = 0x20000, scoped, tag = 'input window, operand 11, single buffered']
    #allocation17 [shape = 'u8[8192]{0}', space=vmem, size = 0x2000, scoped, tag = 'output window, operand 0']
    %17 = vsyncpa [#allocation3], 0
    %s18 = scalar_lea.sflag [#allocation3], 1
    %19 = vsyncpa %s18, 0
    %20 = vsyncpa [#allocation6], 0
    %s21 = scalar_lea.sflag [#allocation6], 1
    %22 = vsyncpa %s21, 0
    %23 = vsyncpa [#allocation9], 0
    %24 = vsyncpa [#allocation12], 0
    %25 = vsyncpa [#allocation15], 0
    %26 = vsyncpa [#allocation4], 0
    %s27 = scalar_lea.sflag [#allocation4], 1
    %28 = vsyncpa %s27, 0
    loop: start=0, step=1, limit=4
    $region2: #{tpu_custom_call.1} parent=1 // loop_pre_header
      _
    $region3: #{tpu_custom_call.1} parent=1 // loop_header
      %s30 = sphi 0, %s34
      %p31 = scmp.ge.s32.totalorder %s30, 4
      %s40 = sphi 0, %s42
      %s43 = sphi 0, %s40
      %s44 = sphi 0, %s43
      %s60 = sphi 0, %s44
      %s66 = sphi 0, %s68
      %s69 = sphi 0, %s66
      %s70 = sphi 0, %s69
      %s86 = sphi 0, %s70
      %s90 = sphi 0, %s90
      %s92 = sphi 0, %s90
      %s93 = sphi 0, %s92
      %s107 = sphi 0, %s93
      %s111 = sphi 0, %s111
      %s113 = sphi 0, %s111
      %s114 = sphi 0, %s113
      %s128 = sphi 0, %s114
      %s132 = sphi 0, %s132
      %s134 = sphi 0, %s132
      %s135 = sphi 0, %s134
      %s149 = sphi 0, %s135
      %s153 = sphi 0, %s153
      %s155 = sphi 0, %s153
      %s156 = sphi 0, %s155
      %s170 = sphi 0, %s156
      %s174 = sphi 0, %s174
      %s176 = sphi 0, %s174
      %s177 = sphi 0, %s176
      %s191 = sphi 0, %s177
      %s195 = sphi 0, %s195
      %s197 = sphi 0, %s195
      %s198 = sphi 0, %s197
      %s212 = sphi 0, %s198
      %s216 = sphi 0, %s216
      %s218 = sphi 0, %s216
      %s219 = sphi 0, %s218
      %s233 = sphi 0, %s219
      %s237 = sphi 0, %s237
      %s239 = sphi 0, %s237
      %s240 = sphi 0, %s239
      %s254 = sphi 0, %s240
      %s258 = sphi 0, %s258
      %s260 = sphi 0, %s258
      %s261 = sphi 0, %s260
      %s275 = sphi 0, %s261
      %s279 = sphi 0, %s279
      %s281 = sphi 0, %s279
      %s282 = sphi 0, %s281
      %s296 = sphi 0, %s282
      %s302 = sphi 0, %s304
      %s305 = sphi 0, %s302
      %s306 = sphi 0, %s305
      %s322 = sphi 0, %s306
    $region4: #{tpu_custom_call.1} parent=1 // loop_header_branch
      %33 = sbr.rel (%p31) target = $region8
    $region5: #{tpu_custom_call.1} parent=1 // loop_body
      %s35 = ssub.s32 %s30, 1
      %s36 = ssub.s32 %s30, 2
      %s37 = sadd.s32 %s30, 1
      %s38 = ssub.s32 %s30, %s37
      %p39 = scmp.eq.s32.totalorder %s38, 0
      %s41 = sadd.s32 %s40, 1
      %s42 = scalar_select %p39, %s40, %s41
      %p45 = pneg %p39
      %p46 = scmp.eq.s32.totalorder %s30, 1
      %p47 = por %p45, %p46
      %p48 = scmp.ne.s32.totalorder %s40, %s43
      %p49 = scmp.eq.s32.totalorder %s30, 0
      %p50 = por %p48, %p49
      %p51 = scmp.ne.s32.totalorder %s40, %s43
      %p52 = scmp.eq.s32.totalorder %s35, 1
      %p53 = por %p51, %p52
      %p54 = scmp.ne.s32.totalorder %s43, %s44
      %p55 = scmp.eq.s32.totalorder %s35, 0
      %p56 = por %p54, %p55
      %p57 = scmp.ne.s32.totalorder %s43, %s44
      %p58 = scmp.eq.s32.totalorder %s36, 1
      %p59 = por %p57, %p58
      %p61 = scmp.ne.s32.totalorder %s44, %s60
      %p62 = scmp.eq.s32.totalorder %s36, 0
      %p63 = por %p61, %p62
      %s64 = ssub.s32 %s30, %s37
      %p65 = scmp.eq.s32.totalorder %s64, 0
      %s67 = sadd.s32 %s66, 1
      %s68 = scalar_select %p65, %s66, %s67
      %p71 = pneg %p65
      %p72 = scmp.eq.s32.totalorder %s30, 1
      %p73 = por %p71, %p72
      %p74 = scmp.ne.s32.totalorder %s66, %s69
      %p75 = scmp.eq.s32.totalorder %s30, 0
      %p76 = por %p74, %p75
      %p77 = scmp.ne.s32.totalorder %s66, %s69
      %p78 = scmp.eq.s32.totalorder %s35, 1
      %p79 = por %p77, %p78
      %p80 = scmp.ne.s32.totalorder %s69, %s70
      %p81 = scmp.eq.s32.totalorder %s35, 0
      %p82 = por %p80, %p81
      %p83 = scmp.ne.s32.totalorder %s69, %s70
      %p84 = scmp.eq.s32.totalorder %s36, 1
      %p85 = por %p83, %p84
      %p87 = scmp.ne.s32.totalorder %s70, %s86
      %p88 = scmp.eq.s32.totalorder %s36, 0
      %p89 = por %p87, %p88
      %s91 = sadd.s32 %s90, 1
      %p94 = scmp.eq.s32.totalorder %s30, 1
      %p95 = scmp.ne.s32.totalorder %s90, %s92
      %p96 = scmp.eq.s32.totalorder %s30, 0
      %p97 = por %p95, %p96
      %p98 = scmp.ne.s32.totalorder %s90, %s92
      %p99 = scmp.eq.s32.totalorder %s35, 1
      %p100 = por %p98, %p99
      %p101 = scmp.ne.s32.totalorder %s92, %s93
      %p102 = scmp.eq.s32.totalorder %s35, 0
      %p103 = por %p101, %p102
      %p104 = scmp.ne.s32.totalorder %s92, %s93
      %p105 = scmp.eq.s32.totalorder %s36, 1
      %p106 = por %p104, %p105
      %p108 = scmp.ne.s32.totalorder %s93, %s107
      %p109 = scmp.eq.s32.totalorder %s36, 0
      %p110 = por %p108, %p109
      %s112 = sadd.s32 %s111, 1
      %p115 = scmp.eq.s32.totalorder %s30, 1
      %p116 = scmp.ne.s32.totalorder %s111, %s113
      %p117 = scmp.eq.s32.totalorder %s30, 0
      %p118 = por %p116, %p117
      %p119 = scmp.ne.s32.totalorder %s111, %s113
      %p120 = scmp.eq.s32.totalorder %s35, 1
      %p121 = por %p119, %p120
      %p122 = scmp.ne.s32.totalorder %s113, %s114
      %p123 = scmp.eq.s32.totalorder %s35, 0
      %p124 = por %p122, %p123
      %p125 = scmp.ne.s32.totalorder %s113, %s114
      %p126 = scmp.eq.s32.totalorder %s36, 1
      %p127 = por %p125, %p126
      %p129 = scmp.ne.s32.totalorder %s114, %s128
      %p130 = scmp.eq.s32.totalorder %s36, 0
      %p131 = por %p129, %p130
      %s133 = sadd.s32 %s132, 1
      %p136 = scmp.eq.s32.totalorder %s30, 1
      %p137 = scmp.ne.s32.totalorder %s132, %s134
      %p138 = scmp.eq.s32.totalorder %s30, 0
      %p139 = por %p137, %p138
      %p140 = scmp.ne.s32.totalorder %s132, %s134
      %p141 = scmp.eq.s32.totalorder %s35, 1
      %p142 = por %p140, %p141
      %p143 = scmp.ne.s32.totalorder %s134, %s135
      %p144 = scmp.eq.s32.totalorder %s35, 0
      %p145 = por %p143, %p144
      %p146 = scmp.ne.s32.totalorder %s134, %s135
      %p147 = scmp.eq.s32.totalorder %s36, 1
      %p148 = por %p146, %p147
      %p150 = scmp.ne.s32.totalorder %s135, %s149
      %p151 = scmp.eq.s32.totalorder %s36, 0
      %p152 = por %p150, %p151
      %s154 = sadd.s32 %s153, 1
      %p157 = scmp.eq.s32.totalorder %s30, 1
      %p158 = scmp.ne.s32.totalorder %s153, %s155
      %p159 = scmp.eq.s32.totalorder %s30, 0
      %p160 = por %p158, %p159
      %p161 = scmp.ne.s32.totalorder %s153, %s155
      %p162 = scmp.eq.s32.totalorder %s35, 1
      %p163 = por %p161, %p162
      %p164 = scmp.ne.s32.totalorder %s155, %s156
      %p165 = scmp.eq.s32.totalorder %s35, 0
      %p166 = por %p164, %p165
      %p167 = scmp.ne.s32.totalorder %s155, %s156
      %p168 = scmp.eq.s32.totalorder %s36, 1
      %p169 = por %p167, %p168
      %p171 = scmp.ne.s32.totalorder %s156, %s170
      %p172 = scmp.eq.s32.totalorder %s36, 0
      %p173 = por %p171, %p172
      %s175 = sadd.s32 %s174, 1
      %p178 = scmp.eq.s32.totalorder %s30, 1
      %p179 = scmp.ne.s32.totalorder %s174, %s176
      %p180 = scmp.eq.s32.totalorder %s30, 0
      %p181 = por %p179, %p180
      %p182 = scmp.ne.s32.totalorder %s174, %s176
      %p183 = scmp.eq.s32.totalorder %s35, 1
      %p184 = por %p182, %p183
      %p185 = scmp.ne.s32.totalorder %s176, %s177
      %p186 = scmp.eq.s32.totalorder %s35, 0
      %p187 = por %p185, %p186
      %p188 = scmp.ne.s32.totalorder %s176, %s177
      %p189 = scmp.eq.s32.totalorder %s36, 1
      %p190 = por %p188, %p189
      %p192 = scmp.ne.s32.totalorder %s177, %s191
      %p193 = scmp.eq.s32.totalorder %s36, 0
      %p194 = por %p192, %p193
      %s196 = sadd.s32 %s195, 1
      %p199 = scmp.eq.s32.totalorder %s30, 1
      %p200 = scmp.ne.s32.totalorder %s195, %s197
      %p201 = scmp.eq.s32.totalorder %s30, 0
      %p202 = por %p200, %p201
      %p203 = scmp.ne.s32.totalorder %s195, %s197
      %p204 = scmp.eq.s32.totalorder %s35, 1
      %p205 = por %p203, %p204
      %p206 = scmp.ne.s32.totalorder %s197, %s198
      %p207 = scmp.eq.s32.totalorder %s35, 0
      %p208 = por %p206, %p207
      %p209 = scmp.ne.s32.totalorder %s197, %s198
      %p210 = scmp.eq.s32.totalorder %s36, 1
      %p211 = por %p209, %p210
      %p213 = scmp.ne.s32.totalorder %s198, %s212
      %p214 = scmp.eq.s32.totalorder %s36, 0
      %p215 = por %p213, %p214
      %s217 = sadd.s32 %s216, 1
      %p220 = scmp.eq.s32.totalorder %s30, 1
      %p221 = scmp.ne.s32.totalorder %s216, %s218
      %p222 = scmp.eq.s32.totalorder %s30, 0
      %p223 = por %p221, %p222
      %p224 = scmp.ne.s32.totalorder %s216, %s218
      %p225 = scmp.eq.s32.totalorder %s35, 1
      %p226 = por %p224, %p225
      %p227 = scmp.ne.s32.totalorder %s218, %s219
      %p228 = scmp.eq.s32.totalorder %s35, 0
      %p229 = por %p227, %p228
      %p230 = scmp.ne.s32.totalorder %s218, %s219
      %p231 = scmp.eq.s32.totalorder %s36, 1
      %p232 = por %p230, %p231
      %p234 = scmp.ne.s32.totalorder %s219, %s233
      %p235 = scmp.eq.s32.totalorder %s36, 0
      %p236 = por %p234, %p235
      %s238 = sadd.s32 %s237, 1
      %p241 = scmp.eq.s32.totalorder %s30, 1
      %p242 = scmp.ne.s32.totalorder %s237, %s239
      %p243 = scmp.eq.s32.totalorder %s30, 0
      %p244 = por %p242, %p243
      %p245 = scmp.ne.s32.totalorder %s237, %s239
      %p246 = scmp.eq.s32.totalorder %s35, 1
      %p247 = por %p245, %p246
      %p248 = scmp.ne.s32.totalorder %s239, %s240
      %p249 = scmp.eq.s32.totalorder %s35, 0
      %p250 = por %p248, %p249
      %p251 = scmp.ne.s32.totalorder %s239, %s240
      %p252 = scmp.eq.s32.totalorder %s36, 1
      %p253 = por %p251, %p252
      %p255 = scmp.ne.s32.totalorder %s240, %s254
      %p256 = scmp.eq.s32.totalorder %s36, 0
      %p257 = por %p255, %p256
      %s259 = sadd.s32 %s258, 1
      %p262 = scmp.eq.s32.totalorder %s30, 1
      %p263 = scmp.ne.s32.totalorder %s258, %s260
      %p264 = scmp.eq.s32.totalorder %s30, 0
      %p265 = por %p263, %p264
      %p266 = scmp.ne.s32.totalorder %s258, %s260
      %p267 = scmp.eq.s32.totalorder %s35, 1
      %p268 = por %p266, %p267
      %p269 = scmp.ne.s32.totalorder %s260, %s261
      %p270 = scmp.eq.s32.totalorder %s35, 0
      %p271 = por %p269, %p270
      %p272 = scmp.ne.s32.totalorder %s260, %s261
      %p273 = scmp.eq.s32.totalorder %s36, 1
      %p274 = por %p272, %p273
      %p276 = scmp.ne.s32.totalorder %s261, %s275
      %p277 = scmp.eq.s32.totalorder %s36, 0
      %p278 = por %p276, %p277
      %s280 = sadd.s32 %s279, 1
      %p283 = scmp.eq.s32.totalorder %s30, 1
      %p284 = scmp.ne.s32.totalorder %s279, %s281
      %p285 = scmp.eq.s32.totalorder %s30, 0
      %p286 = por %p284, %p285
      %p287 = scmp.ne.s32.totalorder %s279, %s281
      %p288 = scmp.eq.s32.totalorder %s35, 1
      %p289 = por %p287, %p288
      %p290 = scmp.ne.s32.totalorder %s281, %s282
      %p291 = scmp.eq.s32.totalorder %s35, 0
      %p292 = por %p290, %p291
      %p293 = scmp.ne.s32.totalorder %s281, %s282
      %p294 = scmp.eq.s32.totalorder %s36, 1
      %p295 = por %p293, %p294
      %p297 = scmp.ne.s32.totalorder %s282, %s296
      %p298 = scmp.eq.s32.totalorder %s36, 0
      %p299 = por %p297, %p298
      %s300 = ssub.s32 %s30, %s37
      %p301 = scmp.eq.s32.totalorder %s300, 0
      %s303 = sadd.s32 %s302, 1
      %s304 = scalar_select %p301, %s302, %s303
      %p307 = pneg %p301
      %p308 = scmp.eq.s32.totalorder %s30, 1
      %p309 = por %p307, %p308
      %p310 = scmp.ne.s32.totalorder %s302, %s305
      %p311 = scmp.eq.s32.totalorder %s30, 0
      %p312 = por %p310, %p311
      %p313 = scmp.ne.s32.totalorder %s302, %s305
      %p314 = scmp.eq.s32.totalorder %s35, 1
      %p315 = por %p313, %p314
      %p316 = scmp.ne.s32.totalorder %s305, %s306
      %p317 = scmp.eq.s32.totalorder %s35, 0
      %p318 = por %p316, %p317
      %p319 = scmp.ne.s32.totalorder %s305, %s306
      %p320 = scmp.eq.s32.totalorder %s36, 1
      %p321 = por %p319, %p320
      %p323 = scmp.ne.s32.totalorder %s306, %s322
      %p324 = scmp.eq.s32.totalorder %s36, 0
      %p325 = por %p323, %p324
      %p326 = scmp.le.s32.totalorder 1, %s30
      %p327 = scmp.lt.s32.totalorder %s30, 3
      %p328 = pnand %p326, %p327
      %p329 = pneg %p328
      // Predicated region
      $region9: #{tpu_custom_call.1} parent=5 // pred_check
        _
      $region10: #{tpu_custom_call.1} parent=5 // pred_check_branch
        %331 = sbr.rel (%p328) target = $region12
      $region11: #{tpu_custom_call.1} parent=5 // pred_region
        %s332 = ssub.s32 %s30, 1
        // Predicated region
        $region13: #{tpu_custom_call.1} parent=11 // pred_check
          %p333 = pneg %p103
        $region14: #{tpu_custom_call.1} parent=11 // pred_check_branch
          %335 = sbr.rel (%p333) target = $region16
        $region15: #{tpu_custom_call.1} parent=11 // pred_region
          _
        $region16: #{tpu_custom_call.1} parent=11 // pred_fallthru
          _
        // Predicated region
        $region17: #{tpu_custom_call.1} parent=11 // pred_check
          %p336 = pneg %p124
        $region18: #{tpu_custom_call.1} parent=11 // pred_check_branch
          %338 = sbr.rel (%p336) target = $region20
        $region19: #{tpu_custom_call.1} parent=11 // pred_region
          _
        $region20: #{tpu_custom_call.1} parent=11 // pred_fallthru
          _
        // Predicated region
        $region21: #{tpu_custom_call.1} parent=11 // pred_check
          %p339 = pneg %p145
        $region22: #{tpu_custom_call.1} parent=11 // pred_check_branch
          %341 = sbr.rel (%p339) target = $region24
        $region23: #{tpu_custom_call.1} parent=11 // pred_region
          _
        $region24: #{tpu_custom_call.1} parent=11 // pred_fallthru
          _
        // Predicated region
        $region25: #{tpu_custom_call.1} parent=11 // pred_check
          %p342 = pneg %p166
        $region26: #{tpu_custom_call.1} parent=11 // pred_check_branch
          %344 = sbr.rel (%p342) target = $region28
        $region27: #{tpu_custom_call.1} parent=11 // pred_region
          %346 = vsyncadd [#allocation6], 0
          %s347 = sshll.u32 %s5, 4
          %s348 = int_to_ptr.hbm [resolvable:$true] %s347
          %s349 = sshll.u32 [#allocation7], 4
          %s350 = int_to_ptr.vmem [resolvable:$true] %s349
          %355 = dma.hbm_to_vmem [thread:$0]  %s348, 3072, %s350, [#allocation6], 192, 192, 12
        $region28: #{tpu_custom_call.1} parent=11 // pred_fallthru
          _
        // Predicated region
        $region29: #{tpu_custom_call.1} parent=11 // pred_check
          %p356 = pneg %p187
        $region30: #{tpu_custom_call.1} parent=11 // pred_check_branch
          %358 = sbr.rel (%p356) target = $region32
        $region31: #{tpu_custom_call.1} parent=11 // pred_region
          %360 = vsyncadd [#allocation9], 0
          %s361 = sshll.u32 %s6, 4
          %s362 = int_to_ptr.hbm [resolvable:$true] %s361
          %s363 = sshll.u32 [#allocation8], 4
          %s364 = int_to_ptr.vmem [resolvable:$true] %s363
          %369 = dma.hbm_to_vmem [thread:$0]  %s362, 1024, %s364, [#allocation9], 64, 64, 4
        $region32: #{tpu_custom_call.1} parent=11 // pred_fallthru
          _
        // Predicated region
        $region33: #{tpu_custom_call.1} parent=11 // pred_check
          %p370 = pneg %p208
        $region34: #{tpu_custom_call.1} parent=11 // pred_check_branch
          %372 = sbr.rel (%p370) target = $region36
        $region35: #{tpu_custom_call.1} parent=11 // pred_region
          %374 = vsyncadd [#allocation9], 0
          %s375 = sshll.u32 %s7, 4
          %s376 = int_to_ptr.hbm [resolvable:$true] %s375
          %s377 = sshll.u32 [#allocation10], 4
          %s378 = int_to_ptr.vmem [resolvable:$true] %s377
          %383 = dma.hbm_to_vmem [thread:$0]  %s376, 1024, %s378, [#allocation9], 64, 64, 4
        $region36: #{tpu_custom_call.1} parent=11 // pred_fallthru
          _
        // Predicated region
        $region37: #{tpu_custom_call.1} parent=11 // pred_check
          %p384 = pneg %p229
        $region38: #{tpu_custom_call.1} parent=11 // pred_check_branch
          %386 = sbr.rel (%p384) target = $region40
        $region39: #{tpu_custom_call.1} parent=11 // pred_region
          %388 = vsyncadd [#allocation12], 0
          %s389 = sshll.u32 %s8, 4
          %s390 = int_to_ptr.hbm [resolvable:$true] %s389
          %s391 = sshll.u32 [#allocation11], 4
          %s392 = int_to_ptr.vmem [resolvable:$true] %s391
          %397 = dma.hbm_to_vmem [thread:$0]  %s390, 2048, %s392, [#allocation12], 128, 128, 8
        $region40: #{tpu_custom_call.1} parent=11 // pred_fallthru
          _
        // Predicated region
        $region41: #{tpu_custom_call.1} parent=11 // pred_check
          %p398 = pneg %p250
        $region42: #{tpu_custom_call.1} parent=11 // pred_check_branch
          %400 = sbr.rel (%p398) target = $region44
        $region43: #{tpu_custom_call.1} parent=11 // pred_region
          %402 = vsyncadd [#allocation12], 0
          %s403 = sshll.u32 %s9, 4
          %s404 = int_to_ptr.hbm [resolvable:$true] %s403
          %s405 = sshll.u32 [#allocation13], 4
          %s406 = int_to_ptr.vmem [resolvable:$true] %s405
          %411 = dma.hbm_to_vmem [thread:$0]  %s404, 1024, %s406, [#allocation12], 64, 64, 4
        $region44: #{tpu_custom_call.1} parent=11 // pred_fallthru
          _
        // Predicated region
        $region45: #{tpu_custom_call.1} parent=11 // pred_check
          %p412 = pneg %p271
        $region46: #{tpu_custom_call.1} parent=11 // pred_check_branch
          %414 = sbr.rel (%p412) target = $region48
        $region47: #{tpu_custom_call.1} parent=11 // pred_region
          %416 = vsyncadd [#allocation15], 0
          %s417 = sshll.u32 %s10, 4
          %s418 = int_to_ptr.hbm [resolvable:$true] %s417
          %s419 = sshll.u32 [#allocation14], 4
          %s420 = int_to_ptr.vmem [resolvable:$true] %s419
          %425 = dma.hbm_to_vmem [thread:$0]  %s418, 4096, %s420, [#allocation15], 256, 256, 16
        $region48: #{tpu_custom_call.1} parent=11 // pred_fallthru
          _
        // Predicated region
        $region49: #{tpu_custom_call.1} parent=11 // pred_check
          %p426 = pneg %p292
        $region50: #{tpu_custom_call.1} parent=11 // pred_check_branch
          %428 = sbr.rel (%p426) target = $region52
        $region51: #{tpu_custom_call.1} parent=11 // pred_region
          %430 = vsyncadd [#allocation15], 0
          %s431 = sshll.u32 %s11, 4
          %s432 = int_to_ptr.hbm [resolvable:$true] %s431
          %s433 = sshll.u32 [#allocation16], 4
          %s434 = int_to_ptr.vmem [resolvable:$true] %s433
          %439 = dma.hbm_to_vmem [thread:$0]  %s432, 4096, %s434, [#allocation15], 64, 64, 4
        $region52: #{tpu_custom_call.1} parent=11 // pred_fallthru
          _
      $region12: #{tpu_custom_call.1} parent=5 // pred_fallthru
        _
      %p440 = scmp.lt.s32.totalorder %s30, 2
      // Predicated region
      $region53: #{tpu_custom_call.1} parent=5 // pred_check
        %p441 = pneg %p440
      $region54: #{tpu_custom_call.1} parent=5 // pred_check_branch
        %443 = sbr.rel (%p441) target = $region56
      $region55: #{tpu_custom_call.1} parent=5 // pred_region
        // Predicated region
        $region57: #{tpu_custom_call.1} parent=55 // pred_check
          %p444 = pneg %p50
        $region58: #{tpu_custom_call.1} parent=55 // pred_check_branch
          %446 = sbr.rel (%p444) target = $region60
        $region59: #{tpu_custom_call.1} parent=55 // pred_region
          %s447 = sand.u32 %s40, 1
          %s448 = scalar_lea.sflag [#allocation3], %s447
          %s449 = sand.u32 %s40, 1
          %s450 = smul.addr %s449, 8
          %s451 = scalar_lea.vmem [#allocation2], %s450
          %453 = vsyncadd %s448, 0
          %s454 = smul.addr %s30, 8
          %s455 = scalar_lea.hbm %s0, %s454
          %s457 = sshll.u32 %s455, 4
          %s458 = int_to_ptr.hbm [resolvable:$true] %s457
          %s459 = sshll.u32 %s451, 4
          %s460 = int_to_ptr.vmem [resolvable:$true] %s459
          %462 = dma.hbm_to_vmem [thread:$0]  %s458, 128, %s460, %s448
        $region60: #{tpu_custom_call.1} parent=55 // pred_fallthru
          _
        // Predicated region
        $region61: #{tpu_custom_call.1} parent=55 // pred_check
          %p463 = pneg %p76
        $region62: #{tpu_custom_call.1} parent=55 // pred_check_branch
          %465 = sbr.rel (%p463) target = $region64
        $region63: #{tpu_custom_call.1} parent=55 // pred_region
          %s466 = sand.u32 %s30, 1
          %s467 = scalar_lea.sflag [#allocation6], %s466
          %s468 = sand.u32 %s66, 1
          %s469 = smul.addr %s468, 16
          %s470 = scalar_lea.vmem [#allocation5], %s469
          %472 = vsyncadd %s467, 0
          %s473 = smul.addr %s30, 2
          %s474 = smul.addr %s473, 8
          %s475 = scalar_lea.hbm %s1, %s474
          %s476 = sshll.u32 %s475, 4
          %s477 = int_to_ptr.hbm [resolvable:$true] %s476
          %s478 = sshll.u32 %s470, 4
          %s479 = int_to_ptr.vmem [resolvable:$true] %s478
          %484 = dma.hbm_to_vmem [thread:$0]  %s477, 256, %s479, %s467, 128, 128, 8
        $region64: #{tpu_custom_call.1} parent=55 // pred_fallthru
          _
      $region56: #{tpu_custom_call.1} parent=5 // pred_fallthru
        _
      %p485 = scmp.le.s32.totalorder 1, %s30
      %p486 = scmp.lt.s32.totalorder %s30, 3
      %p487 = pnand %p485, %p486
      %p488 = pneg %p487
      // Predicated region
      $region65: #{tpu_custom_call.1} parent=5 // pred_check
        _
      $region66: #{tpu_custom_call.1} parent=5 // pred_check_branch
        %490 = sbr.rel (%p487) target = $region68
      $region67: #{tpu_custom_call.1} parent=5 // pred_region
        %s491 = ssub.s32 %s30, 1
        %s492 = sand.u32 %s43, 1
        %s493 = scalar_lea.sflag [#allocation3], %s492
        %s494 = sand.u32 %s43, 1
        %s495 = smul.addr %s494, 8
        %s496 = scalar_lea.vmem [#allocation2], %s495
        // Predicated region
        $region69: #{tpu_custom_call.1} parent=67 // pred_check
          %p497 = pneg %p56
        $region70: #{tpu_custom_call.1} parent=67 // pred_check_branch
          %499 = sbr.rel (%p497) target = $region72
        $region71: #{tpu_custom_call.1} parent=67 // pred_region
          %501 = dma.done %s493, 128
        $region72: #{tpu_custom_call.1} parent=67 // pred_fallthru
          _
        %s502 = sand.u32 %s35, 1
        %s503 = scalar_lea.sflag [#allocation6], %s502
        %s504 = sand.u32 %s69, 1
        %s505 = smul.addr %s504, 16
        %s506 = scalar_lea.vmem [#allocation5], %s505
        // Predicated region
        $region73: #{tpu_custom_call.1} parent=67 // pred_check
          %p507 = pneg %p82
        $region74: #{tpu_custom_call.1} parent=67 // pred_check_branch
          %509 = sbr.rel (%p507) target = $region76
        $region75: #{tpu_custom_call.1} parent=67 // pred_region
          %511 = dma.done %s503, 256
        $region76: #{tpu_custom_call.1} parent=67 // pred_fallthru
          _
        // Predicated region
        $region77: #{tpu_custom_call.1} parent=67 // pred_check
          %p512 = pneg %p166
        $region78: #{tpu_custom_call.1} parent=67 // pred_check_branch
          %514 = sbr.rel (%p512) target = $region80
        $region79: #{tpu_custom_call.1} parent=67 // pred_region
          %516 = dma.done [#allocation6], 3072
        $region80: #{tpu_custom_call.1} parent=67 // pred_fallthru
          _
        // Predicated region
        $region81: #{tpu_custom_call.1} parent=67 // pred_check
          %p517 = pneg %p187
        $region82: #{tpu_custom_call.1} parent=67 // pred_check_branch
          %519 = sbr.rel (%p517) target = $region84
        $region83: #{tpu_custom_call.1} parent=67 // pred_region
          %521 = dma.done [#allocation9], 1024
        $region84: #{tpu_custom_call.1} parent=67 // pred_fallthru
          _
        // Predicated region
        $region85: #{tpu_custom_call.1} parent=67 // pred_check
          %p522 = pneg %p208
        $region86: #{tpu_custom_call.1} parent=67 // pred_check_branch
          %524 = sbr.rel (%p522) target = $region88
        $region87: #{tpu_custom_call.1} parent=67 // pred_region
          %526 = dma.done [#allocation9], 1024
        $region88: #{tpu_custom_call.1} parent=67 // pred_fallthru
          _
        // Predicated region
        $region89: #{tpu_custom_call.1} parent=67 // pred_check
          %p527 = pneg %p229
        $region90: #{tpu_custom_call.1} parent=67 // pred_check_branch
          %529 = sbr.rel (%p527) target = $region92
        $region91: #{tpu_custom_call.1} parent=67 // pred_region
          %531 = dma.done [#allocation12], 2048
        $region92: #{tpu_custom_call.1} parent=67 // pred_fallthru
          _
        // Predicated region
        $region93: #{tpu_custom_call.1} parent=67 // pred_check
          %p532 = pneg %p250
        $region94: #{tpu_custom_call.1} parent=67 // pred_check_branch
          %534 = sbr.rel (%p532) target = $region96
        $region95: #{tpu_custom_call.1} parent=67 // pred_region
          %536 = dma.done [#allocation12], 1024
        $region96: #{tpu_custom_call.1} parent=67 // pred_fallthru
          _
        // Predicated region
        $region97: #{tpu_custom_call.1} parent=67 // pred_check
          %p537 = pneg %p271
        $region98: #{tpu_custom_call.1} parent=67 // pred_check_branch
          %539 = sbr.rel (%p537) target = $region100
        $region99: #{tpu_custom_call.1} parent=67 // pred_region
          %541 = dma.done [#allocation15], 4096
        $region100: #{tpu_custom_call.1} parent=67 // pred_fallthru
          _
        // Predicated region
        $region101: #{tpu_custom_call.1} parent=67 // pred_check
          %p542 = pneg %p292
        $region102: #{tpu_custom_call.1} parent=67 // pred_check_branch
          %544 = sbr.rel (%p542) target = $region104
        $region103: #{tpu_custom_call.1} parent=67 // pred_region
          %546 = dma.done [#allocation15], 4096
        $region104: #{tpu_custom_call.1} parent=67 // pred_fallthru
          _
        %s547 = sand.u32 %s43, 1
        %s548 = scalar_lea.sflag [#allocation3], %s547
        %s549 = sand.u32 %s43, 1
        %s550 = smul.addr %s549, 8
        %s551 = scalar_lea.vmem [#allocation2], %s550
        %p552 = pneg %p56
        %p553 = pneg %p53
        %s554 = sand.u32 %s35, 1
        %s555 = scalar_lea.sflag [#allocation6], %s554
        %s556 = sand.u32 %s69, 1
        %s557 = smul.addr %s556, 16
        %s558 = scalar_lea.vmem [#allocation5], %s557
        %p559 = pneg %p82
        %p560 = pneg %p79
        %p561 = pneg %p103
        %p562 = pneg %p100
        %p563 = pneg %p124
        %p564 = pneg %p121
        %p565 = pneg %p145
        %p566 = pneg %p142
        %p567 = pneg %p166
        %p568 = pneg %p163
        %p569 = pneg %p187
        %p570 = pneg %p184
        %p571 = pneg %p208
        %p572 = pneg %p205
        %p573 = pneg %p229
        %p574 = pneg %p226
        %p575 = pneg %p250
        %p576 = pneg %p247
        %p577 = pneg %p271
        %p578 = pneg %p268
        %p579 = pneg %p292
        %p580 = pneg %p289
        %p581 = pneg %p318
        %p582 = pneg %p315
        %s583 = sand.u32 %s305, 1
        %s584 = scalar_lea.sflag [#allocation4], %s583
        %s585 = sand.u32 %s305, 1
        %s586 = smul.addr %s585, 8
        %s587 = scalar_lea.vmem [#allocation17], %s586
        %v589 = vld [vmem:[%s496] sm:$0xff]
        %v590 = vld [vmem:[%s506] sm:$0xff]
        %v591 = vld [vmem:[%s506 + $0x8] sm:$0xff]
        %v592 = vlaneseq
        %v593 = vshrl.u32 %v592, 7
        %v594 = vlaneseq
        %v595 = vand.u32 %v594, 127
        %vm596 = vcmp.le.s32.totalorder %v595, %v593
        %v597 = vld [vmem:[%s2] sm:$0x1]
        %598 = vadd.xlane.f32.xlu0 %v589
        %v599 = vpop.xlane.xlu0 %598
        %v600 = vrcp.pop 128.0
        %v601 = vmul.f32 128.0, %v600
        %v602 = vsub.f32 1.0, %v601
        %v603 = vmul.f32 %v600, %v602
        %v604 = vadd.f32 %v600, %v603
        %vm605 = vweird.f32 %v600
        %v606 = vsel %vm605, %v600, %v604
        %v607 = vmul.f32 %v599, %v606
        %v608 = vsub.f32 %v589, %v607
        %v609 = vmul.f32 %v608, %v608
        %610 = vadd.xlane.f32.xlu0 %v609
        %v611 = vpop.xlane.xlu0 %610
        %v612 = vmul.f32 %v611, %v606
        %v613 = vadd.f32 %v612, 1e-05
        %v614 = vrsqrt.pop %v613
        %v615 = vmul.f32 %v614, %v613
        %v616 = vmul.f32 %v615, %v614
        %v617 = vmul.f32 0.5, %v616
        %v618 = vsub.f32 1.5, %v617
        %v619 = vmul.f32 %v614, %v618
        %vm620 = vweird.f32 %v613
        %vm621 = vweird.f32 %v614
        %vm622 = vmor %vm620, %vm621
        %v623 = vsel %vm622, %v614, %v619
        %v624 = vmul.f32 %v608, %v623
        %v626 = vperm.slane %v597, 0
        %v628 = vmul.f32 %v624, %v626
        %v629 = vpack.c.bf16 %v628, %v628
        %v630 = vld [vmem:[#allocation7] sm:$0xff]
        %v631 = vld [vmem:[#allocation7 + $0x8] sm:$0xf]
        %v632 = vld [vmem:[#allocation7 + $0xc] sm:$0xff]
        %v633 = vld [vmem:[#allocation7 + $0x14] sm:$0xf]
        %v634 = vld [vmem:[#allocation7 + $0x18] sm:$0xff]
        %v635 = vld [vmem:[#allocation7 + $0x20] sm:$0xf]
        %v636 = vld [vmem:[#allocation7 + $0x24] sm:$0xff]
        %v637 = vld [vmem:[#allocation7 + $0x2c] sm:$0xf]
        %v638 = vld [vmem:[#allocation7 + $0x30] sm:$0xff]
        %v639 = vld [vmem:[#allocation7 + $0x38] sm:$0xf]
        %v640 = vld [vmem:[#allocation7 + $0x3c] sm:$0xff]
        %v641 = vld [vmem:[#allocation7 + $0x44] sm:$0xf]
        %v642 = vld [vmem:[#allocation7 + $0x48] sm:$0xff]
        %v643 = vld [vmem:[#allocation7 + $0x50] sm:$0xf]
        %v644 = vld [vmem:[#allocation7 + $0x54] sm:$0xff]
        %v645 = vld [vmem:[#allocation7 + $0x5c] sm:$0xf]
        %v646 = vld [vmem:[#allocation7 + $0x60] sm:$0xff]
        %v647 = vld [vmem:[#allocation7 + $0x68] sm:$0xf]
        %v648 = vld [vmem:[#allocation7 + $0x6c] sm:$0xff]
        %v649 = vld [vmem:[#allocation7 + $0x74] sm:$0xf]
        %v650 = vld [vmem:[#allocation7 + $0x78] sm:$0xff]
        %v651 = vld [vmem:[#allocation7 + $0x80] sm:$0xf]
        %v652 = vld [vmem:[#allocation7 + $0x84] sm:$0xff]
        %v653 = vld [vmem:[#allocation7 + $0x8c] sm:$0xf]
        %v654 = vld [vmem:[#allocation7 + $0x90] sm:$0xff]
        %v655 = vld [vmem:[#allocation7 + $0x98] sm:$0xf]
        %v656 = vld [vmem:[#allocation7 + $0x9c] sm:$0xff]
        %v657 = vld [vmem:[#allocation7 + $0xa4] sm:$0xf]
        %v658 = vld [vmem:[#allocation7 + $0xa8] sm:$0xff]
        %v659 = vld [vmem:[#allocation7 + $0xb0] sm:$0xf]
        %v660 = vld [vmem:[#allocation7 + $0xb4] sm:$0xff]
        %v661 = vld [vmem:[#allocation7 + $0xbc] sm:$0xf]
        %v694 = vunpack.c.l.b16 %v630
        %v695 = vunpack.c.h.b16 %v630
        %v696 = vunpack.c.l.b16 %v631
        %v697 = vunpack.c.l.b16 %v632
        %v698 = vunpack.c.h.b16 %v632
        %v699 = vunpack.c.l.b16 %v633
        %v700 = vunpack.c.l.b16 %v634
        %v701 = vunpack.c.h.b16 %v634
        %v702 = vunpack.c.l.b16 %v635
        %v703 = vunpack.c.l.b16 %v636
        %v704 = vunpack.c.h.b16 %v636
        %v705 = vunpack.c.l.b16 %v637
        %v706 = vunpack.c.l.b16 %v638
        %v707 = vunpack.c.h.b16 %v638
        %v708 = vunpack.c.l.b16 %v639
        %v709 = vunpack.c.l.b16 %v640
        %v710 = vunpack.c.h.b16 %v640
        %v711 = vunpack.c.l.b16 %v641
        %v712 = vunpack.c.l.b16 %v642
        %v713 = vunpack.c.h.b16 %v642
        %v714 = vunpack.c.l.b16 %v643
        %v715 = vunpack.c.l.b16 %v644
        %v716 = vunpack.c.h.b16 %v644
        %v717 = vunpack.c.l.b16 %v645
        %v718 = vunpack.c.l.b16 %v646
        %v719 = vunpack.c.h.b16 %v646
        %v720 = vunpack.c.l.b16 %v647
        %v721 = vunpack.c.l.b16 %v648
        %v722 = vunpack.c.h.b16 %v648
        %v723 = vunpack.c.l.b16 %v649
        %v724 = vunpack.c.l.b16 %v650
        %v725 = vunpack.c.h.b16 %v650
        %v726 = vunpack.c.l.b16 %v651
        %v727 = vunpack.c.l.b16 %v652
        %v728 = vunpack.c.h.b16 %v652
        %v729 = vunpack.c.l.b16 %v653
        %v730 = vunpack.c.l.b16 %v654
        %v731 = vunpack.c.h.b16 %v654
        %v732 = vunpack.c.l.b16 %v655
        %v733 = vunpack.c.l.b16 %v656
        %v734 = vunpack.c.h.b16 %v656
        %v735 = vunpack.c.l.b16 %v657
        %v736 = vunpack.c.l.b16 %v658
        %v737 = vunpack.c.h.b16 %v658
        %v738 = vunpack.c.l.b16 %v659
        %v739 = vunpack.c.l.b16 %v660
        %v740 = vunpack.c.h.b16 %v660
        %v741 = vunpack.c.l.b16 %v661
        %v742 = vpack.c.b16 %v697, %v694
        %v743 = vpack.c.b16 %v698, %v695
        %v744 = vpack.c.b16 %v699, %v696
        %v745 = vpack.c.b16 %v703, %v700
        %v746 = vpack.c.b16 %v704, %v701
        %v747 = vpack.c.b16 %v705, %v702
        %v748 = vpack.c.b16 %v709, %v706
        %v749 = vpack.c.b16 %v710, %v707
        %v750 = vpack.c.b16 %v711, %v708
        %v751 = vpack.c.b16 %v715, %v712
        %v752 = vpack.c.b16 %v716, %v713
        %v753 = vpack.c.b16 %v717, %v714
        %v754 = vpack.c.b16 %v721, %v718
        %v755 = vpack.c.b16 %v722, %v719
        %v756 = vpack.c.b16 %v723, %v720
        %v757 = vpack.c.b16 %v727, %v724
        %v758 = vpack.c.b16 %v728, %v725
        %v759 = vpack.c.b16 %v729, %v726
        %v760 = vpack.c.b16 %v733, %v730
        %v761 = vpack.c.b16 %v734, %v731
        %v762 = vpack.c.b16 %v735, %v732
        %v763 = vpack.c.b16 %v739, %v736
        %v764 = vpack.c.b16 %v740, %v737
        %v765 = vpack.c.b16 %v741, %v738
        %790 = vmatpush.bf16.msra.mxu0 %v763
        %791 = vmatpush.bf16.msra.mxu0 %v760
        %792 = vmatpush.bf16.msra.mxu0 %v757
        %793 = vmatpush.bf16.msra.mxu0 %v754
        %794 = vmatpush.bf16.msra.mxu0 %v751
        %795 = vmatpush.bf16.msra.mxu0 %v748
        %796 = vmatpush.bf16.msra.mxu0 %v745
        %797 = vmatpush.bf16.msra.mxu0 %v742
        %798 = vmatmul.bf16.gmra.mxu0 %v629
        %v799 = vpop.f32.mrf.mxu0
        %v800 = vadd.f32 0.0, %v799
        %v801 = vpop.f32.mrf.mxu0
        %802 = vdwg.mxu0
        %803 = vmatpush.bf16.msra.mxu0 %v764
        %804 = vmatpush.bf16.msra.mxu0 %v761
        %805 = vmatpush.bf16.msra.mxu0 %v758
        %806 = vmatpush.bf16.msra.mxu0 %v755
        %807 = vmatpush.bf16.msra.mxu0 %v752
        %808 = vmatpush.bf16.msra.mxu0 %v749
        %809 = vmatpush.bf16.msra.mxu0 %v746
        %810 = vmatpush.bf16.msra.mxu0 %v743
        %811 = vmatmul.bf16.gmra.mxu0 %v629
        %v812 = vpop.f32.mrf.mxu0
        %v813 = vadd.f32 0.0, %v812
        %v814 = vpop.f32.mrf.mxu0
        %815 = vdwg.mxu0
        %816 = vmatpush.bf16.msra.mxu0 %v765
        %817 = vmatpush.bf16.msra.mxu0 %v762
        %818 = vmatpush.bf16.msra.mxu0 %v759
        %819 = vmatpush.bf16.msra.mxu0 %v756
        %820 = vmatpush.bf16.msra.mxu0 %v753
        %821 = vmatpush.bf16.msra.mxu0 %v750
        %822 = vmatpush.bf16.msra.mxu0 %v747
        %823 = vmatpush.bf16.msra.mxu0 %v744
        %824 = vmatmul.bf16.gmra.mxu0 %v629
        %v825 = vpop.f32.mrf.mxu0
        %v826 = vadd.f32 0.0, %v825
        %v827 = vpop.f32.mrf.mxu0
        %828 = vdwg.mxu0
        %830 = vrot.lane.b32.xlu0 %v800, 96
        %v831 = vpop.permute.xlu0 %830
        %833 = vrot.lane.b32.xlu0 %v800, 64
        %v834 = vpop.permute.xlu0 %833
        %836 = vrot.lane.b32.xlu0 %v800, 32
        %v837 = vpop.permute.xlu0 %836
        %v839 = vrot.slane %v834, 4
        %vm840 = vcmask 1047556
        %v841 = vsel %vm840, %v839, %v800
        %v842 = vrot.slane %v800, 4
        %v843 = vsel %vm840, %v834, %v842
        %v845 = vunpack.c.l.s4 1983009808
        %v846 = vunpack.c.0.s8 %v845
        %v847 = vperm.slane %v841, %v846
        %v849 = vunpack.c.l.s4 1983009808
        %v850 = vunpack.c.0.s8 %v849
        %v851 = vperm.slane %v843, %v850
        %v852 = vrot.slane %v837, 4
        %v853 = vsel %vm840, %v852, %v831
        %v854 = vrot.slane %v831, 4
        %v855 = vsel %vm840, %v837, %v854
        %v857 = vunpack.c.l.s4 1983009808
        %v858 = vunpack.c.0.s8 %v857
        %v859 = vperm.slane %v853, %v858
        %v861 = vunpack.c.l.s4 1983009808
        %v862 = vunpack.c.0.s8 %v861
        %v863 = vperm.slane %v855, %v862
        %v864 = vrot.slane %v859, 4
        %v865 = vsel %vm840, %v864, %v847
        %v866 = vrot.slane %v847, 4
        %v867 = vsel %vm840, %v859, %v866
        %v869 = vunpack.c.l.s4 1934713408
        %v870 = vunpack.c.0.s8 %v869
        %v871 = vperm.slane %v865, %v870
        %v873 = vunpack.c.l.s4 1934713408
        %v874 = vunpack.c.0.s8 %v873
        %v875 = vperm.slane %v867, %v874
        %v876 = vrot.slane %v863, 4
        %v877 = vsel %vm840, %v876, %v851
        %v878 = vrot.slane %v851, 4
        %v879 = vsel %vm840, %v863, %v878
        %v881 = vunpack.c.l.s4 1934713408
        %v882 = vunpack.c.0.s8 %v881
        %v883 = vperm.slane %v877, %v882
        %v885 = vunpack.c.l.s4 1934713408
        %v886 = vunpack.c.0.s8 %v885
        %v887 = vperm.slane %v879, %v886
        %v888 = vrot.slane %v871, 4
        %v889 = vsel %vm840, 0.0, %v888
        %v890 = vrot.slane %v875, 4
        %v891 = vsel %vm840, 0.0, %v890
        %v892 = vrot.slane %v883, 4
        %v893 = vsel %vm840, 0.0, %v892
        %v894 = vrot.slane %v887, 4
        %v895 = vsel %vm840, 0.0, %v894
        %v896 = vsel %vm840, %v890, %v871
        %v898 = vunpack.c.l.s4 1983009808
        %v899 = vunpack.c.0.s8 %v898
        %v900 = vperm.slane %v896, %v899
        %v901 = vrot.slane %v891, 4
        %v902 = vsel %vm840, %v901, %v889
        %v904 = vunpack.c.l.s4 1983009808
        %v905 = vunpack.c.0.s8 %v904
        %v906 = vperm.slane %v902, %v905
        %v907 = vsel %vm840, %v894, %v883
        %v909 = vunpack.c.l.s4 1983009808
        %v910 = vunpack.c.0.s8 %v909
        %v911 = vperm.slane %v907, %v910
        %v912 = vrot.slane %v895, 4
        %v913 = vsel %vm840, %v912, %v893
        %v915 = vunpack.c.l.s4 1983009808
        %v916 = vunpack.c.0.s8 %v915
        %v917 = vperm.slane %v913, %v916
        %v918 = vrot.slane %v906, 4
        %v919 = vsel %vm840, %v918, %v900
        %v920 = vrot.slane %v900, 4
        %v921 = vsel %vm840, %v906, %v920
        %v923 = vunpack.c.l.s4 1934713408
        %v924 = vunpack.c.0.s8 %v923
        %v925 = vperm.slane %v919, %v924
        %v927 = vunpack.c.l.s4 1934713408
        %v928 = vunpack.c.0.s8 %v927
        %v929 = vperm.slane %v921, %v928
        %v930 = vrot.slane %v917, 4
        %v931 = vsel %vm840, %v930, %v911
        %v932 = vrot.slane %v911, 4
        %v933 = vsel %vm840, %v917, %v932
        %v935 = vunpack.c.l.s4 1934713408
        %v936 = vunpack.c.0.s8 %v935
        %v937 = vperm.slane %v931, %v936
        %v939 = vunpack.c.l.s4 1934713408
        %v940 = vunpack.c.0.s8 %v939
        %v941 = vperm.slane %v933, %v940
        %v942 = vrot.slane %v937, 4
        %v943 = vsel %vm840, %v942, %v925
        %v944 = vrot.slane %v925, 4
        %v945 = vsel %vm840, %v937, %v944
        %v946 = vrot.slane %v941, 4
        %v947 = vsel %vm840, %v946, %v929
        %v948 = vrot.slane %v929, 4
        %v949 = vsel %vm840, %v941, %v948
        %v950 = vpack.c.bf16 %v943, %v943
        %v951 = vpack.c.bf16 %v945, %v945
        %v952 = vpack.c.bf16 %v947, %v947
        %v953 = vpack.c.bf16 %v949, %v949
        %955 = vrot.lane.b32.xlu0 %v813, 96
        %v956 = vpop.permute.xlu0 %955
        %958 = vrot.lane.b32.xlu0 %v813, 64
        %v959 = vpop.permute.xlu0 %958
        %961 = vrot.lane.b32.xlu0 %v813, 32
        %v962 = vpop.permute.xlu0 %961
        %v964 = vrot.slane %v959, 4
        %v965 = vsel %vm840, %v964, %v813
        %v966 = vrot.slane %v813, 4
        %v967 = vsel %vm840, %v959, %v966
        %v969 = vunpack.c.l.s4 1983009808
        %v970 = vunpack.c.0.s8 %v969
        %v971 = vperm.slane %v965, %v970
        %v973 = vunpack.c.l.s4 1983009808
        %v974 = vunpack.c.0.s8 %v973
        %v975 = vperm.slane %v967, %v974
        %v976 = vrot.slane %v962, 4
        %v977 = vsel %vm840, %v976, %v956
        %v978 = vrot.slane %v956, 4
        %v979 = vsel %vm840, %v962, %v978
        %v981 = vunpack.c.l.s4 1983009808
        %v982 = vunpack.c.0.s8 %v981
        %v983 = vperm.slane %v977, %v982
        %v985 = vunpack.c.l.s4 1983009808
        %v986 = vunpack.c.0.s8 %v985
        %v987 = vperm.slane %v979, %v986
        %v988 = vrot.slane %v983, 4
        %v989 = vsel %vm840, %v988, %v971
        %v990 = vrot.slane %v971, 4
        %v991 = vsel %vm840, %v983, %v990
        %v993 = vunpack.c.l.s4 1934713408
        %v994 = vunpack.c.0.s8 %v993
        %v995 = vperm.slane %v989, %v994
        %v997 = vunpack.c.l.s4 1934713408
        %v998 = vunpack.c.0.s8 %v997
        %v999 = vperm.slane %v991, %v998
        %v1000 = vrot.slane %v987, 4
        %v1001 = vsel %vm840, %v1000, %v975
        %v1002 = vrot.slane %v975, 4
        %v1003 = vsel %vm840, %v987, %v1002
        %v1005 = vunpack.c.l.s4 1934713408
        %v1006 = vunpack.c.0.s8 %v1005
        %v1007 = vperm.slane %v1001, %v1006
        %v1009 = vunpack.c.l.s4 1934713408
        %v1010 = vunpack.c.0.s8 %v1009
        %v1011 = vperm.slane %v1003, %v1010
        %v1012 = vrot.slane %v995, 4
        %v1013 = vsel %vm840, 0.0, %v1012
        %v1014 = vrot.slane %v999, 4
        %v1015 = vsel %vm840, 0.0, %v1014
        %v1016 = vrot.slane %v1007, 4
        %v1017 = vsel %vm840, 0.0, %v1016
        %v1018 = vrot.slane %v1011, 4
        %v1019 = vsel %vm840, 0.0, %v1018
        %v1020 = vsel %vm840, %v1014, %v995
        %v1022 = vunpack.c.l.s4 1983009808
        %v1023 = vunpack.c.0.s8 %v1022
        %v1024 = vperm.slane %v1020, %v1023
        %v1025 = vrot.slane %v1015, 4
        %v1026 = vsel %vm840, %v1025, %v1013
        %v1028 = vunpack.c.l.s4 1983009808
        %v1029 = vunpack.c.0.s8 %v1028
        %v1030 = vperm.slane %v1026, %v1029
        %v1031 = vsel %vm840, %v1018, %v1007
        %v1033 = vunpack.c.l.s4 1983009808
        %v1034 = vunpack.c.0.s8 %v1033
        %v1035 = vperm.slane %v1031, %v1034
        %v1036 = vrot.slane %v1019, 4
        %v1037 = vsel %vm840, %v1036, %v1017
        %v1039 = vunpack.c.l.s4 1983009808
        %v1040 = vunpack.c.0.s8 %v1039
        %v1041 = vperm.slane %v1037, %v1040
        %v1042 = vrot.slane %v1030, 4
        %v1043 = vsel %vm840, %v1042, %v1024
        %v1044 = vrot.slane %v1024, 4
        %v1045 = vsel %vm840, %v1030, %v1044
        %v1047 = vunpack.c.l.s4 1934713408
        %v1048 = vunpack.c.0.s8 %v1047
        %v1049 = vperm.slane %v1043, %v1048
        %v1051 = vunpack.c.l.s4 1934713408
        %v1052 = vunpack.c.0.s8 %v1051
        %v1053 = vperm.slane %v1045, %v1052
        %v1054 = vrot.slane %v1041, 4
        %v1055 = vsel %vm840, %v1054, %v1035
        %v1056 = vrot.slane %v1035, 4
        %v1057 = vsel %vm840, %v1041, %v1056
        %v1059 = vunpack.c.l.s4 1934713408
        %v1060 = vunpack.c.0.s8 %v1059
        %v1061 = vperm.slane %v1055, %v1060
        %v1063 = vunpack.c.l.s4 1934713408
        %v1064 = vunpack.c.0.s8 %v1063
        %v1065 = vperm.slane %v1057, %v1064
        %v1066 = vrot.slane %v1061, 4
        %v1067 = vsel %vm840, %v1066, %v1049
        %v1068 = vrot.slane %v1049, 4
        %v1069 = vsel %vm840, %v1061, %v1068
        %v1070 = vrot.slane %v1065, 4
        %v1071 = vsel %vm840, %v1070, %v1053
        %v1072 = vrot.slane %v1053, 4
        %v1073 = vsel %vm840, %v1065, %v1072
        %v1074 = vpack.c.bf16 %v1067, %v1067
        %v1075 = vpack.c.bf16 %v1069, %v1069
        %v1076 = vpack.c.bf16 %v1071, %v1071
        %v1077 = vpack.c.bf16 %v1073, %v1073
        %1079 = vrot.lane.b32.xlu0 %v826, 96
        %v1080 = vpop.permute.xlu0 %1079
        %1082 = vrot.lane.b32.xlu0 %v826, 64
        %v1083 = vpop.permute.xlu0 %1082
        %1085 = vrot.lane.b32.xlu0 %v826, 32
        %v1086 = vpop.permute.xlu0 %1085
        %v1088 = vrot.slane %v1083, 4
        %v1089 = vsel %vm840, %v1088, %v826
        %v1090 = vrot.slane %v826, 4
        %v1091 = vsel %vm840, %v1083, %v1090
        %v1093 = vunpack.c.l.s4 1983009808
        %v1094 = vunpack.c.0.s8 %v1093
        %v1095 = vperm.slane %v1089, %v1094
        %v1097 = vunpack.c.l.s4 1983009808
        %v1098 = vunpack.c.0.s8 %v1097
        %v1099 = vperm.slane %v1091, %v1098
        %v1100 = vrot.slane %v1086, 4
        %v1101 = vsel %vm840, %v1100, %v1080
        %v1102 = vrot.slane %v1080, 4
        %v1103 = vsel %vm840, %v1086, %v1102
        %v1105 = vunpack.c.l.s4 1983009808
        %v1106 = vunpack.c.0.s8 %v1105
        %v1107 = vperm.slane %v1101, %v1106
        %v1109 = vunpack.c.l.s4 1983009808
        %v1110 = vunpack.c.0.s8 %v1109
        %v1111 = vperm.slane %v1103, %v1110
        %v1112 = vrot.slane %v1107, 4
        %v1113 = vsel %vm840, %v1112, %v1095
        %v1114 = vrot.slane %v1095, 4
        %v1115 = vsel %vm840, %v1107, %v1114
        %v1117 = vunpack.c.l.s4 1934713408
        %v1118 = vunpack.c.0.s8 %v1117
        %v1119 = vperm.slane %v1113, %v1118
        %v1121 = vunpack.c.l.s4 1934713408
        %v1122 = vunpack.c.0.s8 %v1121
        %v1123 = vperm.slane %v1115, %v1122
        %v1124 = vrot.slane %v1111, 4
        %v1125 = vsel %vm840, %v1124, %v1099
        %v1126 = vrot.slane %v1099, 4
        %v1127 = vsel %vm840, %v1111, %v1126
        %v1129 = vunpack.c.l.s4 1934713408
        %v1130 = vunpack.c.0.s8 %v1129
        %v1131 = vperm.slane %v1125, %v1130
        %v1133 = vunpack.c.l.s4 1934713408
        %v1134 = vunpack.c.0.s8 %v1133
        %v1135 = vperm.slane %v1127, %v1134
        %v1136 = vrot.slane %v1119, 4
        %v1137 = vsel %vm840, 0.0, %v1136
        %v1138 = vrot.slane %v1123, 4
        %v1139 = vsel %vm840, 0.0, %v1138
        %v1140 = vrot.slane %v1131, 4
        %v1141 = vsel %vm840, 0.0, %v1140
        %v1142 = vrot.slane %v1135, 4
        %v1143 = vsel %vm840, 0.0, %v1142
        %v1144 = vsel %vm840, %v1138, %v1119
        %v1146 = vunpack.c.l.s4 1983009808
        %v1147 = vunpack.c.0.s8 %v1146
        %v1148 = vperm.slane %v1144, %v1147
        %v1149 = vrot.slane %v1139, 4
        %v1150 = vsel %vm840, %v1149, %v1137
        %v1152 = vunpack.c.l.s4 1983009808
        %v1153 = vunpack.c.0.s8 %v1152
        %v1154 = vperm.slane %v1150, %v1153
        %v1155 = vsel %vm840, %v1142, %v1131
        %v1157 = vunpack.c.l.s4 1983009808
        %v1158 = vunpack.c.0.s8 %v1157
        %v1159 = vperm.slane %v1155, %v1158
        %v1160 = vrot.slane %v1143, 4
        %v1161 = vsel %vm840, %v1160, %v1141
        %v1163 = vunpack.c.l.s4 1983009808
        %v1164 = vunpack.c.0.s8 %v1163
        %v1165 = vperm.slane %v1161, %v1164
        %v1166 = vrot.slane %v1154, 4
        %v1167 = vsel %vm840, %v1166, %v1148
        %v1168 = vrot.slane %v1148, 4
        %v1169 = vsel %vm840, %v1154, %v1168
        %v1171 = vunpack.c.l.s4 1934713408
        %v1172 = vunpack.c.0.s8 %v1171
        %v1173 = vperm.slane %v1167, %v1172
        %v1175 = vunpack.c.l.s4 1934713408
        %v1176 = vunpack.c.0.s8 %v1175
        %v1177 = vperm.slane %v1169, %v1176
        %v1178 = vrot.slane %v1165, 4
        %v1179 = vsel %vm840, %v1178, %v1159
        %v1180 = vrot.slane %v1159, 4
        %v1181 = vsel %vm840, %v1165, %v1180
        %v1183 = vunpack.c.l.s4 1934713408
        %v1184 = vunpack.c.0.s8 %v1183
        %v1185 = vperm.slane %v1179, %v1184
        %v1187 = vunpack.c.l.s4 1934713408
        %v1188 = vunpack.c.0.s8 %v1187
        %v1189 = vperm.slane %v1181, %v1188
        %v1190 = vrot.slane %v1185, 4
        %v1191 = vsel %vm840, %v1190, %v1173
        %v1192 = vrot.slane %v1173, 4
        %v1193 = vsel %vm840, %v1185, %v1192
        %v1194 = vrot.slane %v1189, 4
        %v1195 = vsel %vm840, %v1194, %v1177
        %v1196 = vrot.slane %v1177, 4
        %v1197 = vsel %vm840, %v1189, %v1196
        %v1198 = vpack.c.bf16 %v1191, %v1191
        %v1199 = vpack.c.bf16 %v1193, %v1193
        %v1200 = vpack.c.bf16 %v1195, %v1195
        %v1201 = vpack.c.bf16 %v1197, %v1197
        %vm1202 = vcmask 261120
        %v1204 = vsel %vm1202, %v950, 0
        %v1207 = vsel %vm1202, %v1074, 0
        %1209 = vmatpush.bf16.xpose.msra.mxu0 0
        %1210 = vmatpush.bf16.xpose.msra.mxu0 0
        %1211 = vmatpush.bf16.xpose.msra.mxu0 0
        %1212 = vmatpush.bf16.xpose.msra.mxu0 0
        %1213 = vmatpush.bf16.xpose.msra.mxu0 0
        %1214 = vmatpush.bf16.xpose.msra.mxu0 0
        %1215 = vmatpush.bf16.xpose.msra.mxu0 0
        %1216 = vmatpush.bf16.xpose.msra.mxu0 %v1207
        %1217 = vmatmul.bf16.gmra.mxu0 %v1204
        %v1218 = vpop.f32.mrf.mxu0
        %v1219 = vadd.f32 0.0, %v1218
        %v1220 = vpop.f32.mrf.mxu0
        %1221 = vdwg.mxu0
        %v1223 = vsel %vm1202, %v951, 0
        %v1226 = vsel %vm1202, %v1075, 0
        %1228 = vmatpush.bf16.xpose.msra.mxu0 0
        %1229 = vmatpush.bf16.xpose.msra.mxu0 0
        %1230 = vmatpush.bf16.xpose.msra.mxu0 0
        %1231 = vmatpush.bf16.xpose.msra.mxu0 0
        %1232 = vmatpush.bf16.xpose.msra.mxu0 0
        %1233 = vmatpush.bf16.xpose.msra.mxu0 0
        %1234 = vmatpush.bf16.xpose.msra.mxu0 0
        %1235 = vmatpush.bf16.xpose.msra.mxu0 %v1226
        %1236 = vmatmul.bf16.gmra.mxu0 %v1223
        %v1237 = vpop.f32.mrf.mxu0
        %v1238 = vadd.f32 0.0, %v1237
        %v1239 = vpop.f32.mrf.mxu0
        %1240 = vdwg.mxu0
        %v1242 = vsel %vm1202, %v952, 0
        %v1245 = vsel %vm1202, %v1076, 0
        %1247 = vmatpush.bf16.xpose.msra.mxu0 0
        %1248 = vmatpush.bf16.xpose.msra.mxu0 0
        %1249 = vmatpush.bf16.xpose.msra.mxu0 0
        %1250 = vmatpush.bf16.xpose.msra.mxu0 0
        %1251 = vmatpush.bf16.xpose.msra.mxu0 0
        %1252 = vmatpush.bf16.xpose.msra.mxu0 0
        %1253 = vmatpush.bf16.xpose.msra.mxu0 0
        %1254 = vmatpush.bf16.xpose.msra.mxu0 %v1245
        %1255 = vmatmul.bf16.gmra.mxu0 %v1242
        %v1256 = vpop.f32.mrf.mxu0
        %v1257 = vadd.f32 0.0, %v1256
        %v1258 = vpop.f32.mrf.mxu0
        %1259 = vdwg.mxu0
        %v1261 = vsel %vm1202, %v953, 0
        %v1264 = vsel %vm1202, %v1077, 0
        %1266 = vmatpush.bf16.xpose.msra.mxu0 0
        %1267 = vmatpush.bf16.xpose.msra.mxu0 0
        %1268 = vmatpush.bf16.xpose.msra.mxu0 0
        %1269 = vmatpush.bf16.xpose.msra.mxu0 0
        %1270 = vmatpush.bf16.xpose.msra.mxu0 0
        %1271 = vmatpush.bf16.xpose.msra.mxu0 0
        %1272 = vmatpush.bf16.xpose.msra.mxu0 0
        %1273 = vmatpush.bf16.xpose.msra.mxu0 %v1264
        %1274 = vmatmul.bf16.gmra.mxu0 %v1261
        %v1275 = vpop.f32.mrf.mxu0
        %v1276 = vadd.f32 0.0, %v1275
        %v1277 = vpop.f32.mrf.mxu0
        %1278 = vdwg.mxu0
        %v1279 = vsel %vm596, 1, 0
        %vm1280 = vcmp.eq.s32.totalorder %v1279, 1
        %v1281 = vsel %vm1280, %v1219, -1e+30
        %v1282 = vsel %vm1280, %v1238, -1e+30
        %v1283 = vsel %vm1280, %v1257, -1e+30
        %v1284 = vsel %vm1280, %v1276, -1e+30
        %vm1285 = vcmask 64512
        %v1286 = vsel %vm1285, %v1281, -inf
        %1287 = vmax.xlane.f32.xlu0 %v1286
        %v1288 = vpop.xlane.xlu0 %1287
        %v1289 = vsel %vm1285, %v1282, -inf
        %1290 = vmax.xlane.f32.xlu0 %v1289
        %v1291 = vpop.xlane.xlu0 %1290
        %v1292 = vsel %vm1285, %v1283, -inf
        %1293 = vmax.xlane.f32.xlu0 %v1292
        %v1294 = vpop.xlane.xlu0 %1293
        %v1295 = vsel %vm1285, %v1284, -inf
        %1296 = vmax.xlane.f32.xlu0 %v1295
        %v1297 = vpop.xlane.xlu0 %1296
        %v1298 = vsub.f32 %v1281, %v1288
        %v1299 = vsub.f32 %v1282, %v1291
        %v1300 = vsub.f32 %v1283, %v1294
        %v1301 = vsub.f32 %v1284, %v1297
        %v1302 = vmul.f32 %v1298, 1.442695
        %v1303 = vpow.pop %v1302
        %v1304 = vmul.f32 %v1299, 1.442695
        %v1305 = vpow.pop %v1304
        %v1306 = vmul.f32 %v1300, 1.442695
        %v1307 = vpow.pop %v1306
        %v1308 = vmul.f32 %v1301, 1.442695
        %v1309 = vpow.pop %v1308
        %v1310 = vsel %vm1285, %v1303, 0.0
        %1311 = vadd.xlane.f32.xlu0 %v1310
        %v1312 = vpop.xlane.xlu0 %1311
        %v1313 = vsel %vm1285, %v1305, 0.0
        %1314 = vadd.xlane.f32.xlu0 %v1313
        %v1315 = vpop.xlane.xlu0 %1314
        %v1316 = vsel %vm1285, %v1307, 0.0
        %1317 = vadd.xlane.f32.xlu0 %v1316
        %v1318 = vpop.xlane.xlu0 %1317
        %v1319 = vsel %vm1285, %v1309, 0.0
        %1320 = vadd.xlane.f32.xlu0 %v1319
        %v1321 = vpop.xlane.xlu0 %1320
        %v1322 = vrcp.pop %v1312
        %v1323 = vrcp.pop %v1315
        %v1324 = vrcp.pop %v1318
        %v1325 = vrcp.pop %v1321
        %v1326 = vmul.f32 %v1303, %v1322
        %v1327 = vmul.f32 %v1305, %v1323
        %v1328 = vmul.f32 %v1307, %v1324
        %v1329 = vmul.f32 %v1309, %v1325
        %v1330 = vpack.c.bf16 %v1326, %v1326
        %v1331 = vpack.c.bf16 %v1327, %v1327
        %v1332 = vpack.c.bf16 %v1328, %v1328
        %v1333 = vpack.c.bf16 %v1329, %v1329
        %v1335 = vsel %vm1285, %v1330, 0
        %vm1337 = vcmask 1043456
        %v1339 = vsel %vm1337, %v1198, 0
        %1341 = vmatpush.bf16.msra.mxu0 0
        %1342 = vmatpush.bf16.msra.mxu0 0
        %1343 = vmatpush.bf16.msra.mxu0 0
        %1344 = vmatpush.bf16.msra.mxu0 0
        %1345 = vmatpush.bf16.msra.mxu0 0
        %1346 = vmatpush.bf16.msra.mxu0 0
        %1347 = vmatpush.bf16.msra.mxu0 0
        %1348 = vmatpush.bf16.msra.mxu0 %v1339
        %1349 = vmatmul.bf16.gmra.mxu0 %v1335
        %v1350 = vpop.f32.mrf.mxu0
        %v1351 = vadd.f32 0.0, %v1350
        %v1352 = vpop.f32.mrf.mxu0
        %1353 = vdwg.mxu0
        %v1355 = vsel %vm1285, %v1331, 0
        %v1358 = vsel %vm1337, %v1199, 0
        %1360 = vmatpush.bf16.msra.mxu0 0
        %1361 = vmatpush.bf16.msra.mxu0 0
        %1362 = vmatpush.bf16.msra.mxu0 0
        %1363 = vmatpush.bf16.msra.mxu0 0
        %1364 = vmatpush.bf16.msra.mxu0 0
        %1365 = vmatpush.bf16.msra.mxu0 0
        %1366 = vmatpush.bf16.msra.mxu0 0
        %1367 = vmatpush.bf16.msra.mxu0 %v1358
        %1368 = vmatmul.bf16.gmra.mxu0 %v1355
        %v1369 = vpop.f32.mrf.mxu0
        %v1370 = vadd.f32 0.0, %v1369
        %v1371 = vpop.f32.mrf.mxu0
        %1372 = vdwg.mxu0
        %v1374 = vsel %vm1285, %v1332, 0
        %v1377 = vsel %vm1337, %v1200, 0
        %1379 = vmatpush.bf16.msra.mxu0 0
        %1380 = vmatpush.bf16.msra.mxu0 0
        %1381 = vmatpush.bf16.msra.mxu0 0
        %1382 = vmatpush.bf16.msra.mxu0 0
        %1383 = vmatpush.bf16.msra.mxu0 0
        %1384 = vmatpush.bf16.msra.mxu0 0
        %1385 = vmatpush.bf16.msra.mxu0 0
        %1386 = vmatpush.bf16.msra.mxu0 %v1377
        %1387 = vmatmul.bf16.gmra.mxu0 %v1374
        %v1388 = vpop.f32.mrf.mxu0
        %v1389 = vadd.f32 0.0, %v1388
        %v1390 = vpop.f32.mrf.mxu0
        %1391 = vdwg.mxu0
        %v1393 = vsel %vm1285, %v1333, 0
        %v1396 = vsel %vm1337, %v1201, 0
        %1398 = vmatpush.bf16.msra.mxu0 0
        %1399 = vmatpush.bf16.msra.mxu0 0
        %1400 = vmatpush.bf16.msra.mxu0 0
        %1401 = vmatpush.bf16.msra.mxu0 0
        %1402 = vmatpush.bf16.msra.mxu0 0
        %1403 = vmatpush.bf16.msra.mxu0 0
        %1404 = vmatpush.bf16.msra.mxu0 0
        %1405 = vmatpush.bf16.msra.mxu0 %v1396
        %1406 = vmatmul.bf16.gmra.mxu0 %v1393
        %v1407 = vpop.f32.mrf.mxu0
        %v1408 = vadd.f32 0.0, %v1407
        %v1409 = vpop.f32.mrf.mxu0
        %1410 = vdwg.mxu0
        %v1411 = vrot.slane %v1389, 4
        %v1412 = vsel %vm840, %v1411, %v1351
        %v1413 = vrot.slane %v1351, 4
        %v1414 = vsel %vm840, %v1389, %v1413
        %v1416 = vunpack.c.l.s4 1983009808
        %v1417 = vunpack.c.0.s8 %v1416
        %v1418 = vperm.slane %v1412, %v1417
        %v1420 = vunpack.c.l.s4 1983009808
        %v1421 = vunpack.c.0.s8 %v1420
        %v1422 = vperm.slane %v1414, %v1421
        %v1423 = vrot.slane %v1408, 4
        %v1424 = vsel %vm840, %v1423, %v1370
        %v1425 = vrot.slane %v1370, 4
        %v1426 = vsel %vm840, %v1408, %v1425
        %v1428 = vunpack.c.l.s4 1983009808
        %v1429 = vunpack.c.0.s8 %v1428
        %v1430 = vperm.slane %v1424, %v1429
        %v1432 = vunpack.c.l.s4 1983009808
        %v1433 = vunpack.c.0.s8 %v1432
        %v1434 = vperm.slane %v1426, %v1433
        %v1435 = vrot.slane %v1430, 4
        %v1436 = vsel %vm840, %v1435, %v1418
        %v1437 = vrot.slane %v1418, 4
        %v1438 = vsel %vm840, %v1430, %v1437
        %v1440 = vunpack.c.l.s4 1934713408
        %v1441 = vunpack.c.0.s8 %v1440
        %v1442 = vperm.slane %v1436, %v1441
        %v1444 = vunpack.c.l.s4 1934713408
        %v1445 = vunpack.c.0.s8 %v1444
        %v1446 = vperm.slane %v1438, %v1445
        %v1447 = vrot.slane %v1434, 4
        %v1448 = vsel %vm840, %v1447, %v1422
        %v1449 = vrot.slane %v1422, 4
        %v1450 = vsel %vm840, %v1434, %v1449
        %v1452 = vunpack.c.l.s4 1934713408
        %v1453 = vunpack.c.0.s8 %v1452
        %v1454 = vperm.slane %v1448, %v1453
        %v1456 = vunpack.c.l.s4 1934713408
        %v1457 = vunpack.c.0.s8 %v1456
        %v1458 = vperm.slane %v1450, %v1457
        %v1459 = vrot.slane %v1442, 4
        %v1460 = vsel %vm840, 0.0, %v1459
        %v1461 = vrot.slane %v1446, 4
        %v1462 = vsel %vm840, 0.0, %v1461
        %v1463 = vrot.slane %v1454, 4
        %v1464 = vsel %vm840, 0.0, %v1463
        %v1465 = vrot.slane %v1458, 4
        %v1466 = vsel %vm840, 0.0, %v1465
        %v1467 = vsel %vm840, %v1461, %v1442
        %v1469 = vunpack.c.l.s4 1983009808
        %v1470 = vunpack.c.0.s8 %v1469
        %v1471 = vperm.slane %v1467, %v1470
        %v1472 = vrot.slane %v1462, 4
        %v1473 = vsel %vm840, %v1472, %v1460
        %v1475 = vunpack.c.l.s4 1983009808
        %v1476 = vunpack.c.0.s8 %v1475
        %v1477 = vperm.slane %v1473, %v1476
        %v1478 = vsel %vm840, %v1465, %v1454
        %v1480 = vunpack.c.l.s4 1983009808
        %v1481 = vunpack.c.0.s8 %v1480
        %v1482 = vperm.slane %v1478, %v1481
        %v1483 = vrot.slane %v1466, 4
        %v1484 = vsel %vm840, %v1483, %v1464
        %v1486 = vunpack.c.l.s4 1983009808
        %v1487 = vunpack.c.0.s8 %v1486
        %v1488 = vperm.slane %v1484, %v1487
        %v1489 = vrot.slane %v1477, 4
        %v1490 = vsel %vm840, %v1489, %v1471
        %v1491 = vrot.slane %v1471, 4
        %v1492 = vsel %vm840, %v1477, %v1491
        %v1494 = vunpack.c.l.s4 1934713408
        %v1495 = vunpack.c.0.s8 %v1494
        %v1496 = vperm.slane %v1490, %v1495
        %v1498 = vunpack.c.l.s4 1934713408
        %v1499 = vunpack.c.0.s8 %v1498
        %v1500 = vperm.slane %v1492, %v1499
        %v1501 = vrot.slane %v1488, 4
        %v1502 = vsel %vm840, %v1501, %v1482
        %v1503 = vrot.slane %v1482, 4
        %v1504 = vsel %vm840, %v1488, %v1503
        %v1506 = vunpack.c.l.s4 1934713408
        %v1507 = vunpack.c.0.s8 %v1506
        %v1508 = vperm.slane %v1502, %v1507
        %v1510 = vunpack.c.l.s4 1934713408
        %v1511 = vunpack.c.0.s8 %v1510
        %v1512 = vperm.slane %v1504, %v1511
        %v1513 = vrot.slane %v1508, 4
        %v1514 = vsel %vm840, %v1513, %v1496
        %v1515 = vrot.slane %v1496, 4
        %v1516 = vsel %vm840, %v1508, %v1515
        %v1517 = vrot.slane %v1512, 4
        %v1518 = vsel %vm840, %v1517, %v1500
        %v1519 = vrot.slane %v1500, 4
        %v1520 = vsel %vm840, %v1512, %v1519
        %1522 = vrot.lane.b32.xlu0 %v1516, 32
        %v1523 = vpop.permute.xlu0 %1522
        %1526 = vrot.lane.b32.xlu0 %v1518, 64
        %v1527 = vpop.permute.xlu0 %1526
        %1530 = vrot.lane.b32.xlu0 %v1520, 96
        %v1531 = vpop.permute.xlu0 %1530
        %v1533 = vsel %vm1202, %v1514, %v1523
        %vm1534 = vcmask 523264
        %v1535 = vsel %vm1534, %v1533, %v1527
        %vm1536 = vcmask 785408
        %v1537 = vsel %vm1536, %v1535, %v1531
        %v1538 = vld [vmem:[#allocation8] sm:$0xf]
        %v1539 = vld [vmem:[#allocation8 + $0x4] sm:$0xf]
        %v1540 = vld [vmem:[#allocation8 + $0x8] sm:$0xf]
        %v1541 = vld [vmem:[#allocation8 + $0xc] sm:$0xf]
        %v1542 = vld [vmem:[#allocation8 + $0x10] sm:$0xf]
        %v1543 = vld [vmem:[#allocation8 + $0x14] sm:$0xf]
        %v1544 = vld [vmem:[#allocation8 + $0x18] sm:$0xf]
        %v1545 = vld [vmem:[#allocation8 + $0x1c] sm:$0xf]
        %v1546 = vld [vmem:[#allocation8 + $0x20] sm:$0xf]
        %v1547 = vld [vmem:[#allocation8 + $0x24] sm:$0xf]
        %v1548 = vld [vmem:[#allocation8 + $0x28] sm:$0xf]
        %v1549 = vld [vmem:[#allocation8 + $0x2c] sm:$0xf]
        %v1550 = vld [vmem:[#allocation8 + $0x30] sm:$0xf]
        %v1551 = vld [vmem:[#allocation8 + $0x34] sm:$0xf]
        %v1552 = vld [vmem:[#allocation8 + $0x38] sm:$0xf]
        %v1553 = vld [vmem:[#allocation8 + $0x3c] sm:$0xf]
        %v1554 = vpack.c.bf16 %v1537, %v1537
        %v1571 = vunpack.c.l.b16 %v1538
        %v1572 = vunpack.c.l.b16 %v1539
        %v1573 = vunpack.c.l.b16 %v1540
        %v1574 = vunpack.c.l.b16 %v1541
        %v1575 = vunpack.c.l.b16 %v1542
        %v1576 = vunpack.c.l.b16 %v1543
        %v1577 = vunpack.c.l.b16 %v1544
        %v1578 = vunpack.c.l.b16 %v1545
        %v1579 = vunpack.c.l.b16 %v1546
        %v1580 = vunpack.c.l.b16 %v1547
        %v1581 = vunpack.c.l.b16 %v1548
        %v1582 = vunpack.c.l.b16 %v1549
        %v1583 = vunpack.c.l.b16 %v1550
        %v1584 = vunpack.c.l.b16 %v1551
        %v1585 = vunpack.c.l.b16 %v1552
        %v1586 = vunpack.c.l.b16 %v1553
        %v1587 = vpack.c.b16 %v1572, %v1571
        %v1588 = vpack.c.b16 %v1574, %v1573
        %v1589 = vpack.c.b16 %v1576, %v1575
        %v1590 = vpack.c.b16 %v1578, %v1577
        %v1591 = vpack.c.b16 %v1580, %v1579
        %v1592 = vpack.c.b16 %v1582, %v1581
        %v1593 = vpack.c.b16 %v1584, %v1583
        %v1594 = vpack.c.b16 %v1586, %v1585
        %1603 = vmatpush.bf16.msra.mxu0 %v1594
        %1604 = vmatpush.bf16.msra.mxu0 %v1593
        %1605 = vmatpush.bf16.msra.mxu0 %v1592
        %1606 = vmatpush.bf16.msra.mxu0 %v1591
        %1607 = vmatpush.bf16.msra.mxu0 %v1590
        %1608 = vmatpush.bf16.msra.mxu0 %v1589
        %1609 = vmatpush.bf16.msra.mxu0 %v1588
        %1610 = vmatpush.bf16.msra.mxu0 %v1587
        %1611 = vmatmul.bf16.gmra.mxu0 %v1554
        %v1612 = vpop.f32.mrf.mxu0
        %v1613 = vadd.f32 0.0, %v1612
        %v1614 = vpop.f32.mrf.mxu0
        %1615 = vdwg.mxu0
        %v1616 = vadd.f32 %v589, %v1613
        %v1617 = vld [vmem:[%s3] sm:$0x1]
        %1618 = vadd.xlane.f32.xlu0 %v1616
        %v1619 = vpop.xlane.xlu0 %1618
        %v1620 = vmul.f32 %v1619, %v606
        %v1621 = vsub.f32 %v1616, %v1620
        %v1622 = vmul.f32 %v1621, %v1621
        %1623 = vadd.xlane.f32.xlu0 %v1622
        %v1624 = vpop.xlane.xlu0 %1623
        %v1625 = vmul.f32 %v1624, %v606
        %v1626 = vadd.f32 %v1625, 1e-05
        %v1627 = vrsqrt.pop %v1626
        %v1628 = vmul.f32 %v1627, %v1626
        %v1629 = vmul.f32 %v1628, %v1627
        %v1630 = vmul.f32 0.5, %v1629
        %v1631 = vsub.f32 1.5, %v1630
        %v1632 = vmul.f32 %v1627, %v1631
        %vm1633 = vweird.f32 %v1626
        %vm1634 = vweird.f32 %v1627
        %vm1635 = vmor %vm1633, %vm1634
        %v1636 = vsel %vm1635, %v1627, %v1632
        %v1637 = vmul.f32 %v1621, %v1636
        %v1639 = vperm.slane %v1617, 0
        %v1641 = vmul.f32 %v1637, %v1639
        %v1642 = vpack.c.bf16 %v1641, %v1641
        %v1643 = vld [vmem:[#allocation10] sm:$0xf]
        %v1644 = vld [vmem:[#allocation10 + $0x4] sm:$0xf]
        %v1645 = vld [vmem:[#allocation10 + $0x8] sm:$0xf]
        %v1646 = vld [vmem:[#allocation10 + $0xc] sm:$0xf]
        %v1647 = vld [vmem:[#allocation10 + $0x10] sm:$0xf]
        %v1648 = vld [vmem:[#allocation10 + $0x14] sm:$0xf]
        %v1649 = vld [vmem:[#allocation10 + $0x18] sm:$0xf]
        %v1650 = vld [vmem:[#allocation10 + $0x1c] sm:$0xf]
        %v1651 = vld [vmem:[#allocation10 + $0x20] sm:$0xf]
        %v1652 = vld [vmem:[#allocation10 + $0x24] sm:$0xf]
        %v1653 = vld [vmem:[#allocation10 + $0x28] sm:$0xf]
        %v1654 = vld [vmem:[#allocation10 + $0x2c] sm:$0xf]
        %v1655 = vld [vmem:[#allocation10 + $0x30] sm:$0xf]
        %v1656 = vld [vmem:[#allocation10 + $0x34] sm:$0xf]
        %v1657 = vld [vmem:[#allocation10 + $0x38] sm:$0xf]
        %v1658 = vld [vmem:[#allocation10 + $0x3c] sm:$0xf]
        %v1675 = vunpack.c.l.b16 %v1643
        %v1676 = vunpack.c.l.b16 %v1644
        %v1677 = vunpack.c.l.b16 %v1645
        %v1678 = vunpack.c.l.b16 %v1646
        %v1679 = vunpack.c.l.b16 %v1647
        %v1680 = vunpack.c.l.b16 %v1648
        %v1681 = vunpack.c.l.b16 %v1649
        %v1682 = vunpack.c.l.b16 %v1650
        %v1683 = vunpack.c.l.b16 %v1651
        %v1684 = vunpack.c.l.b16 %v1652
        %v1685 = vunpack.c.l.b16 %v1653
        %v1686 = vunpack.c.l.b16 %v1654
        %v1687 = vunpack.c.l.b16 %v1655
        %v1688 = vunpack.c.l.b16 %v1656
        %v1689 = vunpack.c.l.b16 %v1657
        %v1690 = vunpack.c.l.b16 %v1658
        %v1691 = vpack.c.b16 %v1676, %v1675
        %v1692 = vpack.c.b16 %v1678, %v1677
        %v1693 = vpack.c.b16 %v1680, %v1679
        %v1694 = vpack.c.b16 %v1682, %v1681
        %v1695 = vpack.c.b16 %v1684, %v1683
        %v1696 = vpack.c.b16 %v1686, %v1685
        %v1697 = vpack.c.b16 %v1688, %v1687
        %v1698 = vpack.c.b16 %v1690, %v1689
        %1707 = vmatpush.bf16.msra.mxu0 %v1698
        %1708 = vmatpush.bf16.msra.mxu0 %v1697
        %1709 = vmatpush.bf16.msra.mxu0 %v1696
        %1710 = vmatpush.bf16.msra.mxu0 %v1695
        %1711 = vmatpush.bf16.msra.mxu0 %v1694
        %1712 = vmatpush.bf16.msra.mxu0 %v1693
        %1713 = vmatpush.bf16.msra.mxu0 %v1692
        %1714 = vmatpush.bf16.msra.mxu0 %v1691
        %1715 = vmatmul.bf16.gmra.mxu0 %v1642
        %v1716 = vpop.f32.mrf.mxu0
        %v1717 = vadd.f32 0.0, %v1716
        %v1718 = vpop.f32.mrf.mxu0
        %1719 = vdwg.mxu0
        %v1720 = vpack.c.bf16 %v591, %v590
        %v1721 = vld [vmem:[#allocation11] sm:$0xff]
        %v1722 = vld [vmem:[#allocation11 + $0x8] sm:$0xff]
        %v1723 = vld [vmem:[#allocation11 + $0x10] sm:$0xff]
        %v1724 = vld [vmem:[#allocation11 + $0x18] sm:$0xff]
        %v1725 = vld [vmem:[#allocation11 + $0x20] sm:$0xff]
        %v1726 = vld [vmem:[#allocation11 + $0x28] sm:$0xff]
        %v1727 = vld [vmem:[#allocation11 + $0x30] sm:$0xff]
        %v1728 = vld [vmem:[#allocation11 + $0x38] sm:$0xff]
        %v1729 = vld [vmem:[#allocation11 + $0x40] sm:$0xff]
        %v1730 = vld [vmem:[#allocation11 + $0x48] sm:$0xff]
        %v1731 = vld [vmem:[#allocation11 + $0x50] sm:$0xff]
        %v1732 = vld [vmem:[#allocation11 + $0x58] sm:$0xff]
        %v1733 = vld [vmem:[#allocation11 + $0x60] sm:$0xff]
        %v1734 = vld [vmem:[#allocation11 + $0x68] sm:$0xff]
        %v1735 = vld [vmem:[#allocation11 + $0x70] sm:$0xff]
        %v1736 = vld [vmem:[#allocation11 + $0x78] sm:$0xff]
        %v1753 = vunpack.c.l.b16 %v1721
        %v1754 = vunpack.c.h.b16 %v1721
        %v1755 = vunpack.c.l.b16 %v1722
        %v1756 = vunpack.c.h.b16 %v1722
        %v1757 = vunpack.c.l.b16 %v1723
        %v1758 = vunpack.c.h.b16 %v1723
        %v1759 = vunpack.c.l.b16 %v1724
        %v1760 = vunpack.c.h.b16 %v1724
        %v1761 = vunpack.c.l.b16 %v1725
        %v1762 = vunpack.c.h.b16 %v1725
        %v1763 = vunpack.c.l.b16 %v1726
        %v1764 = vunpack.c.h.b16 %v1726
        %v1765 = vunpack.c.l.b16 %v1727
        %v1766 = vunpack.c.h.b16 %v1727
        %v1767 = vunpack.c.l.b16 %v1728
        %v1768 = vunpack.c.h.b16 %v1728
        %v1769 = vunpack.c.l.b16 %v1729
        %v1770 = vunpack.c.h.b16 %v1729
        %v1771 = vunpack.c.l.b16 %v1730
        %v1772 = vunpack.c.h.b16 %v1730
        %v1773 = vunpack.c.l.b16 %v1731
        %v1774 = vunpack.c.h.b16 %v1731
        %v1775 = vunpack.c.l.b16 %v1732
        %v1776 = vunpack.c.h.b16 %v1732
        %v1777 = vunpack.c.l.b16 %v1733
        %v1778 = vunpack.c.h.b16 %v1733
        %v1779 = vunpack.c.l.b16 %v1734
        %v1780 = vunpack.c.h.b16 %v1734
        %v1781 = vunpack.c.l.b16 %v1735
        %v1782 = vunpack.c.h.b16 %v1735
        %v1783 = vunpack.c.l.b16 %v1736
        %v1784 = vunpack.c.h.b16 %v1736
        %v1785 = vpack.c.b16 %v1755, %v1753
        %v1786 = vpack.c.b16 %v1756, %v1754
        %v1787 = vpack.c.b16 %v1759, %v1757
        %v1788 = vpack.c.b16 %v1760, %v1758
        %v1789 = vpack.c.b16 %v1763, %v1761
        %v1790 = vpack.c.b16 %v1764, %v1762
        %v1791 = vpack.c.b16 %v1767, %v1765
        %v1792 = vpack.c.b16 %v1768, %v1766
        %v1793 = vpack.c.b16 %v1771, %v1769
        %v1794 = vpack.c.b16 %v1772, %v1770
        %v1795 = vpack.c.b16 %v1775, %v1773
        %v1796 = vpack.c.b16 %v1776, %v1774
        %v1797 = vpack.c.b16 %v1779, %v1777
        %v1798 = vpack.c.b16 %v1780, %v1778
        %v1799 = vpack.c.b16 %v1783, %v1781
        %v1800 = vpack.c.b16 %v1784, %v1782
        %1817 = vmatpush.bf16.msra.mxu0 %v1799
        %1818 = vmatpush.bf16.msra.mxu0 %v1797
        %1819 = vmatpush.bf16.msra.mxu0 %v1795
        %1820 = vmatpush.bf16.msra.mxu0 %v1793
        %1821 = vmatpush.bf16.msra.mxu0 %v1791
        %1822 = vmatpush.bf16.msra.mxu0 %v1789
        %1823 = vmatpush.bf16.msra.mxu0 %v1787
        %1824 = vmatpush.bf16.msra.mxu0 %v1785
        %1825 = vmatmul.bf16.gmra.mxu0 %v1720
        %v1826 = vpop.f32.mrf.mxu0
        %v1827 = vadd.f32 0.0, %v1826
        %v1828 = vpop.f32.mrf.mxu0
        %v1829 = vadd.f32 0.0, %v1828
        %1830 = vdwg.mxu0
        %1831 = vmatpush.bf16.msra.mxu0 %v1800
        %1832 = vmatpush.bf16.msra.mxu0 %v1798
        %1833 = vmatpush.bf16.msra.mxu0 %v1796
        %1834 = vmatpush.bf16.msra.mxu0 %v1794
        %1835 = vmatpush.bf16.msra.mxu0 %v1792
        %1836 = vmatpush.bf16.msra.mxu0 %v1790
        %1837 = vmatpush.bf16.msra.mxu0 %v1788
        %1838 = vmatpush.bf16.msra.mxu0 %v1786
        %1839 = vmatmul.bf16.gmra.mxu0 %v1720
        %v1840 = vpop.f32.mrf.mxu0
        %v1841 = vadd.f32 0.0, %v1840
        %v1842 = vpop.f32.mrf.mxu0
        %v1843 = vadd.f32 0.0, %v1842
        %1844 = vdwg.mxu0
        %1846 = vrot.lane.b32.xlu0 %v1717, 96
        %v1847 = vpop.permute.xlu0 %1846
        %1849 = vrot.lane.b32.xlu0 %v1717, 64
        %v1850 = vpop.permute.xlu0 %1849
        %1852 = vrot.lane.b32.xlu0 %v1717, 32
        %v1853 = vpop.permute.xlu0 %1852
        %v1855 = vrot.slane %v1850, 4
        %v1856 = vsel %vm840, %v1855, %v1717
        %v1857 = vrot.slane %v1717, 4
        %v1858 = vsel %vm840, %v1850, %v1857
        %v1860 = vunpack.c.l.s4 1983009808
        %v1861 = vunpack.c.0.s8 %v1860
        %v1862 = vperm.slane %v1856, %v1861
        %v1864 = vunpack.c.l.s4 1983009808
        %v1865 = vunpack.c.0.s8 %v1864
        %v1866 = vperm.slane %v1858, %v1865
        %v1867 = vrot.slane %v1853, 4
        %v1868 = vsel %vm840, %v1867, %v1847
        %v1869 = vrot.slane %v1847, 4
        %v1870 = vsel %vm840, %v1853, %v1869
        %v1872 = vunpack.c.l.s4 1983009808
        %v1873 = vunpack.c.0.s8 %v1872
        %v1874 = vperm.slane %v1868, %v1873
        %v1876 = vunpack.c.l.s4 1983009808
        %v1877 = vunpack.c.0.s8 %v1876
        %v1878 = vperm.slane %v1870, %v1877
        %v1879 = vrot.slane %v1874, 4
        %v1880 = vsel %vm840, %v1879, %v1862
        %v1881 = vrot.slane %v1862, 4
        %v1882 = vsel %vm840, %v1874, %v1881
        %v1884 = vunpack.c.l.s4 1934713408
        %v1885 = vunpack.c.0.s8 %v1884
        %v1886 = vperm.slane %v1880, %v1885
        %v1888 = vunpack.c.l.s4 1934713408
        %v1889 = vunpack.c.0.s8 %v1888
        %v1890 = vperm.slane %v1882, %v1889
        %v1891 = vrot.slane %v1878, 4
        %v1892 = vsel %vm840, %v1891, %v1866
        %v1893 = vrot.slane %v1866, 4
        %v1894 = vsel %vm840, %v1878, %v1893
        %v1896 = vunpack.c.l.s4 1934713408
        %v1897 = vunpack.c.0.s8 %v1896
        %v1898 = vperm.slane %v1892, %v1897
        %v1900 = vunpack.c.l.s4 1934713408
        %v1901 = vunpack.c.0.s8 %v1900
        %v1902 = vperm.slane %v1894, %v1901
        %v1903 = vrot.slane %v1886, 4
        %v1904 = vsel %vm840, 0.0, %v1903
        %v1905 = vrot.slane %v1890, 4
        %v1906 = vsel %vm840, 0.0, %v1905
        %v1907 = vrot.slane %v1898, 4
        %v1908 = vsel %vm840, 0.0, %v1907
        %v1909 = vrot.slane %v1902, 4
        %v1910 = vsel %vm840, 0.0, %v1909
        %v1911 = vsel %vm840, %v1905, %v1886
        %v1913 = vunpack.c.l.s4 1983009808
        %v1914 = vunpack.c.0.s8 %v1913
        %v1915 = vperm.slane %v1911, %v1914
        %v1916 = vrot.slane %v1906, 4
        %v1917 = vsel %vm840, %v1916, %v1904
        %v1919 = vunpack.c.l.s4 1983009808
        %v1920 = vunpack.c.0.s8 %v1919
        %v1921 = vperm.slane %v1917, %v1920
        %v1922 = vsel %vm840, %v1909, %v1898
        %v1924 = vunpack.c.l.s4 1983009808
        %v1925 = vunpack.c.0.s8 %v1924
        %v1926 = vperm.slane %v1922, %v1925
        %v1927 = vrot.slane %v1910, 4
        %v1928 = vsel %vm840, %v1927, %v1908
        %v1930 = vunpack.c.l.s4 1983009808
        %v1931 = vunpack.c.0.s8 %v1930
        %v1932 = vperm.slane %v1928, %v1931
        %v1933 = vrot.slane %v1921, 4
        %v1934 = vsel %vm840, %v1933, %v1915
        %v1935 = vrot.slane %v1915, 4
        %v1936 = vsel %vm840, %v1921, %v1935
        %v1938 = vunpack.c.l.s4 1934713408
        %v1939 = vunpack.c.0.s8 %v1938
        %v1940 = vperm.slane %v1934, %v1939
        %v1942 = vunpack.c.l.s4 1934713408
        %v1943 = vunpack.c.0.s8 %v1942
        %v1944 = vperm.slane %v1936, %v1943
        %v1945 = vrot.slane %v1932, 4
        %v1946 = vsel %vm840, %v1945, %v1926
        %v1947 = vrot.slane %v1926, 4
        %v1948 = vsel %vm840, %v1932, %v1947
        %v1950 = vunpack.c.l.s4 1934713408
        %v1951 = vunpack.c.0.s8 %v1950
        %v1952 = vperm.slane %v1946, %v1951
        %v1954 = vunpack.c.l.s4 1934713408
        %v1955 = vunpack.c.0.s8 %v1954
        %v1956 = vperm.slane %v1948, %v1955
        %v1957 = vrot.slane %v1952, 4
        %v1958 = vsel %vm840, %v1957, %v1940
        %v1959 = vrot.slane %v1940, 4
        %v1960 = vsel %vm840, %v1952, %v1959
        %v1961 = vrot.slane %v1956, 4
        %v1962 = vsel %vm840, %v1961, %v1944
        %v1963 = vrot.slane %v1944, 4
        %v1964 = vsel %vm840, %v1956, %v1963
        %v1965 = vpack.c.bf16 %v1958, %v1958
        %v1966 = vpack.c.bf16 %v1960, %v1960
        %v1967 = vpack.c.bf16 %v1962, %v1962
        %v1968 = vpack.c.bf16 %v1964, %v1964
        %1971 = vrot.lane.b32.xlu0 %v1827, 96
        %v1972 = vpop.permute.xlu0 %1971
        %1973 = vrot.lane.b32.xlu0 %v1829, 96
        %v1974 = vpop.permute.xlu0 %1973
        %1977 = vrot.lane.b32.xlu0 %v1827, 64
        %v1978 = vpop.permute.xlu0 %1977
        %1979 = vrot.lane.b32.xlu0 %v1829, 64
        %v1980 = vpop.permute.xlu0 %1979
        %1983 = vrot.lane.b32.xlu0 %v1827, 32
        %v1984 = vpop.permute.xlu0 %1983
        %1985 = vrot.lane.b32.xlu0 %v1829, 32
        %v1986 = vpop.permute.xlu0 %1985
        %v1989 = vrot.slane %v1978, 4
        %v1990 = vsel %vm840, %v1989, %v1827
        %v1991 = vrot.slane %v1827, 4
        %v1992 = vsel %vm840, %v1978, %v1991
        %v1994 = vunpack.c.l.s4 1983009808
        %v1995 = vunpack.c.0.s8 %v1994
        %v1996 = vperm.slane %v1990, %v1995
        %v1998 = vunpack.c.l.s4 1983009808
        %v1999 = vunpack.c.0.s8 %v1998
        %v2000 = vperm.slane %v1992, %v1999
        %v2001 = vrot.slane %v1984, 4
        %v2002 = vsel %vm840, %v2001, %v1972
        %v2003 = vrot.slane %v1972, 4
        %v2004 = vsel %vm840, %v1984, %v2003
        %v2006 = vunpack.c.l.s4 1983009808
        %v2007 = vunpack.c.0.s8 %v2006
        %v2008 = vperm.slane %v2002, %v2007
        %v2010 = vunpack.c.l.s4 1983009808
        %v2011 = vunpack.c.0.s8 %v2010
        %v2012 = vperm.slane %v2004, %v2011
        %v2013 = vrot.slane %v2008, 4
        %v2014 = vsel %vm840, %v2013, %v1996
        %v2015 = vrot.slane %v1996, 4
        %v2016 = vsel %vm840, %v2008, %v2015
        %v2018 = vunpack.c.l.s4 1934713408
        %v2019 = vunpack.c.0.s8 %v2018
        %v2020 = vperm.slane %v2014, %v2019
        %v2022 = vunpack.c.l.s4 1934713408
        %v2023 = vunpack.c.0.s8 %v2022
        %v2024 = vperm.slane %v2016, %v2023
        %v2025 = vrot.slane %v2012, 4
        %v2026 = vsel %vm840, %v2025, %v2000
        %v2027 = vrot.slane %v2000, 4
        %v2028 = vsel %vm840, %v2012, %v2027
        %v2030 = vunpack.c.l.s4 1934713408
        %v2031 = vunpack.c.0.s8 %v2030
        %v2032 = vperm.slane %v2026, %v2031
        %v2034 = vunpack.c.l.s4 1934713408
        %v2035 = vunpack.c.0.s8 %v2034
        %v2036 = vperm.slane %v2028, %v2035
        %v2037 = vrot.slane %v2020, 4
        %v2038 = vsel %vm840, 0.0, %v2037
        %v2039 = vrot.slane %v2024, 4
        %v2040 = vsel %vm840, 0.0, %v2039
        %v2041 = vrot.slane %v2032, 4
        %v2042 = vsel %vm840, 0.0, %v2041
        %v2043 = vrot.slane %v2036, 4
        %v2044 = vsel %vm840, 0.0, %v2043
        %v2045 = vrot.slane %v1980, 4
        %v2046 = vsel %vm840, %v2045, %v1829
        %v2047 = vrot.slane %v1829, 4
        %v2048 = vsel %vm840, %v1980, %v2047
        %v2050 = vunpack.c.l.s4 1983009808
        %v2051 = vunpack.c.0.s8 %v2050
        %v2052 = vperm.slane %v2046, %v2051
        %v2054 = vunpack.c.l.s4 1983009808
        %v2055 = vunpack.c.0.s8 %v2054
        %v2056 = vperm.slane %v2048, %v2055
        %v2057 = vrot.slane %v1986, 4
        %v2058 = vsel %vm840, %v2057, %v1974
        %v2059 = vrot.slane %v1974, 4
        %v2060 = vsel %vm840, %v1986, %v2059
        %v2062 = vunpack.c.l.s4 1983009808
        %v2063 = vunpack.c.0.s8 %v2062
        %v2064 = vperm.slane %v2058, %v2063
        %v2066 = vunpack.c.l.s4 1983009808
        %v2067 = vunpack.c.0.s8 %v2066
        %v2068 = vperm.slane %v2060, %v2067
        %v2069 = vrot.slane %v2064, 4
        %v2070 = vsel %vm840, %v2069, %v2052
        %v2071 = vrot.slane %v2052, 4
        %v2072 = vsel %vm840, %v2064, %v2071
        %v2074 = vunpack.c.l.s4 1934713408
        %v2075 = vunpack.c.0.s8 %v2074
        %v2076 = vperm.slane %v2070, %v2075
        %v2078 = vunpack.c.l.s4 1934713408
        %v2079 = vunpack.c.0.s8 %v2078
        %v2080 = vperm.slane %v2072, %v2079
        %v2081 = vrot.slane %v2068, 4
        %v2082 = vsel %vm840, %v2081, %v2056
        %v2083 = vrot.slane %v2056, 4
        %v2084 = vsel %vm840, %v2068, %v2083
        %v2086 = vunpack.c.l.s4 1934713408
        %v2087 = vunpack.c.0.s8 %v2086
        %v2088 = vperm.slane %v2082, %v2087
        %v2090 = vunpack.c.l.s4 1934713408
        %v2091 = vunpack.c.0.s8 %v2090
        %v2092 = vperm.slane %v2084, %v2091
        %v2093 = vrot.slane %v2076, 4
        %v2094 = vsel %vm840, 0.0, %v2093
        %v2095 = vrot.slane %v2080, 4
        %v2096 = vsel %vm840, 0.0, %v2095
        %v2097 = vrot.slane %v2088, 4
        %v2098 = vsel %vm840, 0.0, %v2097
        %v2099 = vrot.slane %v2092, 4
        %v2100 = vsel %vm840, 0.0, %v2099
        %v2101 = vsel %vm840, %v2039, %v2020
        %v2103 = vunpack.c.l.s4 1983009808
        %v2104 = vunpack.c.0.s8 %v2103
        %v2105 = vperm.slane %v2101, %v2104
        %v2106 = vrot.slane %v2040, 4
        %v2107 = vsel %vm840, %v2106, %v2038
        %v2109 = vunpack.c.l.s4 1983009808
        %v2110 = vunpack.c.0.s8 %v2109
        %v2111 = vperm.slane %v2107, %v2110
        %v2112 = vsel %vm840, %v2043, %v2032
        %v2114 = vunpack.c.l.s4 1983009808
        %v2115 = vunpack.c.0.s8 %v2114
        %v2116 = vperm.slane %v2112, %v2115
        %v2117 = vrot.slane %v2044, 4
        %v2118 = vsel %vm840, %v2117, %v2042
        %v2120 = vunpack.c.l.s4 1983009808
        %v2121 = vunpack.c.0.s8 %v2120
        %v2122 = vperm.slane %v2118, %v2121
        %v2123 = vrot.slane %v2111, 4
        %v2124 = vsel %vm840, %v2123, %v2105
        %v2125 = vrot.slane %v2105, 4
        %v2126 = vsel %vm840, %v2111, %v2125
        %v2128 = vunpack.c.l.s4 1934713408
        %v2129 = vunpack.c.0.s8 %v2128
        %v2130 = vperm.slane %v2124, %v2129
        %v2132 = vunpack.c.l.s4 1934713408
        %v2133 = vunpack.c.0.s8 %v2132
        %v2134 = vperm.slane %v2126, %v2133
        %v2135 = vrot.slane %v2122, 4
        %v2136 = vsel %vm840, %v2135, %v2116
        %v2137 = vrot.slane %v2116, 4
        %v2138 = vsel %vm840, %v2122, %v2137
        %v2140 = vunpack.c.l.s4 1934713408
        %v2141 = vunpack.c.0.s8 %v2140
        %v2142 = vperm.slane %v2136, %v2141
        %v2144 = vunpack.c.l.s4 1934713408
        %v2145 = vunpack.c.0.s8 %v2144
        %v2146 = vperm.slane %v2138, %v2145
        %v2147 = vrot.slane %v2142, 4
        %v2148 = vsel %vm840, %v2147, %v2130
        %v2149 = vrot.slane %v2130, 4
        %v2150 = vsel %vm840, %v2142, %v2149
        %v2151 = vrot.slane %v2146, 4
        %v2152 = vsel %vm840, %v2151, %v2134
        %v2153 = vrot.slane %v2134, 4
        %v2154 = vsel %vm840, %v2146, %v2153
        %v2155 = vsel %vm840, %v2095, %v2076
        %v2157 = vunpack.c.l.s4 1983009808
        %v2158 = vunpack.c.0.s8 %v2157
        %v2159 = vperm.slane %v2155, %v2158
        %v2160 = vrot.slane %v2096, 4
        %v2161 = vsel %vm840, %v2160, %v2094
        %v2163 = vunpack.c.l.s4 1983009808
        %v2164 = vunpack.c.0.s8 %v2163
        %v2165 = vperm.slane %v2161, %v2164
        %v2166 = vsel %vm840, %v2099, %v2088
        %v2168 = vunpack.c.l.s4 1983009808
        %v2169 = vunpack.c.0.s8 %v2168
        %v2170 = vperm.slane %v2166, %v2169
        %v2171 = vrot.slane %v2100, 4
        %v2172 = vsel %vm840, %v2171, %v2098
        %v2174 = vunpack.c.l.s4 1983009808
        %v2175 = vunpack.c.0.s8 %v2174
        %v2176 = vperm.slane %v2172, %v2175
        %v2177 = vrot.slane %v2165, 4
        %v2178 = vsel %vm840, %v2177, %v2159
        %v2179 = vrot.slane %v2159, 4
        %v2180 = vsel %vm840, %v2165, %v2179
        %v2182 = vunpack.c.l.s4 1934713408
        %v2183 = vunpack.c.0.s8 %v2182
        %v2184 = vperm.slane %v2178, %v2183
        %v2186 = vunpack.c.l.s4 1934713408
        %v2187 = vunpack.c.0.s8 %v2186
        %v2188 = vperm.slane %v2180, %v2187
        %v2189 = vrot.slane %v2176, 4
        %v2190 = vsel %vm840, %v2189, %v2170
        %v2191 = vrot.slane %v2170, 4
        %v2192 = vsel %vm840, %v2176, %v2191
        %v2194 = vunpack.c.l.s4 1934713408
        %v2195 = vunpack.c.0.s8 %v2194
        %v2196 = vperm.slane %v2190, %v2195
        %v2198 = vunpack.c.l.s4 1934713408
        %v2199 = vunpack.c.0.s8 %v2198
        %v2200 = vperm.slane %v2192, %v2199
        %v2201 = vrot.slane %v2196, 4
        %v2202 = vsel %vm840, %v2201, %v2184
        %v2203 = vrot.slane %v2184, 4
        %v2204 = vsel %vm840, %v2196, %v2203
        %v2205 = vrot.slane %v2200, 4
        %v2206 = vsel %vm840, %v2205, %v2188
        %v2207 = vrot.slane %v2188, 4
        %v2208 = vsel %vm840, %v2200, %v2207
        %v2209 = vpack.c.bf16 %v2148, %v2148
        %v2210 = vpack.c.bf16 %v2202, %v2202
        %v2211 = vpack.c.bf16 %v2150, %v2150
        %v2212 = vpack.c.bf16 %v2204, %v2204
        %v2213 = vpack.c.bf16 %v2152, %v2152
        %v2214 = vpack.c.bf16 %v2206, %v2206
        %v2215 = vpack.c.bf16 %v2154, %v2154
        %v2216 = vpack.c.bf16 %v2208, %v2208
        %2219 = vrot.lane.b32.xlu0 %v1841, 96
        %v2220 = vpop.permute.xlu0 %2219
        %2221 = vrot.lane.b32.xlu0 %v1843, 96
        %v2222 = vpop.permute.xlu0 %2221
        %2225 = vrot.lane.b32.xlu0 %v1841, 64
        %v2226 = vpop.permute.xlu0 %2225
        %2227 = vrot.lane.b32.xlu0 %v1843, 64
        %v2228 = vpop.permute.xlu0 %2227
        %2231 = vrot.lane.b32.xlu0 %v1841, 32
        %v2232 = vpop.permute.xlu0 %2231
        %2233 = vrot.lane.b32.xlu0 %v1843, 32
        %v2234 = vpop.permute.xlu0 %2233
        %v2237 = vrot.slane %v2226, 4
        %v2238 = vsel %vm840, %v2237, %v1841
        %v2239 = vrot.slane %v1841, 4
        %v2240 = vsel %vm840, %v2226, %v2239
        %v2242 = vunpack.c.l.s4 1983009808
        %v2243 = vunpack.c.0.s8 %v2242
        %v2244 = vperm.slane %v2238, %v2243
        %v2246 = vunpack.c.l.s4 1983009808
        %v2247 = vunpack.c.0.s8 %v2246
        %v2248 = vperm.slane %v2240, %v2247
        %v2249 = vrot.slane %v2232, 4
        %v2250 = vsel %vm840, %v2249, %v2220
        %v2251 = vrot.slane %v2220, 4
        %v2252 = vsel %vm840, %v2232, %v2251
        %v2254 = vunpack.c.l.s4 1983009808
        %v2255 = vunpack.c.0.s8 %v2254
        %v2256 = vperm.slane %v2250, %v2255
        %v2258 = vunpack.c.l.s4 1983009808
        %v2259 = vunpack.c.0.s8 %v2258
        %v2260 = vperm.slane %v2252, %v2259
        %v2261 = vrot.slane %v2256, 4
        %v2262 = vsel %vm840, %v2261, %v2244
        %v2263 = vrot.slane %v2244, 4
        %v2264 = vsel %vm840, %v2256, %v2263
        %v2266 = vunpack.c.l.s4 1934713408
        %v2267 = vunpack.c.0.s8 %v2266
        %v2268 = vperm.slane %v2262, %v2267
        %v2270 = vunpack.c.l.s4 1934713408
        %v2271 = vunpack.c.0.s8 %v2270
        %v2272 = vperm.slane %v2264, %v2271
        %v2273 = vrot.slane %v2260, 4
        %v2274 = vsel %vm840, %v2273, %v2248
        %v2275 = vrot.slane %v2248, 4
        %v2276 = vsel %vm840, %v2260, %v2275
        %v2278 = vunpack.c.l.s4 1934713408
        %v2279 = vunpack.c.0.s8 %v2278
        %v2280 = vperm.slane %v2274, %v2279
        %v2282 = vunpack.c.l.s4 1934713408
        %v2283 = vunpack.c.0.s8 %v2282
        %v2284 = vperm.slane %v2276, %v2283
        %v2285 = vrot.slane %v2268, 4
        %v2286 = vsel %vm840, 0.0, %v2285
        %v2287 = vrot.slane %v2272, 4
        %v2288 = vsel %vm840, 0.0, %v2287
        %v2289 = vrot.slane %v2280, 4
        %v2290 = vsel %vm840, 0.0, %v2289
        %v2291 = vrot.slane %v2284, 4
        %v2292 = vsel %vm840, 0.0, %v2291
        %v2293 = vrot.slane %v2228, 4
        %v2294 = vsel %vm840, %v2293, %v1843
        %v2295 = vrot.slane %v1843, 4
        %v2296 = vsel %vm840, %v2228, %v2295
        %v2298 = vunpack.c.l.s4 1983009808
        %v2299 = vunpack.c.0.s8 %v2298
        %v2300 = vperm.slane %v2294, %v2299
        %v2302 = vunpack.c.l.s4 1983009808
        %v2303 = vunpack.c.0.s8 %v2302
        %v2304 = vperm.slane %v2296, %v2303
        %v2305 = vrot.slane %v2234, 4
        %v2306 = vsel %vm840, %v2305, %v2222
        %v2307 = vrot.slane %v2222, 4
        %v2308 = vsel %vm840, %v2234, %v2307
        %v2310 = vunpack.c.l.s4 1983009808
        %v2311 = vunpack.c.0.s8 %v2310
        %v2312 = vperm.slane %v2306, %v2311
        %v2314 = vunpack.c.l.s4 1983009808
        %v2315 = vunpack.c.0.s8 %v2314
        %v2316 = vperm.slane %v2308, %v2315
        %v2317 = vrot.slane %v2312, 4
        %v2318 = vsel %vm840, %v2317, %v2300
        %v2319 = vrot.slane %v2300, 4
        %v2320 = vsel %vm840, %v2312, %v2319
        %v2322 = vunpack.c.l.s4 1934713408
        %v2323 = vunpack.c.0.s8 %v2322
        %v2324 = vperm.slane %v2318, %v2323
        %v2326 = vunpack.c.l.s4 1934713408
        %v2327 = vunpack.c.0.s8 %v2326
        %v2328 = vperm.slane %v2320, %v2327
        %v2329 = vrot.slane %v2316, 4
        %v2330 = vsel %vm840, %v2329, %v2304
        %v2331 = vrot.slane %v2304, 4
        %v2332 = vsel %vm840, %v2316, %v2331
        %v2334 = vunpack.c.l.s4 1934713408
        %v2335 = vunpack.c.0.s8 %v2334
        %v2336 = vperm.slane %v2330, %v2335
        %v2338 = vunpack.c.l.s4 1934713408
        %v2339 = vunpack.c.0.s8 %v2338
        %v2340 = vperm.slane %v2332, %v2339
        %v2341 = vrot.slane %v2324, 4
        %v2342 = vsel %vm840, 0.0, %v2341
        %v2343 = vrot.slane %v2328, 4
        %v2344 = vsel %vm840, 0.0, %v2343
        %v2345 = vrot.slane %v2336, 4
        %v2346 = vsel %vm840, 0.0, %v2345
        %v2347 = vrot.slane %v2340, 4
        %v2348 = vsel %vm840, 0.0, %v2347
        %v2349 = vsel %vm840, %v2287, %v2268
        %v2351 = vunpack.c.l.s4 1983009808
        %v2352 = vunpack.c.0.s8 %v2351
        %v2353 = vperm.slane %v2349, %v2352
        %v2354 = vrot.slane %v2288, 4
        %v2355 = vsel %vm840, %v2354, %v2286
        %v2357 = vunpack.c.l.s4 1983009808
        %v2358 = vunpack.c.0.s8 %v2357
        %v2359 = vperm.slane %v2355, %v2358
        %v2360 = vsel %vm840, %v2291, %v2280
        %v2362 = vunpack.c.l.s4 1983009808
        %v2363 = vunpack.c.0.s8 %v2362
        %v2364 = vperm.slane %v2360, %v2363
        %v2365 = vrot.slane %v2292, 4
        %v2366 = vsel %vm840, %v2365, %v2290
        %v2368 = vunpack.c.l.s4 1983009808
        %v2369 = vunpack.c.0.s8 %v2368
        %v2370 = vperm.slane %v2366, %v2369
        %v2371 = vrot.slane %v2359, 4
        %v2372 = vsel %vm840, %v2371, %v2353
        %v2373 = vrot.slane %v2353, 4
        %v2374 = vsel %vm840, %v2359, %v2373
        %v2376 = vunpack.c.l.s4 1934713408
        %v2377 = vunpack.c.0.s8 %v2376
        %v2378 = vperm.slane %v2372, %v2377
        %v2380 = vunpack.c.l.s4 1934713408
        %v2381 = vunpack.c.0.s8 %v2380
        %v2382 = vperm.slane %v2374, %v2381
        %v2383 = vrot.slane %v2370, 4
        %v2384 = vsel %vm840, %v2383, %v2364
        %v2385 = vrot.slane %v2364, 4
        %v2386 = vsel %vm840, %v2370, %v2385
        %v2388 = vunpack.c.l.s4 1934713408
        %v2389 = vunpack.c.0.s8 %v2388
        %v2390 = vperm.slane %v2384, %v2389
        %v2392 = vunpack.c.l.s4 1934713408
        %v2393 = vunpack.c.0.s8 %v2392
        %v2394 = vperm.slane %v2386, %v2393
        %v2395 = vrot.slane %v2390, 4
        %v2396 = vsel %vm840, %v2395, %v2378
        %v2397 = vrot.slane %v2378, 4
        %v2398 = vsel %vm840, %v2390, %v2397
        %v2399 = vrot.slane %v2394, 4
        %v2400 = vsel %vm840, %v2399, %v2382
        %v2401 = vrot.slane %v2382, 4
        %v2402 = vsel %vm840, %v2394, %v2401
        %v2403 = vsel %vm840, %v2343, %v2324
        %v2405 = vunpack.c.l.s4 1983009808
        %v2406 = vunpack.c.0.s8 %v2405
        %v2407 = vperm.slane %v2403, %v2406
        %v2408 = vrot.slane %v2344, 4
        %v2409 = vsel %vm840, %v2408, %v2342
        %v2411 = vunpack.c.l.s4 1983009808
        %v2412 = vunpack.c.0.s8 %v2411
        %v2413 = vperm.slane %v2409, %v2412
        %v2414 = vsel %vm840, %v2347, %v2336
        %v2416 = vunpack.c.l.s4 1983009808
        %v2417 = vunpack.c.0.s8 %v2416
        %v2418 = vperm.slane %v2414, %v2417
        %v2419 = vrot.slane %v2348, 4
        %v2420 = vsel %vm840, %v2419, %v2346
        %v2422 = vunpack.c.l.s4 1983009808
        %v2423 = vunpack.c.0.s8 %v2422
        %v2424 = vperm.slane %v2420, %v2423
        %v2425 = vrot.slane %v2413, 4
        %v2426 = vsel %vm840, %v2425, %v2407
        %v2427 = vrot.slane %v2407, 4
        %v2428 = vsel %vm840, %v2413, %v2427
        %v2430 = vunpack.c.l.s4 1934713408
        %v2431 = vunpack.c.0.s8 %v2430
        %v2432 = vperm.slane %v2426, %v2431
        %v2434 = vunpack.c.l.s4 1934713408
        %v2435 = vunpack.c.0.s8 %v2434
        %v2436 = vperm.slane %v2428, %v2435
        %v2437 = vrot.slane %v2424, 4
        %v2438 = vsel %vm840, %v2437, %v2418
        %v2439 = vrot.slane %v2418, 4
        %v2440 = vsel %vm840, %v2424, %v2439
        %v2442 = vunpack.c.l.s4 1934713408
        %v2443 = vunpack.c.0.s8 %v2442
        %v2444 = vperm.slane %v2438, %v2443
        %v2446 = vunpack.c.l.s4 1934713408
        %v2447 = vunpack.c.0.s8 %v2446
        %v2448 = vperm.slane %v2440, %v2447
        %v2449 = vrot.slane %v2444, 4
        %v2450 = vsel %vm840, %v2449, %v2432
        %v2451 = vrot.slane %v2432, 4
        %v2452 = vsel %vm840, %v2444, %v2451
        %v2453 = vrot.slane %v2448, 4
        %v2454 = vsel %vm840, %v2453, %v2436
        %v2455 = vrot.slane %v2436, 4
        %v2456 = vsel %vm840, %v2448, %v2455
        %v2457 = vpack.c.bf16 %v2396, %v2396
        %v2458 = vpack.c.bf16 %v2450, %v2450
        %v2459 = vpack.c.bf16 %v2398, %v2398
        %v2460 = vpack.c.bf16 %v2452, %v2452
        %v2461 = vpack.c.bf16 %v2400, %v2400
        %v2462 = vpack.c.bf16 %v2454, %v2454
        %v2463 = vpack.c.bf16 %v2402, %v2402
        %v2464 = vpack.c.bf16 %v2456, %v2456
        %v2467 = vunpack.c.l.b16 %v2209
        %v2468 = vunpack.c.l.b16 %v2210
        %v2469 = vpack.c.b16 %v2468, %v2467
        %v2471 = vsel %vm1202, %v1965, 0
        %v2474 = vsel %vm1202, %v2469, 0
        %2476 = vmatpush.bf16.xpose.msra.mxu0 0
        %2477 = vmatpush.bf16.xpose.msra.mxu0 0
        %2478 = vmatpush.bf16.xpose.msra.mxu0 0
        %2479 = vmatpush.bf16.xpose.msra.mxu0 0
        %2480 = vmatpush.bf16.xpose.msra.mxu0 0
        %2481 = vmatpush.bf16.xpose.msra.mxu0 0
        %2482 = vmatpush.bf16.xpose.msra.mxu0 0
        %2483 = vmatpush.bf16.xpose.msra.mxu0 %v2474
        %2484 = vmatmul.bf16.gmra.mxu0 %v2471
        %v2485 = vpop.f32.mrf.mxu0
        %v2486 = vadd.f32 0.0, %v2485
        %v2487 = vpop.f32.mrf.mxu0
        %2488 = vdwg.mxu0
        %v2491 = vunpack.c.l.b16 %v2211
        %v2492 = vunpack.c.l.b16 %v2212
        %v2493 = vpack.c.b16 %v2492, %v2491
        %v2495 = vsel %vm1202, %v1966, 0
        %v2498 = vsel %vm1202, %v2493, 0
        %2500 = vmatpush.bf16.xpose.msra.mxu0 0
        %2501 = vmatpush.bf16.xpose.msra.mxu0 0
        %2502 = vmatpush.bf16.xpose.msra.mxu0 0
        %2503 = vmatpush.bf16.xpose.msra.mxu0 0
        %2504 = vmatpush.bf16.xpose.msra.mxu0 0
        %2505 = vmatpush.bf16.xpose.msra.mxu0 0
        %2506 = vmatpush.bf16.xpose.msra.mxu0 0
        %2507 = vmatpush.bf16.xpose.msra.mxu0 %v2498
        %2508 = vmatmul.bf16.gmra.mxu0 %v2495
        %v2509 = vpop.f32.mrf.mxu0
        %v2510 = vadd.f32 0.0, %v2509
        %v2511 = vpop.f32.mrf.mxu0
        %2512 = vdwg.mxu0
        %v2515 = vunpack.c.l.b16 %v2213
        %v2516 = vunpack.c.l.b16 %v2214
        %v2517 = vpack.c.b16 %v2516, %v2515
        %v2519 = vsel %vm1202, %v1967, 0
        %v2522 = vsel %vm1202, %v2517, 0
        %2524 = vmatpush.bf16.xpose.msra.mxu0 0
        %2525 = vmatpush.bf16.xpose.msra.mxu0 0
        %2526 = vmatpush.bf16.xpose.msra.mxu0 0
        %2527 = vmatpush.bf16.xpose.msra.mxu0 0
        %2528 = vmatpush.bf16.xpose.msra.mxu0 0
        %2529 = vmatpush.bf16.xpose.msra.mxu0 0
        %2530 = vmatpush.bf16.xpose.msra.mxu0 0
        %2531 = vmatpush.bf16.xpose.msra.mxu0 %v2522
        %2532 = vmatmul.bf16.gmra.mxu0 %v2519
        %v2533 = vpop.f32.mrf.mxu0
        %v2534 = vadd.f32 0.0, %v2533
        %v2535 = vpop.f32.mrf.mxu0
        %2536 = vdwg.mxu0
        %v2539 = vunpack.c.l.b16 %v2215
        %v2540 = vunpack.c.l.b16 %v2216
        %v2541 = vpack.c.b16 %v2540, %v2539
        %v2543 = vsel %vm1202, %v1968, 0
        %v2546 = vsel %vm1202, %v2541, 0
        %2548 = vmatpush.bf16.xpose.msra.mxu0 0
        %2549 = vmatpush.bf16.xpose.msra.mxu0 0
        %2550 = vmatpush.bf16.xpose.msra.mxu0 0
        %2551 = vmatpush.bf16.xpose.msra.mxu0 0
        %2552 = vmatpush.bf16.xpose.msra.mxu0 0
        %2553 = vmatpush.bf16.xpose.msra.mxu0 0
        %2554 = vmatpush.bf16.xpose.msra.mxu0 0
        %2555 = vmatpush.bf16.xpose.msra.mxu0 %v2546
        %2556 = vmatmul.bf16.gmra.mxu0 %v2543
        %v2557 = vpop.f32.mrf.mxu0
        %v2558 = vadd.f32 0.0, %v2557
        %v2559 = vpop.f32.mrf.mxu0
        %2560 = vdwg.mxu0
        %vm2561 = vcmask 130048
        %v2562 = vsel %vm2561, %v2486, -inf
        %2563 = vmax.xlane.f32.xlu0 %v2562
        %v2564 = vpop.xlane.xlu0 %2563
        %v2565 = vsel %vm2561, %v2510, -inf
        %2566 = vmax.xlane.f32.xlu0 %v2565
        %v2567 = vpop.xlane.xlu0 %2566
        %v2568 = vsel %vm2561, %v2534, -inf
        %2569 = vmax.xlane.f32.xlu0 %v2568
        %v2570 = vpop.xlane.xlu0 %2569
        %v2571 = vsel %vm2561, %v2558, -inf
        %2572 = vmax.xlane.f32.xlu0 %v2571
        %v2573 = vpop.xlane.xlu0 %2572
        %v2574 = vsub.f32 %v2486, %v2564
        %v2575 = vsub.f32 %v2510, %v2567
        %v2576 = vsub.f32 %v2534, %v2570
        %v2577 = vsub.f32 %v2558, %v2573
        %v2578 = vmul.f32 %v2574, 1.442695
        %v2579 = vpow.pop %v2578
        %v2580 = vmul.f32 %v2575, 1.442695
        %v2581 = vpow.pop %v2580
        %v2582 = vmul.f32 %v2576, 1.442695
        %v2583 = vpow.pop %v2582
        %v2584 = vmul.f32 %v2577, 1.442695
        %v2585 = vpow.pop %v2584
        %v2586 = vsel %vm2561, %v2579, 0.0
        %2587 = vadd.xlane.f32.xlu0 %v2586
        %v2588 = vpop.xlane.xlu0 %2587
        %v2589 = vsel %vm2561, %v2581, 0.0
        %2590 = vadd.xlane.f32.xlu0 %v2589
        %v2591 = vpop.xlane.xlu0 %2590
        %v2592 = vsel %vm2561, %v2583, 0.0
        %2593 = vadd.xlane.f32.xlu0 %v2592
        %v2594 = vpop.xlane.xlu0 %2593
        %v2595 = vsel %vm2561, %v2585, 0.0
        %2596 = vadd.xlane.f32.xlu0 %v2595
        %v2597 = vpop.xlane.xlu0 %2596
        %v2598 = vrcp.pop %v2588
        %v2599 = vrcp.pop %v2591
        %v2600 = vrcp.pop %v2594
        %v2601 = vrcp.pop %v2597
        %v2602 = vmul.f32 %v2579, %v2598
        %v2603 = vmul.f32 %v2581, %v2599
        %v2604 = vmul.f32 %v2583, %v2600
        %v2605 = vmul.f32 %v2585, %v2601
        %v2606 = vpack.c.bf16 %v2602, %v2602
        %v2607 = vpack.c.bf16 %v2603, %v2603
        %v2608 = vpack.c.bf16 %v2604, %v2604
        %v2609 = vpack.c.bf16 %v2605, %v2605
        %v2612 = vunpack.c.l.b16 %v2457
        %v2613 = vunpack.c.l.b16 %v2458
        %v2614 = vpack.c.b16 %v2613, %v2612
        %v2617 = vsel %vm2561, %v2606, 0
        %2619 = vmatpush.bf16.msra.mxu0 0
        %2620 = vmatpush.bf16.msra.mxu0 0
        %2621 = vmatpush.bf16.msra.mxu0 0
        %2622 = vmatpush.bf16.msra.mxu0 0
        %2623 = vmatpush.bf16.msra.mxu0 0
        %2624 = vmatpush.bf16.msra.mxu0 0
        %2625 = vmatpush.bf16.msra.mxu0 0
        %2626 = vmatpush.bf16.msra.mxu0 %v2614
        %2627 = vmatmul.bf16.gmra.mxu0 %v2617
        %v2628 = vpop.f32.mrf.mxu0
        %v2629 = vadd.f32 0.0, %v2628
        %v2630 = vpop.f32.mrf.mxu0
        %2631 = vdwg.mxu0
        %v2634 = vunpack.c.l.b16 %v2459
        %v2635 = vunpack.c.l.b16 %v2460
        %v2636 = vpack.c.b16 %v2635, %v2634
        %v2639 = vsel %vm2561, %v2607, 0
        %2641 = vmatpush.bf16.msra.mxu0 0
        %2642 = vmatpush.bf16.msra.mxu0 0
        %2643 = vmatpush.bf16.msra.mxu0 0
        %2644 = vmatpush.bf16.msra.mxu0 0
        %2645 = vmatpush.bf16.msra.mxu0 0
        %2646 = vmatpush.bf16.msra.mxu0 0
        %2647 = vmatpush.bf16.msra.mxu0 0
        %2648 = vmatpush.bf16.msra.mxu0 %v2636
        %2649 = vmatmul.bf16.gmra.mxu0 %v2639
        %v2650 = vpop.f32.mrf.mxu0
        %v2651 = vadd.f32 0.0, %v2650
        %v2652 = vpop.f32.mrf.mxu0
        %2653 = vdwg.mxu0
        %v2656 = vunpack.c.l.b16 %v2461
        %v2657 = vunpack.c.l.b16 %v2462
        %v2658 = vpack.c.b16 %v2657, %v2656
        %v2661 = vsel %vm2561, %v2608, 0
        %2663 = vmatpush.bf16.msra.mxu0 0
        %2664 = vmatpush.bf16.msra.mxu0 0
        %2665 = vmatpush.bf16.msra.mxu0 0
        %2666 = vmatpush.bf16.msra.mxu0 0
        %2667 = vmatpush.bf16.msra.mxu0 0
        %2668 = vmatpush.bf16.msra.mxu0 0
        %2669 = vmatpush.bf16.msra.mxu0 0
        %2670 = vmatpush.bf16.msra.mxu0 %v2658
        %2671 = vmatmul.bf16.gmra.mxu0 %v2661
        %v2672 = vpop.f32.mrf.mxu0
        %v2673 = vadd.f32 0.0, %v2672
        %v2674 = vpop.f32.mrf.mxu0
        %2675 = vdwg.mxu0
        %v2678 = vunpack.c.l.b16 %v2463
        %v2679 = vunpack.c.l.b16 %v2464
        %v2680 = vpack.c.b16 %v2679, %v2678
        %v2683 = vsel %vm2561, %v2609, 0
        %2685 = vmatpush.bf16.msra.mxu0 0
        %2686 = vmatpush.bf16.msra.mxu0 0
        %2687 = vmatpush.bf16.msra.mxu0 0
        %2688 = vmatpush.bf16.msra.mxu0 0
        %2689 = vmatpush.bf16.msra.mxu0 0
        %2690 = vmatpush.bf16.msra.mxu0 0
        %2691 = vmatpush.bf16.msra.mxu0 0
        %2692 = vmatpush.bf16.msra.mxu0 %v2680
        %2693 = vmatmul.bf16.gmra.mxu0 %v2683
        %v2694 = vpop.f32.mrf.mxu0
        %v2695 = vadd.f32 0.0, %v2694
        %v2696 = vpop.f32.mrf.mxu0
        %2697 = vdwg.mxu0
        %v2698 = vrot.slane %v2673, 4
        %v2699 = vsel %vm840, %v2698, %v2629
        %v2700 = vrot.slane %v2629, 4
        %v2701 = vsel %vm840, %v2673, %v2700
        %v2703 = vunpack.c.l.s4 1983009808
        %v2704 = vunpack.c.0.s8 %v2703
        %v2705 = vperm.slane %v2699, %v2704
        %v2707 = vunpack.c.l.s4 1983009808
        %v2708 = vunpack.c.0.s8 %v2707
        %v2709 = vperm.slane %v2701, %v2708
        %v2710 = vrot.slane %v2695, 4
        %v2711 = vsel %vm840, %v2710, %v2651
        %v2712 = vrot.slane %v2651, 4
        %v2713 = vsel %vm840, %v2695, %v2712
        %v2715 = vunpack.c.l.s4 1983009808
        %v2716 = vunpack.c.0.s8 %v2715
        %v2717 = vperm.slane %v2711, %v2716
        %v2719 = vunpack.c.l.s4 1983009808
        %v2720 = vunpack.c.0.s8 %v2719
        %v2721 = vperm.slane %v2713, %v2720
        %v2722 = vrot.slane %v2717, 4
        %v2723 = vsel %vm840, %v2722, %v2705
        %v2724 = vrot.slane %v2705, 4
        %v2725 = vsel %vm840, %v2717, %v2724
        %v2727 = vunpack.c.l.s4 1934713408
        %v2728 = vunpack.c.0.s8 %v2727
        %v2729 = vperm.slane %v2723, %v2728
        %v2731 = vunpack.c.l.s4 1934713408
        %v2732 = vunpack.c.0.s8 %v2731
        %v2733 = vperm.slane %v2725, %v2732
        %v2734 = vrot.slane %v2721, 4
        %v2735 = vsel %vm840, %v2734, %v2709
        %v2736 = vrot.slane %v2709, 4
        %v2737 = vsel %vm840, %v2721, %v2736
        %v2739 = vunpack.c.l.s4 1934713408
        %v2740 = vunpack.c.0.s8 %v2739
        %v2741 = vperm.slane %v2735, %v2740
        %v2743 = vunpack.c.l.s4 1934713408
        %v2744 = vunpack.c.0.s8 %v2743
        %v2745 = vperm.slane %v2737, %v2744
        %v2746 = vrot.slane %v2729, 4
        %v2747 = vsel %vm840, 0.0, %v2746
        %v2748 = vrot.slane %v2733, 4
        %v2749 = vsel %vm840, 0.0, %v2748
        %v2750 = vrot.slane %v2741, 4
        %v2751 = vsel %vm840, 0.0, %v2750
        %v2752 = vrot.slane %v2745, 4
        %v2753 = vsel %vm840, 0.0, %v2752
        %v2754 = vsel %vm840, %v2748, %v2729
        %v2756 = vunpack.c.l.s4 1983009808
        %v2757 = vunpack.c.0.s8 %v2756
        %v2758 = vperm.slane %v2754, %v2757
        %v2759 = vrot.slane %v2749, 4
        %v2760 = vsel %vm840, %v2759, %v2747
        %v2762 = vunpack.c.l.s4 1983009808
        %v2763 = vunpack.c.0.s8 %v2762
        %v2764 = vperm.slane %v2760, %v2763
        %v2765 = vsel %vm840, %v2752, %v2741
        %v2767 = vunpack.c.l.s4 1983009808
        %v2768 = vunpack.c.0.s8 %v2767
        %v2769 = vperm.slane %v2765, %v2768
        %v2770 = vrot.slane %v2753, 4
        %v2771 = vsel %vm840, %v2770, %v2751
        %v2773 = vunpack.c.l.s4 1983009808
        %v2774 = vunpack.c.0.s8 %v2773
        %v2775 = vperm.slane %v2771, %v2774
        %v2776 = vrot.slane %v2764, 4
        %v2777 = vsel %vm840, %v2776, %v2758
        %v2778 = vrot.slane %v2758, 4
        %v2779 = vsel %vm840, %v2764, %v2778
        %v2781 = vunpack.c.l.s4 1934713408
        %v2782 = vunpack.c.0.s8 %v2781
        %v2783 = vperm.slane %v2777, %v2782
        %v2785 = vunpack.c.l.s4 1934713408
        %v2786 = vunpack.c.0.s8 %v2785
        %v2787 = vperm.slane %v2779, %v2786
        %v2788 = vrot.slane %v2775, 4
        %v2789 = vsel %vm840, %v2788, %v2769
        %v2790 = vrot.slane %v2769, 4
        %v2791 = vsel %vm840, %v2775, %v2790
        %v2793 = vunpack.c.l.s4 1934713408
        %v2794 = vunpack.c.0.s8 %v2793
        %v2795 = vperm.slane %v2789, %v2794
        %v2797 = vunpack.c.l.s4 1934713408
        %v2798 = vunpack.c.0.s8 %v2797
        %v2799 = vperm.slane %v2791, %v2798
        %v2800 = vrot.slane %v2795, 4
        %v2801 = vsel %vm840, %v2800, %v2783
        %v2802 = vrot.slane %v2783, 4
        %v2803 = vsel %vm840, %v2795, %v2802
        %v2804 = vrot.slane %v2799, 4
        %v2805 = vsel %vm840, %v2804, %v2787
        %v2806 = vrot.slane %v2787, 4
        %v2807 = vsel %vm840, %v2799, %v2806
        %2809 = vrot.lane.b32.xlu0 %v2803, 32
        %v2810 = vpop.permute.xlu0 %2809
        %2813 = vrot.lane.b32.xlu0 %v2805, 64
        %v2814 = vpop.permute.xlu0 %2813
        %2817 = vrot.lane.b32.xlu0 %v2807, 96
        %v2818 = vpop.permute.xlu0 %2817
        %v2820 = vsel %vm1202, %v2801, %v2810
        %v2821 = vsel %vm1534, %v2820, %v2814
        %v2822 = vsel %vm1536, %v2821, %v2818
        %v2823 = vld [vmem:[#allocation13] sm:$0xf]
        %v2824 = vld [vmem:[#allocation13 + $0x4] sm:$0xf]
        %v2825 = vld [vmem:[#allocation13 + $0x8] sm:$0xf]
        %v2826 = vld [vmem:[#allocation13 + $0xc] sm:$0xf]
        %v2827 = vld [vmem:[#allocation13 + $0x10] sm:$0xf]
        %v2828 = vld [vmem:[#allocation13 + $0x14] sm:$0xf]
        %v2829 = vld [vmem:[#allocation13 + $0x18] sm:$0xf]
        %v2830 = vld [vmem:[#allocation13 + $0x1c] sm:$0xf]
        %v2831 = vld [vmem:[#allocation13 + $0x20] sm:$0xf]
        %v2832 = vld [vmem:[#allocation13 + $0x24] sm:$0xf]
        %v2833 = vld [vmem:[#allocation13 + $0x28] sm:$0xf]
        %v2834 = vld [vmem:[#allocation13 + $0x2c] sm:$0xf]
        %v2835 = vld [vmem:[#allocation13 + $0x30] sm:$0xf]
        %v2836 = vld [vmem:[#allocation13 + $0x34] sm:$0xf]
        %v2837 = vld [vmem:[#allocation13 + $0x38] sm:$0xf]
        %v2838 = vld [vmem:[#allocation13 + $0x3c] sm:$0xf]
        %v2839 = vpack.c.bf16 %v2822, %v2822
        %v2856 = vunpack.c.l.b16 %v2823
        %v2857 = vunpack.c.l.b16 %v2824
        %v2858 = vunpack.c.l.b16 %v2825
        %v2859 = vunpack.c.l.b16 %v2826
        %v2860 = vunpack.c.l.b16 %v2827
        %v2861 = vunpack.c.l.b16 %v2828
        %v2862 = vunpack.c.l.b16 %v2829
        %v2863 = vunpack.c.l.b16 %v2830
        %v2864 = vunpack.c.l.b16 %v2831
        %v2865 = vunpack.c.l.b16 %v2832
        %v2866 = vunpack.c.l.b16 %v2833
        %v2867 = vunpack.c.l.b16 %v2834
        %v2868 = vunpack.c.l.b16 %v2835
        %v2869 = vunpack.c.l.b16 %v2836
        %v2870 = vunpack.c.l.b16 %v2837
        %v2871 = vunpack.c.l.b16 %v2838
        %v2872 = vpack.c.b16 %v2857, %v2856
        %v2873 = vpack.c.b16 %v2859, %v2858
        %v2874 = vpack.c.b16 %v2861, %v2860
        %v2875 = vpack.c.b16 %v2863, %v2862
        %v2876 = vpack.c.b16 %v2865, %v2864
        %v2877 = vpack.c.b16 %v2867, %v2866
        %v2878 = vpack.c.b16 %v2869, %v2868
        %v2879 = vpack.c.b16 %v2871, %v2870
        %2888 = vmatpush.bf16.msra.mxu0 %v2879
        %2889 = vmatpush.bf16.msra.mxu0 %v2878
        %2890 = vmatpush.bf16.msra.mxu0 %v2877
        %2891 = vmatpush.bf16.msra.mxu0 %v2876
        %2892 = vmatpush.bf16.msra.mxu0 %v2875
        %2893 = vmatpush.bf16.msra.mxu0 %v2874
        %2894 = vmatpush.bf16.msra.mxu0 %v2873
        %2895 = vmatpush.bf16.msra.mxu0 %v2872
        %2896 = vmatmul.bf16.gmra.mxu0 %v2839
        %v2897 = vpop.f32.mrf.mxu0
        %v2898 = vadd.f32 0.0, %v2897
        %v2899 = vpop.f32.mrf.mxu0
        %2900 = vdwg.mxu0
        %v2901 = vadd.f32 %v1616, %v2898
        %v2902 = vld [vmem:[%s4] sm:$0x1]
        %2903 = vadd.xlane.f32.xlu0 %v2901
        %v2904 = vpop.xlane.xlu0 %2903
        %v2905 = vmul.f32 %v2904, %v606
        %v2906 = vsub.f32 %v2901, %v2905
        %v2907 = vmul.f32 %v2906, %v2906
        %2908 = vadd.xlane.f32.xlu0 %v2907
        %v2909 = vpop.xlane.xlu0 %2908
        %v2910 = vmul.f32 %v2909, %v606
        %v2911 = vadd.f32 %v2910, 1e-05
        %v2912 = vrsqrt.pop %v2911
        %v2913 = vmul.f32 %v2912, %v2911
        %v2914 = vmul.f32 %v2913, %v2912
        %v2915 = vmul.f32 0.5, %v2914
        %v2916 = vsub.f32 1.5, %v2915
        %v2917 = vmul.f32 %v2912, %v2916
        %vm2918 = vweird.f32 %v2911
        %vm2919 = vweird.f32 %v2912
        %vm2920 = vmor %vm2918, %vm2919
        %v2921 = vsel %vm2920, %v2912, %v2917
        %v2922 = vmul.f32 %v2906, %v2921
        %v2924 = vperm.slane %v2902, 0
        %v2926 = vmul.f32 %v2922, %v2924
        %v2927 = vpack.c.bf16 %v2926, %v2926
        %v2928 = vld [vmem:[#allocation14] sm:$0xff]
        %v2929 = vld [vmem:[#allocation14 + $0x8] sm:$0xff]
        %v2930 = vld [vmem:[#allocation14 + $0x10] sm:$0xff]
        %v2931 = vld [vmem:[#allocation14 + $0x18] sm:$0xff]
        %v2932 = vld [vmem:[#allocation14 + $0x20] sm:$0xff]
        %v2933 = vld [vmem:[#allocation14 + $0x28] sm:$0xff]
        %v2934 = vld [vmem:[#allocation14 + $0x30] sm:$0xff]
        %v2935 = vld [vmem:[#allocation14 + $0x38] sm:$0xff]
        %v2936 = vld [vmem:[#allocation14 + $0x40] sm:$0xff]
        %v2937 = vld [vmem:[#allocation14 + $0x48] sm:$0xff]
        %v2938 = vld [vmem:[#allocation14 + $0x50] sm:$0xff]
        %v2939 = vld [vmem:[#allocation14 + $0x58] sm:$0xff]
        %v2940 = vld [vmem:[#allocation14 + $0x60] sm:$0xff]
        %v2941 = vld [vmem:[#allocation14 + $0x68] sm:$0xff]
        %v2942 = vld [vmem:[#allocation14 + $0x70] sm:$0xff]
        %v2943 = vld [vmem:[#allocation14 + $0x78] sm:$0xff]
        %v2944 = vld [vmem:[#allocation14 + $0x80] sm:$0xff]
        %v2945 = vld [vmem:[#allocation14 + $0x88] sm:$0xff]
        %v2946 = vld [vmem:[#allocation14 + $0x90] sm:$0xff]
        %v2947 = vld [vmem:[#allocation14 + $0x98] sm:$0xff]
        %v2948 = vld [vmem:[#allocation14 + $0xa0] sm:$0xff]
        %v2949 = vld [vmem:[#allocation14 + $0xa8] sm:$0xff]
        %v2950 = vld [vmem:[#allocation14 + $0xb0] sm:$0xff]
        %v2951 = vld [vmem:[#allocation14 + $0xb8] sm:$0xff]
        %v2952 = vld [vmem:[#allocation14 + $0xc0] sm:$0xff]
        %v2953 = vld [vmem:[#allocation14 + $0xc8] sm:$0xff]
        %v2954 = vld [vmem:[#allocation14 + $0xd0] sm:$0xff]
        %v2955 = vld [vmem:[#allocation14 + $0xd8] sm:$0xff]
        %v2956 = vld [vmem:[#allocation14 + $0xe0] sm:$0xff]
        %v2957 = vld [vmem:[#allocation14 + $0xe8] sm:$0xff]
        %v2958 = vld [vmem:[#allocation14 + $0xf0] sm:$0xff]
        %v2959 = vld [vmem:[#allocation14 + $0xf8] sm:$0xff]
        %v2960 = vld [vmem:[#allocation16] sm:$0xf]
        %v2961 = vld [vmem:[#allocation16 + $0x4] sm:$0xf]
        %v2962 = vld [vmem:[#allocation16 + $0x8] sm:$0xf]
        %v2963 = vld [vmem:[#allocation16 + $0xc] sm:$0xf]
        %v2964 = vld [vmem:[#allocation16 + $0x10] sm:$0xf]
        %v2965 = vld [vmem:[#allocation16 + $0x14] sm:$0xf]
        %v2966 = vld [vmem:[#allocation16 + $0x18] sm:$0xf]
        %v2967 = vld [vmem:[#allocation16 + $0x1c] sm:$0xf]
        %v2968 = vld [vmem:[#allocation16 + $0x20] sm:$0xf]
        %v2969 = vld [vmem:[#allocation16 + $0x24] sm:$0xf]
        %v2970 = vld [vmem:[#allocation16 + $0x28] sm:$0xf]
        %v2971 = vld [vmem:[#allocation16 + $0x2c] sm:$0xf]
        %v2972 = vld [vmem:[#allocation16 + $0x30] sm:$0xf]
        %v2973 = vld [vmem:[#allocation16 + $0x34] sm:$0xf]
        %v2974 = vld [vmem:[#allocation16 + $0x38] sm:$0xf]
        %v2975 = vld [vmem:[#allocation16 + $0x3c] sm:$0xf]
        %v2976 = vld [vmem:[#allocation16 + $0x40] sm:$0xf]
        %v2977 = vld [vmem:[#allocation16 + $0x44] sm:$0xf]
        %v2978 = vld [vmem:[#allocation16 + $0x48] sm:$0xf]
        %v2979 = vld [vmem:[#allocation16 + $0x4c] sm:$0xf]
        %v2980 = vld [vmem:[#allocation16 + $0x50] sm:$0xf]
        %v2981 = vld [vmem:[#allocation16 + $0x54] sm:$0xf]
        %v2982 = vld [vmem:[#allocation16 + $0x58] sm:$0xf]
        %v2983 = vld [vmem:[#allocation16 + $0x5c] sm:$0xf]
        %v2984 = vld [vmem:[#allocation16 + $0x60] sm:$0xf]
        %v2985 = vld [vmem:[#allocation16 + $0x64] sm:$0xf]
        %v2986 = vld [vmem:[#allocation16 + $0x68] sm:$0xf]
        %v2987 = vld [vmem:[#allocation16 + $0x6c] sm:$0xf]
        %v2988 = vld [vmem:[#allocation16 + $0x70] sm:$0xf]
        %v2989 = vld [vmem:[#allocation16 + $0x74] sm:$0xf]
        %v2990 = vld [vmem:[#allocation16 + $0x78] sm:$0xf]
        %v2991 = vld [vmem:[#allocation16 + $0x7c] sm:$0xf]
        %v2992 = vld [vmem:[#allocation16 + $0x80] sm:$0xf]
        %v2993 = vld [vmem:[#allocation16 + $0x84] sm:$0xf]
        %v2994 = vld [vmem:[#allocation16 + $0x88] sm:$0xf]
        %v2995 = vld [vmem:[#allocation16 + $0x8c] sm:$0xf]
        %v2996 = vld [vmem:[#allocation16 + $0x90] sm:$0xf]
        %v2997 = vld [vmem:[#allocation16 + $0x94] sm:$0xf]
        %v2998 = vld [vmem:[#allocation16 + $0x98] sm:$0xf]
        %v2999 = vld [vmem:[#allocation16 + $0x9c] sm:$0xf]
        %v3000 = vld [vmem:[#allocation16 + $0xa0] sm:$0xf]
        %v3001 = vld [vmem:[#allocation16 + $0xa4] sm:$0xf]
        %v3002 = vld [vmem:[#allocation16 + $0xa8] sm:$0xf]
        %v3003 = vld [vmem:[#allocation16 + $0xac] sm:$0xf]
        %v3004 = vld [vmem:[#allocation16 + $0xb0] sm:$0xf]
        %v3005 = vld [vmem:[#allocation16 + $0xb4] sm:$0xf]
        %v3006 = vld [vmem:[#allocation16 + $0xb8] sm:$0xf]
        %v3007 = vld [vmem:[#allocation16 + $0xbc] sm:$0xf]
        %v3008 = vld [vmem:[#allocation16 + $0xc0] sm:$0xf]
        %v3009 = vld [vmem:[#allocation16 + $0xc4] sm:$0xf]
        %v3010 = vld [vmem:[#allocation16 + $0xc8] sm:$0xf]
        %v3011 = vld [vmem:[#allocation16 + $0xcc] sm:$0xf]
        %v3012 = vld [vmem:[#allocation16 + $0xd0] sm:$0xf]
        %v3013 = vld [vmem:[#allocation16 + $0xd4] sm:$0xf]
        %v3014 = vld [vmem:[#allocation16 + $0xd8] sm:$0xf]
        %v3015 = vld [vmem:[#allocation16 + $0xdc] sm:$0xf]
        %v3016 = vld [vmem:[#allocation16 + $0xe0] sm:$0xf]
        %v3017 = vld [vmem:[#allocation16 + $0xe4] sm:$0xf]
        %v3018 = vld [vmem:[#allocation16 + $0xe8] sm:$0xf]
        %v3019 = vld [vmem:[#allocation16 + $0xec] sm:$0xf]
        %v3020 = vld [vmem:[#allocation16 + $0xf0] sm:$0xf]
        %v3021 = vld [vmem:[#allocation16 + $0xf4] sm:$0xf]
        %v3022 = vld [vmem:[#allocation16 + $0xf8] sm:$0xf]
        %v3023 = vld [vmem:[#allocation16 + $0xfc] sm:$0xf]
        %v3056 = vunpack.c.l.b16 %v2928
        %v3057 = vunpack.c.h.b16 %v2928
        %v3058 = vunpack.c.l.b16 %v2929
        %v3059 = vunpack.c.h.b16 %v2929
        %v3060 = vunpack.c.l.b16 %v2930
        %v3061 = vunpack.c.h.b16 %v2930
        %v3062 = vunpack.c.l.b16 %v2931
        %v3063 = vunpack.c.h.b16 %v2931
        %v3064 = vunpack.c.l.b16 %v2932
        %v3065 = vunpack.c.h.b16 %v2932
        %v3066 = vunpack.c.l.b16 %v2933
        %v3067 = vunpack.c.h.b16 %v2933
        %v3068 = vunpack.c.l.b16 %v2934
        %v3069 = vunpack.c.h.b16 %v2934
        %v3070 = vunpack.c.l.b16 %v2935
        %v3071 = vunpack.c.h.b16 %v2935
        %v3072 = vunpack.c.l.b16 %v2936
        %v3073 = vunpack.c.h.b16 %v2936
        %v3074 = vunpack.c.l.b16 %v2937
        %v3075 = vunpack.c.h.b16 %v2937
        %v3076 = vunpack.c.l.b16 %v2938
        %v3077 = vunpack.c.h.b16 %v2938
        %v3078 = vunpack.c.l.b16 %v2939
        %v3079 = vunpack.c.h.b16 %v2939
        %v3080 = vunpack.c.l.b16 %v2940
        %v3081 = vunpack.c.h.b16 %v2940
        %v3082 = vunpack.c.l.b16 %v2941
        %v3083 = vunpack.c.h.b16 %v2941
        %v3084 = vunpack.c.l.b16 %v2942
        %v3085 = vunpack.c.h.b16 %v2942
        %v3086 = vunpack.c.l.b16 %v2943
        %v3087 = vunpack.c.h.b16 %v2943
        %v3088 = vunpack.c.l.b16 %v2944
        %v3089 = vunpack.c.h.b16 %v2944
        %v3090 = vunpack.c.l.b16 %v2945
        %v3091 = vunpack.c.h.b16 %v2945
        %v3092 = vunpack.c.l.b16 %v2946
        %v3093 = vunpack.c.h.b16 %v2946
        %v3094 = vunpack.c.l.b16 %v2947
        %v3095 = vunpack.c.h.b16 %v2947
        %v3096 = vunpack.c.l.b16 %v2948
        %v3097 = vunpack.c.h.b16 %v2948
        %v3098 = vunpack.c.l.b16 %v2949
        %v3099 = vunpack.c.h.b16 %v2949
        %v3100 = vunpack.c.l.b16 %v2950
        %v3101 = vunpack.c.h.b16 %v2950
        %v3102 = vunpack.c.l.b16 %v2951
        %v3103 = vunpack.c.h.b16 %v2951
        %v3104 = vunpack.c.l.b16 %v2952
        %v3105 = vunpack.c.h.b16 %v2952
        %v3106 = vunpack.c.l.b16 %v2953
        %v3107 = vunpack.c.h.b16 %v2953
        %v3108 = vunpack.c.l.b16 %v2954
        %v3109 = vunpack.c.h.b16 %v2954
        %v3110 = vunpack.c.l.b16 %v2955
        %v3111 = vunpack.c.h.b16 %v2955
        %v3112 = vunpack.c.l.b16 %v2956
        %v3113 = vunpack.c.h.b16 %v2956
        %v3114 = vunpack.c.l.b16 %v2957
        %v3115 = vunpack.c.h.b16 %v2957
        %v3116 = vunpack.c.l.b16 %v2958
        %v3117 = vunpack.c.h.b16 %v2958
        %v3118 = vunpack.c.l.b16 %v2959
        %v3119 = vunpack.c.h.b16 %v2959
        %v3120 = vpack.c.b16 %v3060, %v3056
        %v3121 = vpack.c.b16 %v3061, %v3057
        %v3122 = vpack.c.b16 %v3062, %v3058
        %v3123 = vpack.c.b16 %v3063, %v3059
        %v3124 = vpack.c.b16 %v3068, %v3064
        %v3125 = vpack.c.b16 %v3069, %v3065
        %v3126 = vpack.c.b16 %v3070, %v3066
        %v3127 = vpack.c.b16 %v3071, %v3067
        %v3128 = vpack.c.b16 %v3076, %v3072
        %v3129 = vpack.c.b16 %v3077, %v3073
        %v3130 = vpack.c.b16 %v3078, %v3074
        %v3131 = vpack.c.b16 %v3079, %v3075
        %v3132 = vpack.c.b16 %v3084, %v3080
        %v3133 = vpack.c.b16 %v3085, %v3081
        %v3134 = vpack.c.b16 %v3086, %v3082
        %v3135 = vpack.c.b16 %v3087, %v3083
        %v3136 = vpack.c.b16 %v3092, %v3088
        %v3137 = vpack.c.b16 %v3093, %v3089
        %v3138 = vpack.c.b16 %v3094, %v3090
        %v3139 = vpack.c.b16 %v3095, %v3091
        %v3140 = vpack.c.b16 %v3100, %v3096
        %v3141 = vpack.c.b16 %v3101, %v3097
        %v3142 = vpack.c.b16 %v3102, %v3098
        %v3143 = vpack.c.b16 %v3103, %v3099
        %v3144 = vpack.c.b16 %v3108, %v3104
        %v3145 = vpack.c.b16 %v3109, %v3105
        %v3146 = vpack.c.b16 %v3110, %v3106
        %v3147 = vpack.c.b16 %v3111, %v3107
        %v3148 = vpack.c.b16 %v3116, %v3112
        %v3149 = vpack.c.b16 %v3117, %v3113
        %v3150 = vpack.c.b16 %v3118, %v3114
        %v3151 = vpack.c.b16 %v3119, %v3115
        %3184 = vmatpush.bf16.msra.mxu0 %v3148
        %3185 = vmatpush.bf16.msra.mxu0 %v3144
        %3186 = vmatpush.bf16.msra.mxu0 %v3140
        %3187 = vmatpush.bf16.msra.mxu0 %v3136
        %3188 = vmatpush.bf16.msra.mxu0 %v3132
        %3189 = vmatpush.bf16.msra.mxu0 %v3128
        %3190 = vmatpush.bf16.msra.mxu0 %v3124
        %3191 = vmatpush.bf16.msra.mxu0 %v3120
        %3192 = vmatmul.bf16.gmra.mxu0 %v2927
        %v3193 = vpop.f32.mrf.mxu0
        %v3194 = vadd.f32 0.0, %v3193
        %v3195 = vpop.f32.mrf.mxu0
        %3196 = vdwg.mxu0
        %3197 = vmatpush.bf16.msra.mxu0 %v3149
        %3198 = vmatpush.bf16.msra.mxu0 %v3145
        %3199 = vmatpush.bf16.msra.mxu0 %v3141
        %3200 = vmatpush.bf16.msra.mxu0 %v3137
        %3201 = vmatpush.bf16.msra.mxu0 %v3133
        %3202 = vmatpush.bf16.msra.mxu0 %v3129
        %3203 = vmatpush.bf16.msra.mxu0 %v3125
        %3204 = vmatpush.bf16.msra.mxu0 %v3121
        %3205 = vmatmul.bf16.gmra.mxu0 %v2927
        %v3206 = vpop.f32.mrf.mxu0
        %v3207 = vadd.f32 0.0, %v3206
        %v3208 = vpop.f32.mrf.mxu0
        %3209 = vdwg.mxu0
        %3210 = vmatpush.bf16.msra.mxu0 %v3150
        %3211 = vmatpush.bf16.msra.mxu0 %v3146
        %3212 = vmatpush.bf16.msra.mxu0 %v3142
        %3213 = vmatpush.bf16.msra.mxu0 %v3138
        %3214 = vmatpush.bf16.msra.mxu0 %v3134
        %3215 = vmatpush.bf16.msra.mxu0 %v3130
        %3216 = vmatpush.bf16.msra.mxu0 %v3126
        %3217 = vmatpush.bf16.msra.mxu0 %v3122
        %3218 = vmatmul.bf16.gmra.mxu0 %v2927
        %v3219 = vpop.f32.mrf.mxu0
        %v3220 = vadd.f32 0.0, %v3219
        %v3221 = vpop.f32.mrf.mxu0
        %3222 = vdwg.mxu0
        %3223 = vmatpush.bf16.msra.mxu0 %v3151
        %3224 = vmatpush.bf16.msra.mxu0 %v3147
        %3225 = vmatpush.bf16.msra.mxu0 %v3143
        %3226 = vmatpush.bf16.msra.mxu0 %v3139
        %3227 = vmatpush.bf16.msra.mxu0 %v3135
        %3228 = vmatpush.bf16.msra.mxu0 %v3131
        %3229 = vmatpush.bf16.msra.mxu0 %v3127
        %3230 = vmatpush.bf16.msra.mxu0 %v3123
        %3231 = vmatmul.bf16.gmra.mxu0 %v2927
        %v3232 = vpop.f32.mrf.mxu0
        %v3233 = vadd.f32 0.0, %v3232
        %v3234 = vpop.f32.mrf.mxu0
        %3235 = vdwg.mxu0
        %v3236 = vmul.f32 %v3194, 0.5
        %v3237 = vmul.f32 %v3207, 0.5
        %v3238 = vmul.f32 %v3220, 0.5
        %v3239 = vmul.f32 %v3233, 0.5
        %v3240 = vmul.f32 %v3194, 0.70710677
        %v3241 = vmul.f32 %v3207, 0.70710677
        %v3242 = vmul.f32 %v3220, 0.70710677
        %v3243 = vmul.f32 %v3233, 0.70710677
        %v3244 = vmul.f32 %v3240, %v3240
        %v3245 = vmin.f32 16.0, %v3244
        %v3246 = vmul.f32 %v3245, 2.1237322e-06
        %v3247 = vadd.f32 %v3246, 0.00028619796
        %v3248 = vmul.f32 %v3245, %v3247
        %v3249 = vadd.f32 %v3248, 0.0036580483
        %v3250 = vmul.f32 %v3245, %v3249
        %v3251 = vadd.f32 %v3250, 0.05243302
        %v3252 = vmul.f32 %v3245, %v3251
        %v3253 = vadd.f32 %v3252, 0.18741608
        %v3254 = vmul.f32 %v3245, %v3253
        %v3255 = vadd.f32 %v3254, 1.1283791
        %v3256 = vmul.f32 %v3240, %v3255
        %v3257 = vmul.f32 %v3245, 3.8918573e-05
        %v3258 = vadd.f32 %v3257, 0.001143296
        %v3259 = vmul.f32 %v3245, %v3258
        %v3260 = vadd.f32 %v3259, 0.014752088
        %v3261 = vmul.f32 %v3245, %v3260
        %v3262 = vadd.f32 %v3261, 0.112945676
        %v3263 = vmul.f32 %v3245, %v3262
        %v3264 = vadd.f32 %v3263, 0.4994258
        %v3265 = vmul.f32 %v3245, %v3264
        %v3266 = vadd.f32 %v3265, 1.0
        %v3267 = vrcp.pop %v3266
        %v3268 = vmul.f32 %v3266, %v3267
        %v3269 = vsub.f32 1.0, %v3268
        %v3270 = vmul.f32 %v3267, %v3269
        %v3271 = vadd.f32 %v3267, %v3270
        %vm3272 = vweird.f32 %v3266
        %vm3273 = vweird.f32 %v3267
        %vm3274 = vmor %vm3272, %vm3273
        %v3275 = vsel %vm3274, %v3267, %v3271
        %v3276 = vand.u32 2147483647, %v3266
        %vm3277 = vcmp.eq.f32.partialorder %v3276, 8.507059e+37
        %v3278 = vand.u32 %v3266, 2147483648
        %v3279 = vor.u32 1.1754944e-38, %v3278
        %v3280 = vsel %vm3277, %v3279, %v3275
        %v3281 = vmul.f32 %v3256, %v3280
        %v3282 = vmin.f32 %v3281, 1.0
        %v3283 = vmax.f32 %v3282, -1.0
        %v3284 = vmul.f32 %v3241, %v3241
        %v3285 = vmin.f32 16.0, %v3284
        %v3286 = vmul.f32 %v3285, 2.1237322e-06
        %v3287 = vadd.f32 %v3286, 0.00028619796
        %v3288 = vmul.f32 %v3285, %v3287
        %v3289 = vadd.f32 %v3288, 0.0036580483
        %v3290 = vmul.f32 %v3285, %v3289
        %v3291 = vadd.f32 %v3290, 0.05243302
        %v3292 = vmul.f32 %v3285, %v3291
        %v3293 = vadd.f32 %v3292, 0.18741608
        %v3294 = vmul.f32 %v3285, %v3293
        %v3295 = vadd.f32 %v3294, 1.1283791
        %v3296 = vmul.f32 %v3241, %v3295
        %v3297 = vmul.f32 %v3285, 3.8918573e-05
        %v3298 = vadd.f32 %v3297, 0.001143296
        %v3299 = vmul.f32 %v3285, %v3298
        %v3300 = vadd.f32 %v3299, 0.014752088
        %v3301 = vmul.f32 %v3285, %v3300
        %v3302 = vadd.f32 %v3301, 0.112945676
        %v3303 = vmul.f32 %v3285, %v3302
        %v3304 = vadd.f32 %v3303, 0.4994258
        %v3305 = vmul.f32 %v3285, %v3304
        %v3306 = vadd.f32 %v3305, 1.0
        %v3307 = vrcp.pop %v3306
        %v3308 = vmul.f32 %v3306, %v3307
        %v3309 = vsub.f32 1.0, %v3308
        %v3310 = vmul.f32 %v3307, %v3309
        %v3311 = vadd.f32 %v3307, %v3310
        %vm3312 = vweird.f32 %v3306
        %vm3313 = vweird.f32 %v3307
        %vm3314 = vmor %vm3312, %vm3313
        %v3315 = vsel %vm3314, %v3307, %v3311
        %v3316 = vand.u32 2147483647, %v3306
        %vm3317 = vcmp.eq.f32.partialorder %v3316, 8.507059e+37
        %v3318 = vand.u32 %v3306, 2147483648
        %v3319 = vor.u32 1.1754944e-38, %v3318
        %v3320 = vsel %vm3317, %v3319, %v3315
        %v3321 = vmul.f32 %v3296, %v3320
        %v3322 = vmin.f32 %v3321, 1.0
        %v3323 = vmax.f32 %v3322, -1.0
        %v3324 = vmul.f32 %v3242, %v3242
        %v3325 = vmin.f32 16.0, %v3324
        %v3326 = vmul.f32 %v3325, 2.1237322e-06
        %v3327 = vadd.f32 %v3326, 0.00028619796
        %v3328 = vmul.f32 %v3325, %v3327
        %v3329 = vadd.f32 %v3328, 0.0036580483
        %v3330 = vmul.f32 %v3325, %v3329
        %v3331 = vadd.f32 %v3330, 0.05243302
        %v3332 = vmul.f32 %v3325, %v3331
        %v3333 = vadd.f32 %v3332, 0.18741608
        %v3334 = vmul.f32 %v3325, %v3333
        %v3335 = vadd.f32 %v3334, 1.1283791
        %v3336 = vmul.f32 %v3242, %v3335
        %v3337 = vmul.f32 %v3325, 3.8918573e-05
        %v3338 = vadd.f32 %v3337, 0.001143296
        %v3339 = vmul.f32 %v3325, %v3338
        %v3340 = vadd.f32 %v3339, 0.014752088
        %v3341 = vmul.f32 %v3325, %v3340
        %v3342 = vadd.f32 %v3341, 0.112945676
        %v3343 = vmul.f32 %v3325, %v3342
        %v3344 = vadd.f32 %v3343, 0.4994258
        %v3345 = vmul.f32 %v3325, %v3344
        %v3346 = vadd.f32 %v3345, 1.0
        %v3347 = vrcp.pop %v3346
        %v3348 = vmul.f32 %v3346, %v3347
        %v3349 = vsub.f32 1.0, %v3348
        %v3350 = vmul.f32 %v3347, %v3349
        %v3351 = vadd.f32 %v3347, %v3350
        %vm3352 = vweird.f32 %v3346
        %vm3353 = vweird.f32 %v3347
        %vm3354 = vmor %vm3352, %vm3353
        %v3355 = vsel %vm3354, %v3347, %v3351
        %v3356 = vand.u32 2147483647, %v3346
        %vm3357 = vcmp.eq.f32.partialorder %v3356, 8.507059e+37
        %v3358 = vand.u32 %v3346, 2147483648
        %v3359 = vor.u32 1.1754944e-38, %v3358
        %v3360 = vsel %vm3357, %v3359, %v3355
        %v3361 = vmul.f32 %v3336, %v3360
        %v3362 = vmin.f32 %v3361, 1.0
        %v3363 = vmax.f32 %v3362, -1.0
        %v3364 = vmul.f32 %v3243, %v3243
        %v3365 = vmin.f32 16.0, %v3364
        %v3366 = vmul.f32 %v3365, 2.1237322e-06
        %v3367 = vadd.f32 %v3366, 0.00028619796
        %v3368 = vmul.f32 %v3365, %v3367
        %v3369 = vadd.f32 %v3368, 0.0036580483
        %v3370 = vmul.f32 %v3365, %v3369
        %v3371 = vadd.f32 %v3370, 0.05243302
        %v3372 = vmul.f32 %v3365, %v3371
        %v3373 = vadd.f32 %v3372, 0.18741608
        %v3374 = vmul.f32 %v3365, %v3373
        %v3375 = vadd.f32 %v3374, 1.1283791
        %v3376 = vmul.f32 %v3243, %v3375
        %v3377 = vmul.f32 %v3365, 3.8918573e-05
        %v3378 = vadd.f32 %v3377, 0.001143296
        %v3379 = vmul.f32 %v3365, %v3378
        %v3380 = vadd.f32 %v3379, 0.014752088
        %v3381 = vmul.f32 %v3365, %v3380
        %v3382 = vadd.f32 %v3381, 0.112945676
        %v3383 = vmul.f32 %v3365, %v3382
        %v3384 = vadd.f32 %v3383, 0.4994258
        %v3385 = vmul.f32 %v3365, %v3384
        %v3386 = vadd.f32 %v3385, 1.0
        %v3387 = vrcp.pop %v3386
        %v3388 = vmul.f32 %v3386, %v3387
        %v3389 = vsub.f32 1.0, %v3388
        %v3390 = vmul.f32 %v3387, %v3389
        %v3391 = vadd.f32 %v3387, %v3390
        %vm3392 = vweird.f32 %v3386
        %vm3393 = vweird.f32 %v3387
        %vm3394 = vmor %vm3392, %vm3393
        %v3395 = vsel %vm3394, %v3387, %v3391
        %v3396 = vand.u32 2147483647, %v3386
        %vm3397 = vcmp.eq.f32.partialorder %v3396, 8.507059e+37
        %v3398 = vand.u32 %v3386, 2147483648
        %v3399 = vor.u32 1.1754944e-38, %v3398
        %v3400 = vsel %vm3397, %v3399, %v3395
        %v3401 = vmul.f32 %v3376, %v3400
        %v3402 = vmin.f32 %v3401, 1.0
        %v3403 = vmax.f32 %v3402, -1.0
        %v3404 = vadd.f32 %v3283, 1.0
        %v3405 = vadd.f32 %v3323, 1.0
        %v3406 = vadd.f32 %v3363, 1.0
        %v3407 = vadd.f32 %v3403, 1.0
        %v3408 = vmul.f32 %v3236, %v3404
        %v3409 = vmul.f32 %v3237, %v3405
        %v3410 = vmul.f32 %v3238, %v3406
        %v3411 = vmul.f32 %v3239, %v3407
        %v3412 = vpack.c.bf16 %v3408, %v3408
        %v3413 = vpack.c.bf16 %v3409, %v3409
        %v3414 = vpack.c.bf16 %v3410, %v3410
        %v3415 = vpack.c.bf16 %v3411, %v3411
        %v3480 = vunpack.c.l.b16 %v2960
        %v3481 = vunpack.c.l.b16 %v2961
        %v3482 = vunpack.c.l.b16 %v2962
        %v3483 = vunpack.c.l.b16 %v2963
        %v3484 = vunpack.c.l.b16 %v2964
        %v3485 = vunpack.c.l.b16 %v2965
        %v3486 = vunpack.c.l.b16 %v2966
        %v3487 = vunpack.c.l.b16 %v2967
        %v3488 = vunpack.c.l.b16 %v2968
        %v3489 = vunpack.c.l.b16 %v2969
        %v3490 = vunpack.c.l.b16 %v2970
        %v3491 = vunpack.c.l.b16 %v2971
        %v3492 = vunpack.c.l.b16 %v2972
        %v3493 = vunpack.c.l.b16 %v2973
        %v3494 = vunpack.c.l.b16 %v2974
        %v3495 = vunpack.c.l.b16 %v2975
        %v3496 = vunpack.c.l.b16 %v2976
        %v3497 = vunpack.c.l.b16 %v2977
        %v3498 = vunpack.c.l.b16 %v2978
        %v3499 = vunpack.c.l.b16 %v2979
        %v3500 = vunpack.c.l.b16 %v2980
        %v3501 = vunpack.c.l.b16 %v2981
        %v3502 = vunpack.c.l.b16 %v2982
        %v3503 = vunpack.c.l.b16 %v2983
        %v3504 = vunpack.c.l.b16 %v2984
        %v3505 = vunpack.c.l.b16 %v2985
        %v3506 = vunpack.c.l.b16 %v2986
        %v3507 = vunpack.c.l.b16 %v2987
        %v3508 = vunpack.c.l.b16 %v2988
        %v3509 = vunpack.c.l.b16 %v2989
        %v3510 = vunpack.c.l.b16 %v2990
        %v3511 = vunpack.c.l.b16 %v2991
        %v3512 = vunpack.c.l.b16 %v2992
        %v3513 = vunpack.c.l.b16 %v2993
        %v3514 = vunpack.c.l.b16 %v2994
        %v3515 = vunpack.c.l.b16 %v2995
        %v3516 = vunpack.c.l.b16 %v2996
        %v3517 = vunpack.c.l.b16 %v2997
        %v3518 = vunpack.c.l.b16 %v2998
        %v3519 = vunpack.c.l.b16 %v2999
        %v3520 = vunpack.c.l.b16 %v3000
        %v3521 = vunpack.c.l.b16 %v3001
        %v3522 = vunpack.c.l.b16 %v3002
        %v3523 = vunpack.c.l.b16 %v3003
        %v3524 = vunpack.c.l.b16 %v3004
        %v3525 = vunpack.c.l.b16 %v3005
        %v3526 = vunpack.c.l.b16 %v3006
        %v3527 = vunpack.c.l.b16 %v3007
        %v3528 = vunpack.c.l.b16 %v3008
        %v3529 = vunpack.c.l.b16 %v3009
        %v3530 = vunpack.c.l.b16 %v3010
        %v3531 = vunpack.c.l.b16 %v3011
        %v3532 = vunpack.c.l.b16 %v3012
        %v3533 = vunpack.c.l.b16 %v3013
        %v3534 = vunpack.c.l.b16 %v3014
        %v3535 = vunpack.c.l.b16 %v3015
        %v3536 = vunpack.c.l.b16 %v3016
        %v3537 = vunpack.c.l.b16 %v3017
        %v3538 = vunpack.c.l.b16 %v3018
        %v3539 = vunpack.c.l.b16 %v3019
        %v3540 = vunpack.c.l.b16 %v3020
        %v3541 = vunpack.c.l.b16 %v3021
        %v3542 = vunpack.c.l.b16 %v3022
        %v3543 = vunpack.c.l.b16 %v3023
        %v3544 = vpack.c.b16 %v3481, %v3480
        %v3545 = vpack.c.b16 %v3483, %v3482
        %v3546 = vpack.c.b16 %v3485, %v3484
        %v3547 = vpack.c.b16 %v3487, %v3486
        %v3548 = vpack.c.b16 %v3489, %v3488
        %v3549 = vpack.c.b16 %v3491, %v3490
        %v3550 = vpack.c.b16 %v3493, %v3492
        %v3551 = vpack.c.b16 %v3495, %v3494
        %v3552 = vpack.c.b16 %v3497, %v3496
        %v3553 = vpack.c.b16 %v3499, %v3498
        %v3554 = vpack.c.b16 %v3501, %v3500
        %v3555 = vpack.c.b16 %v3503, %v3502
        %v3556 = vpack.c.b16 %v3505, %v3504
        %v3557 = vpack.c.b16 %v3507, %v3506
        %v3558 = vpack.c.b16 %v3509, %v3508
        %v3559 = vpack.c.b16 %v3511, %v3510
        %v3560 = vpack.c.b16 %v3513, %v3512
        %v3561 = vpack.c.b16 %v3515, %v3514
        %v3562 = vpack.c.b16 %v3517, %v3516
        %v3563 = vpack.c.b16 %v3519, %v3518
        %v3564 = vpack.c.b16 %v3521, %v3520
        %v3565 = vpack.c.b16 %v3523, %v3522
        %v3566 = vpack.c.b16 %v3525, %v3524
        %v3567 = vpack.c.b16 %v3527, %v3526
        %v3568 = vpack.c.b16 %v3529, %v3528
        %v3569 = vpack.c.b16 %v3531, %v3530
        %v3570 = vpack.c.b16 %v3533, %v3532
        %v3571 = vpack.c.b16 %v3535, %v3534
        %v3572 = vpack.c.b16 %v3537, %v3536
        %v3573 = vpack.c.b16 %v3539, %v3538
        %v3574 = vpack.c.b16 %v3541, %v3540
        %v3575 = vpack.c.b16 %v3543, %v3542
        %3608 = vmatpush.bf16.msra.mxu0 %v3551
        %3609 = vmatpush.bf16.msra.mxu0 %v3550
        %3610 = vmatpush.bf16.msra.mxu0 %v3549
        %3611 = vmatpush.bf16.msra.mxu0 %v3548
        %3612 = vmatpush.bf16.msra.mxu0 %v3547
        %3613 = vmatpush.bf16.msra.mxu0 %v3546
        %3614 = vmatpush.bf16.msra.mxu0 %v3545
        %3615 = vmatpush.bf16.msra.mxu0 %v3544
        %3616 = vmatmul.bf16.gmra.mxu0 %v3412
        %v3617 = vpop.f32.mrf.mxu0
        %v3618 = vadd.f32 0.0, %v3617
        %v3619 = vpop.f32.mrf.mxu0
        %3620 = vdwg.mxu0
        %3621 = vmatpush.bf16.msra.mxu0 %v3559
        %3622 = vmatpush.bf16.msra.mxu0 %v3558
        %3623 = vmatpush.bf16.msra.mxu0 %v3557
        %3624 = vmatpush.bf16.msra.mxu0 %v3556
        %3625 = vmatpush.bf16.msra.mxu0 %v3555
        %3626 = vmatpush.bf16.msra.mxu0 %v3554
        %3627 = vmatpush.bf16.msra.mxu0 %v3553
        %3628 = vmatpush.bf16.msra.mxu0 %v3552
        %3629 = vmatmul.bf16.gmra.mxu0 %v3413
        %v3630 = vpop.f32.mrf.mxu0
        %v3631 = vadd.f32 %v3618, %v3630
        %v3632 = vpop.f32.mrf.mxu0
        %3633 = vdwg.mxu0
        %3634 = vmatpush.bf16.msra.mxu0 %v3567
        %3635 = vmatpush.bf16.msra.mxu0 %v3566
        %3636 = vmatpush.bf16.msra.mxu0 %v3565
        %3637 = vmatpush.bf16.msra.mxu0 %v3564
        %3638 = vmatpush.bf16.msra.mxu0 %v3563
        %3639 = vmatpush.bf16.msra.mxu0 %v3562
        %3640 = vmatpush.bf16.msra.mxu0 %v3561
        %3641 = vmatpush.bf16.msra.mxu0 %v3560
        %3642 = vmatmul.bf16.gmra.mxu0 %v3414
        %v3643 = vpop.f32.mrf.mxu0
        %v3644 = vadd.f32 %v3631, %v3643
        %v3645 = vpop.f32.mrf.mxu0
        %3646 = vdwg.mxu0
        %3647 = vmatpush.bf16.msra.mxu0 %v3575
        %3648 = vmatpush.bf16.msra.mxu0 %v3574
        %3649 = vmatpush.bf16.msra.mxu0 %v3573
        %3650 = vmatpush.bf16.msra.mxu0 %v3572
        %3651 = vmatpush.bf16.msra.mxu0 %v3571
        %3652 = vmatpush.bf16.msra.mxu0 %v3570
        %3653 = vmatpush.bf16.msra.mxu0 %v3569
        %3654 = vmatpush.bf16.msra.mxu0 %v3568
        %3655 = vmatmul.bf16.gmra.mxu0 %v3415
        %v3656 = vpop.f32.mrf.mxu0
        %v3657 = vadd.f32 %v3644, %v3656
        %v3658 = vpop.f32.mrf.mxu0
        %3659 = vdwg.mxu0
        %v3660 = vadd.f32 %v2901, %v3657
        %3661 = vst [vmem:[%s587] sm:$0xff] %v3660
        %s3662 = sand.u32 %s305, 1
        %s3663 = scalar_lea.sflag [#allocation4], %s3662
        %s3664 = sand.u32 %s305, 1
        %s3665 = smul.addr %s3664, 8
        %s3666 = scalar_lea.vmem [#allocation17], %s3665
        // Predicated region
        $region105: #{tpu_custom_call.1} parent=67 // pred_check
          %p3667 = pneg %p315
        $region106: #{tpu_custom_call.1} parent=67 // pred_check_branch
          %3669 = sbr.rel (%p3667) target = $region108
        $region107: #{tpu_custom_call.1} parent=67 // pred_region
          %3671 = vsyncadd %s3663, 0
          %s3672 = smul.addr %s35, 8
          %s3673 = scalar_lea.hbm %s12, %s3672
          %s3675 = sshll.u32 %s3666, 4
          %s3676 = int_to_ptr.vmem [resolvable:$true] %s3675
          %s3677 = sshll.u32 %s3673, 4
          %s3678 = int_to_ptr.hbm [resolvable:$true] %s3677
          %3680 = dma.vmem_to_hbm [thread:$0]  %s3676, 128, %s3678, %s3663
        $region108: #{tpu_custom_call.1} parent=67 // pred_fallthru
          _
      $region68: #{tpu_custom_call.1} parent=5 // pred_fallthru
        _
      %p3681 = scmp.le.s32.totalorder 2, %s30
      // Predicated region
      $region109: #{tpu_custom_call.1} parent=5 // pred_check
        %p3682 = pneg %p3681
      $region110: #{tpu_custom_call.1} parent=5 // pred_check_branch
        %3684 = sbr.rel (%p3682) target = $region112
      $region111: #{tpu_custom_call.1} parent=5 // pred_region
        %s3685 = ssub.s32 %s30, 2
        // Predicated region
        $region113: #{tpu_custom_call.1} parent=111 // pred_check
          %p3686 = pneg %p321
        $region114: #{tpu_custom_call.1} parent=111 // pred_check_branch
          %3688 = sbr.rel (%p3686) target = $region116
        $region115: #{tpu_custom_call.1} parent=111 // pred_region
          %s3689 = sand.u32 %s306, 1
          %s3690 = scalar_lea.sflag [#allocation4], %s3689
          %s3691 = sand.u32 %s306, 1
          %s3692 = smul.addr %s3691, 8
          %s3693 = scalar_lea.vmem [#allocation17], %s3692
          %3695 = dma.done %s3690, 128
        $region116: #{tpu_custom_call.1} parent=111 // pred_fallthru
          _
      $region112: #{tpu_custom_call.1} parent=5 // pred_fallthru
        _
    $region6: #{tpu_custom_call.1} parent=1 // loop_footer
      %s34 = sadd.s32 1, %s30
    $region7: #{tpu_custom_call.1} parent=1 // loop_footer_branch
      %29 = sbr.rel target = $region3
    $region8: #{tpu_custom_call.1} parent=1 // loop_exit
      _
    %3696 = vsyncpa [#allocation3], 1
    %s3697 = scalar_lea.sflag [#allocation3], 1
    %3698 = vsyncpa %s3697, 1
    %3699 = vsyncpa [#allocation6], 1
    %s3700 = scalar_lea.sflag [#allocation6], 1
    %3701 = vsyncpa %s3700, 1
    %3702 = vsyncpa [#allocation9], 1
    %3703 = vsyncpa [#allocation12], 1
    %3704 = vsyncpa [#allocation15], 1
    %3705 = vsyncpa [#allocation4], 1
    %s3706 = scalar_lea.sflag [#allocation4], 1
    %3707 = vsyncpa %s3706, 1

</llo_original>
